<compile_context>
chip_gen: v5e
topology: v5e:2x2
jax: 0.10.0
libtpu: 0.0.40
codegen_flags: <defaults>
</compile_context>

<pallas_src>
import functools
import math

import jax
import jax.numpy as jnp
from jax import lax
from jax.experimental import pallas as pl
from jax.experimental.pallas import tpu as pltpu


def _layernorm(x, gamma, beta, eps=1e-5):
    # matches torch.nn.LayerNorm: biased variance over last dim, eps=1e-5
    mu = jnp.mean(x, axis=-1, keepdims=True)
    var = jnp.mean((x - mu) ** 2, axis=-1, keepdims=True)
    return (x - mu) * lax.rsqrt(var + eps) * gamma + beta


def _gelu(x):
    # TODO(synk): PyTorch nn.GELU() defaults to the exact erf form; the tanh
    # approximation is used because erf lowering is not guaranteed in Mosaic.
    c = math.sqrt(2.0 / math.pi)
    return 0.5 * x * (1.0 + jnp.tanh(c * (x + 0.044715 * x * x * x)))


def _pick_head_group(num_heads, head_dim, target_lanes=128):
    """Smallest divisor G of num_heads with G*head_dim >= target_lanes."""
    for g in range(1, num_heads + 1):
        if num_heads % g == 0 and g * head_dim >= target_lanes:
            return g
    return num_heads


def prepare_vit_block_params(params, *, num_heads, head_group=None,
                             target_lanes=128, compute_dtype=jnp.bfloat16):
    """One-time weight layout conversion (hoist out of the per-call path).

    Produces head-group-major, bf16 weights with the attention scale folded
    into the Q weights/bias and QKV merged into a single per-group block.
    """
    C = params["wqkv"].shape[0]
    assert C % num_heads == 0
    hd = C // num_heads
    G = head_group if head_group is not None else _pick_head_group(
        num_heads, hd, target_lanes)
    assert num_heads % G == 0
    ng = num_heads // G
    GH = G * hd
    scale = hd ** -0.5

    # qkv weight: (C, 3C) laid out as (C, 3, nh, hd) on the output axis.
    w = params["wqkv"].reshape(C, 3, num_heads, hd).astype(jnp.float32)
    wq = w[:, 0] * scale          # fold attention scale into Q
    wk = w[:, 1]
    wv = w[:, 2]

    def _grp(m):                  # (C, nh, hd) -> (ng, C, G*hd)
        return m.reshape(C, ng, GH).transpose(1, 0, 2)

    wqkv_g = jnp.concatenate([_grp(wq), _grp(wk), _grp(wv)],
                             axis=-1).astype(compute_dtype)      # (ng, C, 3*GH)

    b = params["bqkv"].reshape(3, num_heads, hd).astype(jnp.float32)
    bq = (b[0] * scale).reshape(ng, 1, GH)
    bk = b[1].reshape(ng, 1, GH)
    bv = b[2].reshape(ng, 1, GH)
    bqkv_g = jnp.concatenate([bq, bk, bv], axis=-1)               # (ng, 1, 3*GH)

    wproj_g = params["wproj"].reshape(ng, GH, C).astype(compute_dtype)

    return dict(
        wqkv_g=wqkv_g, bqkv_g=bqkv_g, wproj_g=wproj_g,
        bproj=params["bproj"].astype(jnp.float32),
        g1=params["g1"].astype(jnp.float32), b1=params["b1"].astype(jnp.float32),
        g2=params["g2"].astype(jnp.float32), b2=params["b2"].astype(jnp.float32),
        w1=params["w1"].astype(compute_dtype), bf1=params["bf1"].astype(jnp.float32),
        w2=params["w2"].astype(compute_dtype), bf2=params["bf2"].astype(jnp.float32),
        num_heads=num_heads, head_group=G,
    )


def _vit_block_kernel(x_ref, g1_ref, b1_ref,
                      wqkv_ref, bqkv_ref,
                      wproj_ref, bproj_ref,
                      g2_ref, b2_ref,
                      w1_ref, bf1_ref, w2_ref, bf2_ref,
                      o_ref,
                      xn_ref, acc_ref,
                      *, head_group, head_dim):
    gi = pl.program_id(1)
    ng = pl.num_programs(1)
    GH = head_group * head_dim

    # ----- once per batch: LayerNorm1 cache + residual/bias accumulator init --
    @pl.when(gi == 0)
    def _():
        x = x_ref[0].astype(jnp.float32)                      # (N, C)
        xn = _layernorm(x, g1_ref[0], b1_ref[0])
        xn_ref[...] = xn.astype(xn_ref.dtype)                 # bf16 MXU operand
        # residual shortcut + proj bias (added once); head groups add on top
        acc_ref[...] = x + bproj_ref[...]

    # ----- this head group's attention contribution --------------------------
    xnb = xn_ref[...]                                         # (N, C) bf16
    qkv = jnp.dot(xnb, wqkv_ref[0],
                  preferred_element_type=jnp.float32) + bqkv_ref[0]   # (N, 3*GH)
    q = qkv[:, :GH]              # attention scale already folded into weights
    k = qkv[:, GH:2 * GH]
    v = qkv[:, 2 * GH:]

    heads = []
    for g in range(head_group):                               # short unrolled loop
        sl = slice(g * head_dim, (g + 1) * head_dim)
        qg = q[:, sl].astype(jnp.bfloat16)
        kg = k[:, sl].astype(jnp.bfloat16)
        vg = v[:, sl].astype(jnp.bfloat16)
        s = lax.dot_general(qg, kg, (((1,), (1,)), ((), ())),
                            preferred_element_type=jnp.float32)        # (N, N)
        s = s - jnp.max(s, axis=-1, keepdims=True)
        p = jnp.exp(s)
        p = p * pl.reciprocal(jnp.sum(p, axis=-1, keepdims=True), approx=True)
        heads.append(jnp.dot(p.astype(jnp.bfloat16), vg,
                             preferred_element_type=jnp.float32))      # (N, hd)

    a = jnp.concatenate(heads, axis=-1).astype(jnp.bfloat16)           # (N, GH)
    acc_ref[...] = acc_ref[...] + jnp.dot(a, wproj_ref[0],
                                          preferred_element_type=jnp.float32)

    # ----- last head group: norm2 + MLP + residual, write output -------------
    @pl.when(gi == ng - 1)
    def _():
        x1 = acc_ref[...]
        xn2 = _layernorm(x1, g2_ref[0], b2_ref[0])
        hid = jnp.dot(xn2.astype(jnp.bfloat16), w1_ref[...],
                      preferred_element_type=jnp.float32) + bf1_ref[...]
        hid = _gelu(hid)
        y = jnp.dot(hid.astype(jnp.bfloat16), w2_ref[...],
                    preferred_element_type=jnp.float32) + bf2_ref[...]
        o_ref[0] = (x1 + y).astype(o_ref.dtype)


def vit_block(x, prep):
    B, H, W, C = x.shape
    N = H * W
    nh = prep["num_heads"]
    G = prep["head_group"]
    hd = C // nh
    ng = nh // G
    GH = G * hd
    hidden = prep["w1"].shape[1]
    xt = x.reshape(B, N, C)

    def const_spec(shape):
        nd = len(shape)
        return pl.BlockSpec(shape, lambda b, g, _nd=nd: (0,) * _nd)

    def group_spec(shape):
        return pl.BlockSpec(shape, lambda b, g: (g, 0, 0))

    in_specs = [
        pl.BlockSpec((1, N, C), lambda b, g: (b, 0, 0)),      # x tokens
        const_spec((1, C)), const_spec((1, C)),               # norm1 gamma/beta
        group_spec((1, C, 3 * GH)),                           # merged QKV weights
        group_spec((1, 1, 3 * GH)),                           # merged QKV bias
        group_spec((1, GH, C)),                               # proj (this group)
        const_spec((1, C)),                                   # proj bias
        const_spec((1, C)), const_spec((1, C)),               # norm2 gamma/beta
        const_spec((C, hidden)), const_spec((1, hidden)),     # mlp fc1
        const_spec((hidden, C)), const_spec((1, C)),          # mlp fc2
    ]

    args = (xt, prep["g1"], prep["b1"], prep["wqkv_g"], prep["bqkv_g"],
            prep["wproj_g"], prep["bproj"], prep["g2"], prep["b2"],
            prep["w1"], prep["bf1"], prep["w2"], prep["bf2"])

    # VMEM budget from actual block footprints (double-buffered inputs/outputs
    # plus resident scratch), clamped so it stays sane on 64 MiB-VMEM chips.
    def nbytes(shape, dt):
        return math.prod(shape) * jnp.dtype(dt).itemsize
    blk_bytes = (
        2 * (nbytes((1, N, C), xt.dtype)
             + nbytes((1, C, 3 * GH), prep["wqkv_g"].dtype)
             + nbytes((1, 1, 3 * GH), jnp.float32)
             + nbytes((1, GH, C), prep["wproj_g"].dtype)
             + nbytes((C, hidden), prep["w1"].dtype)
             + nbytes((hidden, C), prep["w2"].dtype)
             + nbytes((1, hidden), jnp.float32)
             + 6 * nbytes((1, C), jnp.float32))
        + 2 * nbytes((1, N, C), x.dtype)
        + nbytes((N, C), jnp.bfloat16) + nbytes((N, C), jnp.float32)
        + nbytes((N, hidden), jnp.float32) + G * nbytes((N, N), jnp.float32))
    vmem_limit = int(min(96 * 2**20, max(32 * 2**20, 2 * blk_bytes)))

    kernel = functools.partial(_vit_block_kernel, head_group=G, head_dim=hd)

    out = pl.pallas_call(
        kernel,
        out_shape=jax.ShapeDtypeStruct((B, N, C), x.dtype),
        grid=(B, ng),
        in_specs=in_specs,
        out_specs=pl.BlockSpec((1, N, C), lambda b, g: (b, 0, 0)),
        scratch_shapes=[pltpu.VMEM((N, C), jnp.bfloat16),     # cached LN1(x)
                        pltpu.VMEM((N, C), jnp.float32)],     # f32 accumulator
        compiler_params=pltpu.CompilerParams(
            dimension_semantics=("parallel", "arbitrary"),
            vmem_limit_bytes=vmem_limit),
    )(*args)
    # TODO(synk): for v7x (2 TensorCores, 64 MiB VMEM) a third "parallel" grid
    # axis tiling N into query blocks would use both cores when B is small.
    return out.reshape(B, H, W, C)


def vit_block_ref(x, params, *, num_heads):
    """Pure-JAX f32 reference with identical math, for correctness check."""
    B, H, W, C = x.shape
    N = H * W
    hd = C // num_heads
    scale = hd ** -0.5
    xt = x.reshape(B, N, C).astype(jnp.float32)

    def ln(v, g, b):
        mu = jnp.mean(v, -1, keepdims=True)
        var = jnp.mean((v - mu) ** 2, -1, keepdims=True)
        return (v - mu) * lax.rsqrt(var + 1e-5) * g + b

    xn = ln(xt, params["g1"][0], params["b1"][0])
    qkv = xn @ params["wqkv"] + params["bqkv"][0]             # (B, N, 3C)
    qkv = qkv.reshape(B, N, 3, num_heads, hd)
    q, k, v = qkv[:, :, 0], qkv[:, :, 1], qkv[:, :, 2]        # (B, N, nh, hd)
    s = jnp.einsum("bqhd,bkhd->bhqk", q * scale, k)
    p = jax.nn.softmax(s, axis=-1)
    a = jnp.einsum("bhqk,bkhd->bqhd", p, v).reshape(B, N, C)
    a = a @ params["wproj"] + params["bproj"][0]
    x1 = xt + a
    xn2 = ln(x1, params["g2"][0], params["b2"][0])
    hid = _gelu(xn2 @ params["w1"] + params["bf1"][0])
    y = hid @ params["w2"] + params["bf2"][0]
    return (x1 + y).reshape(B, H, W, C)


if __name__ == "__main__":
    key = jax.random.PRNGKey(0)
    # lane-dense config: C multiple of 128, N multiple of 8, head_dim = 64
    B, H, W, C = 2, 8, 8, 256
    num_heads = 4                      # hd = 64 -> head_group G = 2, ng = 2
    mlp_ratio = 4.0
    hidden = int(C * mlp_ratio)

    ks = jax.random.split(key, 12)
    x = jax.random.normal(ks[0], (B, H, W, C), jnp.float32)

    params = dict(
        g1=1.0 + 0.1 * jax.random.normal(ks[9], (1, C), jnp.float32),
        b1=0.1 * jax.random.normal(ks[10], (1, C), jnp.float32),
        wqkv=jax.random.normal(ks[1], (C, 3 * C), jnp.float32) * 0.02,
        bqkv=jax.random.normal(ks[2], (1, 3 * C), jnp.float32) * 0.02,
        wproj=jax.random.normal(ks[3], (C, C), jnp.float32) * 0.02,
        bproj=jax.random.normal(ks[4], (1, C), jnp.float32) * 0.02,
        g2=1.0 + 0.1 * jax.random.normal(ks[11], (1, C), jnp.float32),
        b2=jnp.zeros((1, C), jnp.float32),
        w1=jax.random.normal(ks[5], (C, hidden), jnp.float32) * 0.02,
        bf1=jax.random.normal(ks[6], (1, hidden), jnp.float32) * 0.02,
        w2=jax.random.normal(ks[7], (hidden, C), jnp.float32) * 0.02,
        bf2=jax.random.normal(ks[8], (1, C), jnp.float32) * 0.02,
    )

    # one-time weight layout conversion (cache this across calls in real use)
    prep = prepare_vit_block_params(params, num_heads=num_heads)

    out = vit_block(x, prep)
    out = jax.block_until_ready(out)

    ref = vit_block_ref(x, params, num_heads=num_heads)
    assert out.shape == (B, H, W, C)
    # bf16 MXU operands + approx-reciprocal softmax vs f32 reference -> loosened tol
    assert jnp.allclose(out, ref, rtol=2e-2, atol=2e-2), "mismatch vs reference"
    print("KERNEL_OK")
</pallas_src>

<mosaic_0001>
module attributes {stable_mosaic.version = 11 : i64} {
  func.func @_vit_block_kernel(%arg0: i32, %arg1: i32, %arg2: memref<1x64x256xf32, #tpu.memory_space<vmem>>, %arg3: memref<1x256xf32, #tpu.memory_space<vmem>>, %arg4: memref<1x256xf32, #tpu.memory_space<vmem>>, %arg5: memref<1x256x384xbf16, #tpu.memory_space<vmem>>, %arg6: memref<1x1x384xf32, #tpu.memory_space<vmem>>, %arg7: memref<1x128x256xbf16, #tpu.memory_space<vmem>>, %arg8: memref<1x256xf32, #tpu.memory_space<vmem>>, %arg9: memref<1x256xf32, #tpu.memory_space<vmem>>, %arg10: memref<1x256xf32, #tpu.memory_space<vmem>>, %arg11: memref<256x1024xbf16, #tpu.memory_space<vmem>>, %arg12: memref<1x1024xf32, #tpu.memory_space<vmem>>, %arg13: memref<1024x256xbf16, #tpu.memory_space<vmem>>, %arg14: memref<1x256xf32, #tpu.memory_space<vmem>>, %arg15: memref<1x64x256xf32, #tpu.memory_space<vmem>>, %arg16: memref<64x256xbf16, #tpu.memory_space<vmem>>, %arg17: memref<64x256xf32, #tpu.memory_space<vmem>>) attributes {dimension_semantics = [#tpu.dimension_semantics<parallel>, #tpu.dimension_semantics<arbitrary>], iteration_bounds = array<i64: 2, 2>, scalar_prefetch = 0 : i64, scratch_operands = 2 : i64, tpu.core_type = #tpu.core_type<tc>, window_params = [{transform_indices = @transform_0, window_bounds = array<i64: 1, 64, 256>}, {pipeline_mode = #tpu.pipeline_mode<synchronous>, transform_indices = @transform_1, window_bounds = array<i64: 1, 256>}, {pipeline_mode = #tpu.pipeline_mode<synchronous>, transform_indices = @transform_2, window_bounds = array<i64: 1, 256>}, {transform_indices = @transform_3, window_bounds = array<i64: 1, 256, 384>}, {transform_indices = @transform_4, window_bounds = array<i64: 1, 1, 384>}, {transform_indices = @transform_5, window_bounds = array<i64: 1, 128, 256>}, {pipeline_mode = #tpu.pipeline_mode<synchronous>, transform_indices = @transform_6, window_bounds = array<i64: 1, 256>}, {pipeline_mode = #tpu.pipeline_mode<synchronous>, transform_indices = @transform_7, window_bounds = array<i64: 1, 256>}, {pipeline_mode = #tpu.pipeline_mode<synchronous>, transform_indices = @transform_8, window_bounds = array<i64: 1, 256>}, {pipeline_mode = #tpu.pipeline_mode<synchronous>, transform_indices = @transform_9, window_bounds = array<i64: 256, 1024>}, {pipeline_mode = #tpu.pipeline_mode<synchronous>, transform_indices = @transform_10, window_bounds = array<i64: 1, 1024>}, {pipeline_mode = #tpu.pipeline_mode<synchronous>, transform_indices = @transform_11, window_bounds = array<i64: 1024, 256>}, {pipeline_mode = #tpu.pipeline_mode<synchronous>, transform_indices = @transform_12, window_bounds = array<i64: 1, 256>}, {transform_indices = @transform_13, window_bounds = array<i64: 1, 64, 256>}]} {
    %c0_i32 = arith.constant 0 : i32
    %0 = arith.cmpi eq, %arg1, %c0_i32 : i32
    %1 = arith.extui %0 : i1 to i32
    %c0_i32_0 = arith.constant 0 : i32
    %2 = arith.cmpi ne, %1, %c0_i32_0 : i32
    scf.if %2 {
      %c0_25 = arith.constant 0 : index
      %c0_26 = arith.constant 0 : index
      %c0_27 = arith.constant 0 : index
      %63 = vector.load %arg2[%c0_25, %c0_26, %c0_27] : memref<1x64x256xf32, #tpu.memory_space<vmem>>, vector<1x64x256xf32>
      %64 = vector.shape_cast %63 : vector<1x64x256xf32> to vector<64x256xf32>
      %c0_28 = arith.constant 0 : index
      %c0_29 = arith.constant 0 : index
      %65 = vector.load %arg3[%c0_28, %c0_29] : memref<1x256xf32, #tpu.memory_space<vmem>>, vector<1x256xf32>
      %66 = vector.shape_cast %65 : vector<1x256xf32> to vector<256xf32>
      %c0_30 = arith.constant 0 : index
      %c0_31 = arith.constant 0 : index
      %67 = vector.load %arg4[%c0_30, %c0_31] : memref<1x256xf32, #tpu.memory_space<vmem>>, vector<1x256xf32>
      %68 = vector.shape_cast %67 : vector<1x256xf32> to vector<256xf32>
      %cst_32 = arith.constant dense<0.000000e+00> : vector<64xf32>
      %69 = vector.multi_reduction <add>, %64, %cst_32 [1] : vector<64x256xf32> to vector<64xf32>
      %70 = vector.shape_cast %69 : vector<64xf32> to vector<64x1xf32>
      %cst_33 = arith.constant 2.560000e+02 : f32
      %71 = vector.broadcast %cst_33 : f32 to vector<64x1xf32>
      %72 = arith.divf %70, %71 : vector<64x1xf32>
      %73 = vector.broadcast %72 : vector<64x1xf32> to vector<64x256xf32>
      %74 = arith.subf %64, %73 : vector<64x256xf32>
      %75 = arith.mulf %74, %74 : vector<64x256xf32>
      %cst_34 = arith.constant dense<0.000000e+00> : vector<64xf32>
      %76 = vector.multi_reduction <add>, %75, %cst_34 [1] : vector<64x256xf32> to vector<64xf32>
      %77 = vector.shape_cast %76 : vector<64xf32> to vector<64x1xf32>
      %cst_35 = arith.constant 2.560000e+02 : f32
      %78 = vector.broadcast %cst_35 : f32 to vector<64x1xf32>
      %79 = arith.divf %77, %78 : vector<64x1xf32>
      %80 = vector.broadcast %72 : vector<64x1xf32> to vector<64x256xf32>
      %81 = arith.subf %64, %80 : vector<64x256xf32>
      %cst_36 = arith.constant 9.99999974E-6 : f32
      %82 = vector.broadcast %cst_36 : f32 to vector<64x1xf32>
      %83 = arith.addf %79, %82 : vector<64x1xf32>
      %84 = math.rsqrt %83 : vector<64x1xf32>
      %85 = vector.broadcast %84 : vector<64x1xf32> to vector<64x256xf32>
      %86 = arith.mulf %81, %85 : vector<64x256xf32>
      %87 = vector.shape_cast %66 : vector<256xf32> to vector<1x256xf32>
      %88 = vector.broadcast %87 : vector<1x256xf32> to vector<64x256xf32>
      %89 = arith.mulf %86, %88 : vector<64x256xf32>
      %90 = vector.shape_cast %68 : vector<256xf32> to vector<1x256xf32>
      %91 = vector.broadcast %90 : vector<1x256xf32> to vector<64x256xf32>
      %92 = arith.addf %89, %91 : vector<64x256xf32>
      %93 = arith.truncf %92 : vector<64x256xf32> to vector<64x256xbf16>
      %c0_37 = arith.constant 0 : index
      %c0_38 = arith.constant 0 : index
      %94 = vector.load %arg16[%c0_37, %c0_38] : memref<64x256xbf16, #tpu.memory_space<vmem>>, vector<64x256xbf16>
      tpu.vector_store %arg16[%c0_37, %c0_38], %93 {strides = array<i32>} : memref<64x256xbf16, #tpu.memory_space<vmem>>, vector<64x256xbf16>,
      %c0_39 = arith.constant 0 : index
      %c0_40 = arith.constant 0 : index
      %95 = vector.load %arg8[%c0_39, %c0_40] : memref<1x256xf32, #tpu.memory_space<vmem>>, vector<1x256xf32>
      %96 = vector.broadcast %95 : vector<1x256xf32> to vector<64x256xf32>
      %97 = arith.addf %64, %96 : vector<64x256xf32>
      %c0_41 = arith.constant 0 : index
      %c0_42 = arith.constant 0 : index
      %98 = vector.load %arg17[%c0_41, %c0_42] : memref<64x256xf32, #tpu.memory_space<vmem>>, vector<64x256xf32>
      tpu.vector_store %arg17[%c0_41, %c0_42], %97 {strides = array<i32>} : memref<64x256xf32, #tpu.memory_space<vmem>>, vector<64x256xf32>,
    } else {
    }
    %c0 = arith.constant 0 : index
    %c0_1 = arith.constant 0 : index
    %3 = vector.load %arg16[%c0, %c0_1] : memref<64x256xbf16, #tpu.memory_space<vmem>>, vector<64x256xbf16>
    %c0_2 = arith.constant 0 : index
    %c0_3 = arith.constant 0 : index
    %c0_4 = arith.constant 0 : index
    %4 = vector.load %arg5[%c0_2, %c0_3, %c0_4] : memref<1x256x384xbf16, #tpu.memory_space<vmem>>, vector<1x256x384xbf16>
    %5 = vector.shape_cast %4 : vector<1x256x384xbf16> to vector<256x384xbf16>
    %cst = arith.constant dense<0.000000e+00> : vector<64x384xf32>
    %6 = tpu.matmul %3, %5, %cst {dimension_numbers = #tpu.dot_dimension_numbers<[1], [0], [0], [1], [0, 0, 1, 1], [], []>} : vector<64x256xbf16>, vector<256x384xbf16>, vector<64x384xf32> -> vector<64x384xf32>
    %c0_5 = arith.constant 0 : index
    %c0_6 = arith.constant 0 : index
    %c0_7 = arith.constant 0 : index
    %7 = vector.load %arg6[%c0_5, %c0_6, %c0_7] : memref<1x1x384xf32, #tpu.memory_space<vmem>>, vector<1x1x384xf32>
    %8 = vector.shape_cast %7 : vector<1x1x384xf32> to vector<1x384xf32>
    %9 = vector.broadcast %8 : vector<1x384xf32> to vector<64x384xf32>
    %10 = arith.addf %6, %9 : vector<64x384xf32>
    %11 = vector.extract_strided_slice %10 {offsets = [0, 0], sizes = [64, 128], strides = [1, 1]} : vector<64x384xf32> to vector<64x128xf32>
    %12 = vector.extract_strided_slice %10 {offsets = [0, 128], sizes = [64, 128], strides = [1, 1]} : vector<64x384xf32> to vector<64x128xf32>
    %13 = vector.extract_strided_slice %10 {offsets = [0, 256], sizes = [64, 128], strides = [1, 1]} : vector<64x384xf32> to vector<64x128xf32>
    %14 = vector.extract_strided_slice %11 {offsets = [0, 0], sizes = [64, 64], strides = [1, 1]} : vector<64x128xf32> to vector<64x64xf32>
    %15 = arith.truncf %14 : vector<64x64xf32> to vector<64x64xbf16>
    %16 = vector.extract_strided_slice %12 {offsets = [0, 0], sizes = [64, 64], strides = [1, 1]} : vector<64x128xf32> to vector<64x64xf32>
    %17 = arith.truncf %16 : vector<64x64xf32> to vector<64x64xbf16>
    %18 = vector.extract_strided_slice %13 {offsets = [0, 0], sizes = [64, 64], strides = [1, 1]} : vector<64x128xf32> to vector<64x64xf32>
    %19 = arith.truncf %18 : vector<64x64xf32> to vector<64x64xbf16>
    %cst_8 = arith.constant dense<0.000000e+00> : vector<64x64xf32>
    %20 = tpu.matmul %15, %17, %cst_8 {dimension_numbers = #tpu.dot_dimension_numbers<[1], [1], [0], [0], [0, 0, 1, 0], [], []>} : vector<64x64xbf16>, vector<64x64xbf16>, vector<64x64xf32> -> vector<64x64xf32>
    %cst_9 = arith.constant dense<0xFF800000> : vector<64xf32>
    %21 = vector.multi_reduction <maximumf>, %20, %cst_9 [1] : vector<64x64xf32> to vector<64xf32>
    %22 = vector.shape_cast %21 : vector<64xf32> to vector<64x1xf32>
    %23 = vector.broadcast %22 : vector<64x1xf32> to vector<64x64xf32>
    %24 = arith.subf %20, %23 : vector<64x64xf32>
    %25 = math.exp %24 : vector<64x64xf32>
    %cst_10 = arith.constant dense<0.000000e+00> : vector<64xf32>
    %26 = vector.multi_reduction <add>, %25, %cst_10 [1] : vector<64x64xf32> to vector<64xf32>
    %27 = vector.shape_cast %26 : vector<64xf32> to vector<64x1xf32>
    %28 = tpu.reciprocal %27 {approx = true} : vector<64x1xf32> -> vector<64x1xf32>
    %29 = vector.broadcast %28 : vector<64x1xf32> to vector<64x64xf32>
    %30 = arith.mulf %25, %29 : vector<64x64xf32>
    %31 = arith.truncf %30 : vector<64x64xf32> to vector<64x64xbf16>
    %cst_11 = arith.constant dense<0.000000e+00> : vector<64x64xf32>
    %32 = tpu.matmul %31, %19, %cst_11 {dimension_numbers = #tpu.dot_dimension_numbers<[1], [0], [0], [1], [0, 0, 1, 1], [], []>} : vector<64x64xbf16>, vector<64x64xbf16>, vector<64x64xf32> -> vector<64x64xf32>
    %33 = vector.extract_strided_slice %11 {offsets = [0, 64], sizes = [64, 64], strides = [1, 1]} : vector<64x128xf32> to vector<64x64xf32>
    %34 = arith.truncf %33 : vector<64x64xf32> to vector<64x64xbf16>
    %35 = vector.extract_strided_slice %12 {offsets = [0, 64], sizes = [64, 64], strides = [1, 1]} : vector<64x128xf32> to vector<64x64xf32>
    %36 = arith.truncf %35 : vector<64x64xf32> to vector<64x64xbf16>
    %37 = vector.extract_strided_slice %13 {offsets = [0, 64], sizes = [64, 64], strides = [1, 1]} : vector<64x128xf32> to vector<64x64xf32>
    %38 = arith.truncf %37 : vector<64x64xf32> to vector<64x64xbf16>
    %cst_12 = arith.constant dense<0.000000e+00> : vector<64x64xf32>
    %39 = tpu.matmul %34, %36, %cst_12 {dimension_numbers = #tpu.dot_dimension_numbers<[1], [1], [0], [0], [0, 0, 1, 0], [], []>} : vector<64x64xbf16>, vector<64x64xbf16>, vector<64x64xf32> -> vector<64x64xf32>
    %cst_13 = arith.constant dense<0xFF800000> : vector<64xf32>
    %40 = vector.multi_reduction <maximumf>, %39, %cst_13 [1] : vector<64x64xf32> to vector<64xf32>
    %41 = vector.shape_cast %40 : vector<64xf32> to vector<64x1xf32>
    %42 = vector.broadcast %41 : vector<64x1xf32> to vector<64x64xf32>
    %43 = arith.subf %39, %42 : vector<64x64xf32>
    %44 = math.exp %43 : vector<64x64xf32>
    %cst_14 = arith.constant dense<0.000000e+00> : vector<64xf32>
    %45 = vector.multi_reduction <add>, %44, %cst_14 [1] : vector<64x64xf32> to vector<64xf32>
    %46 = vector.shape_cast %45 : vector<64xf32> to vector<64x1xf32>
    %47 = tpu.reciprocal %46 {approx = true} : vector<64x1xf32> -> vector<64x1xf32>
    %48 = vector.broadcast %47 : vector<64x1xf32> to vector<64x64xf32>
    %49 = arith.mulf %44, %48 : vector<64x64xf32>
    %50 = arith.truncf %49 : vector<64x64xf32> to vector<64x64xbf16>
    %cst_15 = arith.constant dense<0.000000e+00> : vector<64x64xf32>
    %51 = tpu.matmul %50, %38, %cst_15 {dimension_numbers = #tpu.dot_dimension_numbers<[1], [0], [0], [1], [0, 0, 1, 1], [], []>} : vector<64x64xbf16>, vector<64x64xbf16>, vector<64x64xf32> -> vector<64x64xf32>
    %52 = tpu.concatenate %32, %51 in 1 : vector<64x64xf32>, vector<64x64xf32> -> vector<64x128xf32>
    %53 = arith.truncf %52 : vector<64x128xf32> to vector<64x128xbf16>
    %c0_16 = arith.constant 0 : index
    %c0_17 = arith.constant 0 : index
    %54 = vector.load %arg17[%c0_16, %c0_17] : memref<64x256xf32, #tpu.memory_space<vmem>>, vector<64x256xf32>
    %c0_18 = arith.constant 0 : index
    %c0_19 = arith.constant 0 : index
    %c0_20 = arith.constant 0 : index
    %55 = vector.load %arg7[%c0_18, %c0_19, %c0_20] : memref<1x128x256xbf16, #tpu.memory_space<vmem>>, vector<1x128x256xbf16>
    %56 = vector.shape_cast %55 : vector<1x128x256xbf16> to vector<128x256xbf16>
    %cst_21 = arith.constant dense<0.000000e+00> : vector<64x256xf32>
    %57 = tpu.matmul %53, %56, %cst_21 {dimension_numbers = #tpu.dot_dimension_numbers<[1], [0], [0], [1], [0, 0, 1, 1], [], []>} : vector<64x128xbf16>, vector<128x256xbf16>, vector<64x256xf32> -> vector<64x256xf32>
    %58 = arith.addf %54, %57 : vector<64x256xf32>
    %c0_22 = arith.constant 0 : index
    %c0_23 = arith.constant 0 : index
    %59 = vector.load %arg17[%c0_22, %c0_23] : memref<64x256xf32, #tpu.memory_space<vmem>>, vector<64x256xf32>
    tpu.vector_store %arg17[%c0_22, %c0_23], %58 {strides = array<i32>} : memref<64x256xf32, #tpu.memory_space<vmem>>, vector<64x256xf32>,
    %c1_i32 = arith.constant 1 : i32
    %60 = arith.cmpi eq, %arg1, %c1_i32 : i32
    %61 = arith.extui %60 : i1 to i32
    %c0_i32_24 = arith.constant 0 : i32
    %62 = arith.cmpi ne, %61, %c0_i32_24 : i32
    scf.if %62 {
      %c0_25 = arith.constant 0 : index
      %c0_26 = arith.constant 0 : index
      %63 = vector.load %arg17[%c0_25, %c0_26] : memref<64x256xf32, #tpu.memory_space<vmem>>, vector<64x256xf32>
      %c0_27 = arith.constant 0 : index
      %c0_28 = arith.constant 0 : index
      %64 = vector.load %arg9[%c0_27, %c0_28] : memref<1x256xf32, #tpu.memory_space<vmem>>, vector<1x256xf32>
      %65 = vector.shape_cast %64 : vector<1x256xf32> to vector<256xf32>
      %c0_29 = arith.constant 0 : index
      %c0_30 = arith.constant 0 : index
      %66 = vector.load %arg10[%c0_29, %c0_30] : memref<1x256xf32, #tpu.memory_space<vmem>>, vector<1x256xf32>
      %67 = vector.shape_cast %66 : vector<1x256xf32> to vector<256xf32>
      %cst_31 = arith.constant dense<0.000000e+00> : vector<64xf32>
      %68 = vector.multi_reduction <add>, %63, %cst_31 [1] : vector<64x256xf32> to vector<64xf32>
      %69 = vector.shape_cast %68 : vector<64xf32> to vector<64x1xf32>
      %cst_32 = arith.constant 2.560000e+02 : f32
      %70 = vector.broadcast %cst_32 : f32 to vector<64x1xf32>
      %71 = arith.divf %69, %70 : vector<64x1xf32>
      %72 = vector.broadcast %71 : vector<64x1xf32> to vector<64x256xf32>
      %73 = arith.subf %63, %72 : vector<64x256xf32>
      %74 = arith.mulf %73, %73 : vector<64x256xf32>
      %cst_33 = arith.constant dense<0.000000e+00> : vector<64xf32>
      %75 = vector.multi_reduction <add>, %74, %cst_33 [1] : vector<64x256xf32> to vector<64xf32>
      %76 = vector.shape_cast %75 : vector<64xf32> to vector<64x1xf32>
      %cst_34 = arith.constant 2.560000e+02 : f32
      %77 = vector.broadcast %cst_34 : f32 to vector<64x1xf32>
      %78 = arith.divf %76, %77 : vector<64x1xf32>
      %79 = vector.broadcast %71 : vector<64x1xf32> to vector<64x256xf32>
      %80 = arith.subf %63, %79 : vector<64x256xf32>
      %cst_35 = arith.constant 9.99999974E-6 : f32
      %81 = vector.broadcast %cst_35 : f32 to vector<64x1xf32>
      %82 = arith.addf %78, %81 : vector<64x1xf32>
      %83 = math.rsqrt %82 : vector<64x1xf32>
      %84 = vector.broadcast %83 : vector<64x1xf32> to vector<64x256xf32>
      %85 = arith.mulf %80, %84 : vector<64x256xf32>
      %86 = vector.shape_cast %65 : vector<256xf32> to vector<1x256xf32>
      %87 = vector.broadcast %86 : vector<1x256xf32> to vector<64x256xf32>
      %88 = arith.mulf %85, %87 : vector<64x256xf32>
      %89 = vector.shape_cast %67 : vector<256xf32> to vector<1x256xf32>
      %90 = vector.broadcast %89 : vector<1x256xf32> to vector<64x256xf32>
      %91 = arith.addf %88, %90 : vector<64x256xf32>
      %92 = arith.truncf %91 : vector<64x256xf32> to vector<64x256xbf16>
      %c0_36 = arith.constant 0 : index
      %c0_37 = arith.constant 0 : index
      %93 = vector.load %arg11[%c0_36, %c0_37] : memref<256x1024xbf16, #tpu.memory_space<vmem>>, vector<256x1024xbf16>
      %cst_38 = arith.constant dense<0.000000e+00> : vector<64x1024xf32>
      %94 = tpu.matmul %92, %93, %cst_38 {dimension_numbers = #tpu.dot_dimension_numbers<[1], [0], [0], [1], [0, 0, 1, 1], [], []>} : vector<64x256xbf16>, vector<256x1024xbf16>, vector<64x1024xf32> -> vector<64x1024xf32>
      %c0_39 = arith.constant 0 : index
      %c0_40 = arith.constant 0 : index
      %95 = vector.load %arg12[%c0_39, %c0_40] : memref<1x1024xf32, #tpu.memory_space<vmem>>, vector<1x1024xf32>
      %96 = vector.broadcast %95 : vector<1x1024xf32> to vector<64x1024xf32>
      %97 = arith.addf %94, %96 : vector<64x1024xf32>
      %cst_41 = arith.constant 5.000000e-01 : f32
      %98 = vector.broadcast %cst_41 : f32 to vector<64x1024xf32>
      %99 = arith.mulf %98, %97 : vector<64x1024xf32>
      %cst_42 = arith.constant 4.471500e-02 : f32
      %100 = vector.broadcast %cst_42 : f32 to vector<64x1024xf32>
      %101 = arith.mulf %100, %97 : vector<64x1024xf32>
      %102 = arith.mulf %101, %97 : vector<64x1024xf32>
      %103 = arith.mulf %102, %97 : vector<64x1024xf32>
      %104 = arith.addf %97, %103 : vector<64x1024xf32>
      %cst_43 = arith.constant 0.797884583 : f32
      %105 = vector.broadcast %cst_43 : f32 to vector<64x1024xf32>
      %106 = arith.mulf %105, %104 : vector<64x1024xf32>
      %107 = math.tanh %106 : vector<64x1024xf32>
      %cst_44 = arith.constant 1.000000e+00 : f32
      %108 = vector.broadcast %cst_44 : f32 to vector<64x1024xf32>
      %109 = arith.addf %108, %107 : vector<64x1024xf32>
      %110 = arith.mulf %99, %109 : vector<64x1024xf32>
      %111 = arith.truncf %110 : vector<64x1024xf32> to vector<64x1024xbf16>
      %c0_45 = arith.constant 0 : index
      %c0_46 = arith.constant 0 : index
      %112 = vector.load %arg13[%c0_45, %c0_46] : memref<1024x256xbf16, #tpu.memory_space<vmem>>, vector<1024x256xbf16>
      %cst_47 = arith.constant dense<0.000000e+00> : vector<64x256xf32>
      %113 = tpu.matmul %111, %112, %cst_47 {dimension_numbers = #tpu.dot_dimension_numbers<[1], [0], [0], [1], [0, 0, 1, 1], [], []>} : vector<64x1024xbf16>, vector<1024x256xbf16>, vector<64x256xf32> -> vector<64x256xf32>
      %c0_48 = arith.constant 0 : index
      %c0_49 = arith.constant 0 : index
      %114 = vector.load %arg14[%c0_48, %c0_49] : memref<1x256xf32, #tpu.memory_space<vmem>>, vector<1x256xf32>
      %115 = vector.broadcast %114 : vector<1x256xf32> to vector<64x256xf32>
      %116 = arith.addf %113, %115 : vector<64x256xf32>
      %117 = arith.addf %63, %116 : vector<64x256xf32>
      %c0_50 = arith.constant 0 : index
      %c0_51 = arith.constant 0 : index
      %c0_52 = arith.constant 0 : index
      %118 = vector.load %arg15[%c0_50, %c0_51, %c0_52] : memref<1x64x256xf32, #tpu.memory_space<vmem>>, vector<1x64x256xf32>
      %119 = vector.shape_cast %118 : vector<1x64x256xf32> to vector<64x256xf32>
      %120 = vector.shape_cast %117 : vector<64x256xf32> to vector<1x64x256xf32>
      tpu.vector_store %arg15[%c0_50, %c0_51, %c0_52], %120 {strides = array<i32>} : memref<1x64x256xf32, #tpu.memory_space<vmem>>, vector<1x64x256xf32>,
    } else {
    }
    return
  }
  func.func @transform_0(%arg0: i32, %arg1: i32) -> (i32, i32, i32) {
    %c0_i32 = arith.constant 0 : i32
    %c0_i32_0 = arith.constant 0 : i32
    %c0_i32_1 = arith.constant 0 : i32
    return %arg0, %c0_i32, %c0_i32_0 : i32, i32, i32
  }
  func.func @transform_1(%arg0: i32, %arg1: i32) -> (i32, i32) {
    %c0_i32 = arith.constant 0 : i32
    %c0_i32_0 = arith.constant 0 : i32
    %c0_i32_1 = arith.constant 0 : i32
    return %c0_i32, %c0_i32_0 : i32, i32
  }
  func.func @transform_2(%arg0: i32, %arg1: i32) -> (i32, i32) {
    %c0_i32 = arith.constant 0 : i32
    %c0_i32_0 = arith.constant 0 : i32
    %c0_i32_1 = arith.constant 0 : i32
    return %c0_i32, %c0_i32_0 : i32, i32
  }
  func.func @transform_3(%arg0: i32, %arg1: i32) -> (i32, i32, i32) {
    %c0_i32 = arith.constant 0 : i32
    %c0_i32_0 = arith.constant 0 : i32
    %c0_i32_1 = arith.constant 0 : i32
    return %arg1, %c0_i32, %c0_i32_0 : i32, i32, i32
  }
  func.func @transform_4(%arg0: i32, %arg1: i32) -> (i32, i32, i32) {
    %c0_i32 = arith.constant 0 : i32
    %c0_i32_0 = arith.constant 0 : i32
    %c0_i32_1 = arith.constant 0 : i32
    return %arg1, %c0_i32, %c0_i32_0 : i32, i32, i32
  }
  func.func @transform_5(%arg0: i32, %arg1: i32) -> (i32, i32, i32) {
    %c0_i32 = arith.constant 0 : i32
    %c0_i32_0 = arith.constant 0 : i32
    %c0_i32_1 = arith.constant 0 : i32
    return %arg1, %c0_i32, %c0_i32_0 : i32, i32, i32
  }
  func.func @transform_6(%arg0: i32, %arg1: i32) -> (i32, i32) {
    %c0_i32 = arith.constant 0 : i32
    %c0_i32_0 = arith.constant 0 : i32
    %c0_i32_1 = arith.constant 0 : i32
    return %c0_i32, %c0_i32_0 : i32, i32
  }
  func.func @transform_7(%arg0: i32, %arg1: i32) -> (i32, i32) {
    %c0_i32 = arith.constant 0 : i32
    %c0_i32_0 = arith.constant 0 : i32
    %c0_i32_1 = arith.constant 0 : i32
    return %c0_i32, %c0_i32_0 : i32, i32
  }
  func.func @transform_8(%arg0: i32, %arg1: i32) -> (i32, i32) {
    %c0_i32 = arith.constant 0 : i32
    %c0_i32_0 = arith.constant 0 : i32
    %c0_i32_1 = arith.constant 0 : i32
    return %c0_i32, %c0_i32_0 : i32, i32
  }
  func.func @transform_9(%arg0: i32, %arg1: i32) -> (i32, i32) {
    %c0_i32 = arith.constant 0 : i32
    %c0_i32_0 = arith.constant 0 : i32
    %c0_i32_1 = arith.constant 0 : i32
    return %c0_i32, %c0_i32_0 : i32, i32
  }
  func.func @transform_10(%arg0: i32, %arg1: i32) -> (i32, i32) {
    %c0_i32 = arith.constant 0 : i32
    %c0_i32_0 = arith.constant 0 : i32
    %c0_i32_1 = arith.constant 0 : i32
    return %c0_i32, %c0_i32_0 : i32, i32
  }
  func.func @transform_11(%arg0: i32, %arg1: i32) -> (i32, i32) {
    %c0_i32 = arith.constant 0 : i32
    %c0_i32_0 = arith.constant 0 : i32
    %c0_i32_1 = arith.constant 0 : i32
    return %c0_i32, %c0_i32_0 : i32, i32
  }
  func.func @transform_12(%arg0: i32, %arg1: i32) -> (i32, i32) {
    %c0_i32 = arith.constant 0 : i32
    %c0_i32_0 = arith.constant 0 : i32
    %c0_i32_1 = arith.constant 0 : i32
    return %c0_i32, %c0_i32_0 : i32, i32
  }
  func.func @transform_13(%arg0: i32, %arg1: i32) -> (i32, i32, i32) {
    %c0_i32 = arith.constant 0 : i32
    %c0_i32_0 = arith.constant 0 : i32
    %c0_i32_1 = arith.constant 0 : i32
    return %arg0, %c0_i32, %c0_i32_0 : i32, i32, i32
  }
}

</mosaic_0001>

<llo_original>
// kernel: tpu_custom_call.1
$region0: #{tpu_custom_call.1}
  #allocation0 [shape = 'u32[]', space=smem, size = 0x4, offset = 0x4, fixed_abs, tag = 'smem constant byte address 0x4 - core index']
  #allocation1 [shape = 'u32[72,128]{1,0:T(1,128)}', space=vmem, size = 0x9000, scoped, tag = 'internal scratch']
  #allocation2 [shape = 'bf16[64,256]{1,0:T(8,128)(2,1)}', space=vmem, size = 0x8000, scoped, tag = 'scratch operand']
  #allocation3 [shape = 'f32[64,256]{1,0:T(8,128)}', space=vmem, size = 0x10000, scoped, tag = 'scratch operand']
  %s0 = inlined_call_operand.hbm [shape: f32[2,64,256], index: 0, kind: input, shape index: {}]
  %s1 = inlined_call_operand.hbm [shape: f32[1,256], index: 1, kind: input, shape index: {}]
  %s2 = inlined_call_operand.hbm [shape: f32[1,256], index: 2, kind: input, shape index: {}]
  %s3 = inlined_call_operand.hbm [shape: bf16[2,256,384], index: 3, kind: input, shape index: {}]
  %s4 = inlined_call_operand.hbm [shape: f32[2,1,384], index: 4, kind: input, shape index: {}]
  %s5 = inlined_call_operand.hbm [shape: bf16[2,128,256], index: 5, kind: input, shape index: {}]
  %s6 = inlined_call_operand.hbm [shape: f32[1,256], index: 6, kind: input, shape index: {}]
  %s7 = inlined_call_operand.hbm [shape: f32[1,256], index: 7, kind: input, shape index: {}]
  %s8 = inlined_call_operand.hbm [shape: f32[1,256], index: 8, kind: input, shape index: {}]
  %s9 = inlined_call_operand.hbm [shape: bf16[256,1024], index: 9, kind: input, shape index: {}]
  %s10 = inlined_call_operand.vmem [shape: f32[1,1024], index: 10, kind: input, shape index: {}]
  %s11 = inlined_call_operand.hbm [shape: bf16[1024,256], index: 11, kind: input, shape index: {}]
  %s12 = inlined_call_operand.vmem [shape: f32[1,256], index: 12, kind: input, shape index: {}]
  %s13 = inlined_call_operand.hbm [shape: f32[2,64,256], index: 13, kind: output, shape index: {}]
  %s14 = sld [smem:[#allocation0]]
  $region137: #{tpu_custom_call.1} parent=0
    _
  %s16 = ssub.s32 1, %s14
  %s17 = scalar_select 0, %s16, %s14
  $region1: #{tpu_custom_call.1} parent=0
    #allocation4 [shape = 'u8[131072]{0}', space=vmem, size = 0x20000, scoped, tag = 'input window, operand 0']
    #allocation5 [shape = 's32[2]{0}', space=sflag, size = 0x8, scoped, tag = 'scoped memory for tpu_custom_call.1']
    #allocation6 [shape = 's32[2]{0}', space=sflag, size = 0x8, scoped, tag = 'scoped memory for tpu_custom_call.1']
    #allocation7 [shape = 'u8[1024]{0}', space=vmem, size = 0x400, scoped, tag = 'input window, operand 1, single buffered']
    #allocation8 [shape = 's32[1]{0}', space=sflag, size = 0x4, scoped, tag = 'scoped memory for tpu_custom_call.1']
    #allocation9 [shape = 'u8[1024]{0}', space=vmem, size = 0x400, scoped, tag = 'input window, operand 2, single buffered']
    #allocation10 [shape = 'u8[393216]{0}', space=vmem, size = 0x60000, scoped, tag = 'input window, operand 3']
    #allocation11 [shape = 's32[2]{0}', space=sflag, size = 0x8, scoped, tag = 'scoped memory for tpu_custom_call.1']
    #allocation12 [shape = 'u8[3072]{0}', space=vmem, size = 0xc00, scoped, tag = 'input window, operand 4']
    #allocation13 [shape = 'u8[131072]{0}', space=vmem, size = 0x20000, scoped, tag = 'input window, operand 5']
    #allocation14 [shape = 's32[2]{0}', space=sflag, size = 0x8, scoped, tag = 'scoped memory for tpu_custom_call.1']
    #allocation15 [shape = 'u8[1024]{0}', space=vmem, size = 0x400, scoped, tag = 'input window, operand 6, single buffered']
    #allocation16 [shape = 'u8[1024]{0}', space=vmem, size = 0x400, scoped, tag = 'input window, operand 7, single buffered']
    #allocation17 [shape = 's32[1]{0}', space=sflag, size = 0x4, scoped, tag = 'scoped memory for tpu_custom_call.1']
    #allocation18 [shape = 'u8[1024]{0}', space=vmem, size = 0x400, scoped, tag = 'input window, operand 8, single buffered']
    #allocation19 [shape = 'u8[524288]{0}', space=vmem, size = 0x80000, scoped, tag = 'input window, operand 9, single buffered']
    #allocation20 [shape = 's32[1]{0}', space=sflag, size = 0x4, scoped, tag = 'scoped memory for tpu_custom_call.1']
    #allocation21 [shape = 'u8[524288]{0}', space=vmem, size = 0x80000, scoped, tag = 'input window, operand 11, single buffered']
    #allocation22 [shape = 'u8[131072]{0}', space=vmem, size = 0x20000, scoped, tag = 'output window, operand 0']
    %18 = vsyncpa [#allocation5], 0
    %s19 = scalar_lea.sflag [#allocation5], 1
    %20 = vsyncpa %s19, 0
    %21 = vsyncpa [#allocation8], 0
    %22 = vsyncpa [#allocation11], 0
    %s23 = scalar_lea.sflag [#allocation11], 1
    %24 = vsyncpa %s23, 0
    %25 = vsyncpa [#allocation14], 0
    %s26 = scalar_lea.sflag [#allocation14], 1
    %27 = vsyncpa %s26, 0
    %28 = vsyncpa [#allocation17], 0
    %29 = vsyncpa [#allocation20], 0
    %30 = vsyncpa [#allocation6], 0
    %s31 = scalar_lea.sflag [#allocation6], 1
    %32 = vsyncpa %s31, 0
    loop: start=0, step=1, limit=6
    $region2: #{tpu_custom_call.1} parent=1 // loop_pre_header
      _
    $region3: #{tpu_custom_call.1} parent=1 // loop_header
      %s34 = sphi 0, %s38
      %p35 = scmp.ge.s32.totalorder %s34, 6
      %s41 = sphi 0, %s53
      %s42 = sphi 0, %s49
      %s43 = sphi 0, %s41
      %s44 = sphi 0, %s42
      %s45 = sphi 0, %s43
      %s46 = sphi 0, %s44
      %s56 = sphi 0, %s58
      %s59 = sphi 0, %s56
      %s60 = sphi 0, %s59
      %s76 = sphi 0, %s60
      %s80 = sphi 0, %s80
      %s82 = sphi 0, %s80
      %s83 = sphi 0, %s82
      %s97 = sphi 0, %s83
      %s101 = sphi 0, %s101
      %s103 = sphi 0, %s101
      %s104 = sphi 0, %s103
      %s118 = sphi 0, %s104
      %s124 = sphi 0, %s126
      %s127 = sphi 0, %s124
      %s128 = sphi 0, %s127
      %s144 = sphi 0, %s128
      %s150 = sphi 0, %s152
      %s153 = sphi 0, %s150
      %s154 = sphi 0, %s153
      %s170 = sphi 0, %s154
      %s176 = sphi 0, %s178
      %s179 = sphi 0, %s176
      %s180 = sphi 0, %s179
      %s196 = sphi 0, %s180
      %s200 = sphi 0, %s200
      %s202 = sphi 0, %s200
      %s203 = sphi 0, %s202
      %s217 = sphi 0, %s203
      %s221 = sphi 0, %s221
      %s223 = sphi 0, %s221
      %s224 = sphi 0, %s223
      %s238 = sphi 0, %s224
      %s242 = sphi 0, %s242
      %s244 = sphi 0, %s242
      %s245 = sphi 0, %s244
      %s259 = sphi 0, %s245
      %s263 = sphi 0, %s263
      %s265 = sphi 0, %s263
      %s266 = sphi 0, %s265
      %s280 = sphi 0, %s266
      %s284 = sphi 0, %s284
      %s286 = sphi 0, %s284
      %s287 = sphi 0, %s286
      %s301 = sphi 0, %s287
      %s305 = sphi 0, %s305
      %s307 = sphi 0, %s305
      %s308 = sphi 0, %s307
      %s322 = sphi 0, %s308
      %s326 = sphi 0, %s326
      %s328 = sphi 0, %s326
      %s329 = sphi 0, %s328
      %s343 = sphi 0, %s329
      %s349 = sphi 0, %s351
      %s352 = sphi 0, %s349
      %s353 = sphi 0, %s352
      %s369 = sphi 0, %s353
    $region4: #{tpu_custom_call.1} parent=1 // loop_header_branch
      %37 = sbr.rel (%p35) target = $region8
    $region5: #{tpu_custom_call.1} parent=1 // loop_body
      %s39 = ssub.s32 %s34, 1
      %s40 = ssub.s32 %s34, 2
      %s47 = sadd.s32 1, %s42
      %p48 = scmp.ge.s32.totalorder %s47, 2
      %s49 = scalar_select %p48, 0, %s47
      %s50 = sadd.s32 1, %s41
      %s51 = scalar_select %p48, %s50, %s41
      %p52 = scmp.ge.s32.totalorder %s51, 2
      %s53 = scalar_select %p52, 0, %s51
      %s54 = ssub.s32 %s41, %s53
      %p55 = scmp.eq.s32.totalorder %s54, 0
      %s57 = sadd.s32 %s56, 1
      %s58 = scalar_select %p55, %s56, %s57
      %p61 = pneg %p55
      %p62 = scmp.eq.s32.totalorder %s34, 3
      %p63 = por %p61, %p62
      %p64 = scmp.ne.s32.totalorder %s56, %s59
      %p65 = scmp.eq.s32.totalorder %s34, 0
      %p66 = por %p64, %p65
      %p67 = scmp.ne.s32.totalorder %s56, %s59
      %p68 = scmp.eq.s32.totalorder %s39, 3
      %p69 = por %p67, %p68
      %p70 = scmp.ne.s32.totalorder %s59, %s60
      %p71 = scmp.eq.s32.totalorder %s39, 0
      %p72 = por %p70, %p71
      %p73 = scmp.ne.s32.totalorder %s59, %s60
      %p74 = scmp.eq.s32.totalorder %s40, 3
      %p75 = por %p73, %p74
      %p77 = scmp.ne.s32.totalorder %s60, %s76
      %p78 = scmp.eq.s32.totalorder %s40, 0
      %p79 = por %p77, %p78
      %s81 = sadd.s32 %s80, 1
      %p84 = scmp.eq.s32.totalorder %s34, 3
      %p85 = scmp.ne.s32.totalorder %s80, %s82
      %p86 = scmp.eq.s32.totalorder %s34, 0
      %p87 = por %p85, %p86
      %p88 = scmp.ne.s32.totalorder %s80, %s82
      %p89 = scmp.eq.s32.totalorder %s39, 3
      %p90 = por %p88, %p89
      %p91 = scmp.ne.s32.totalorder %s82, %s83
      %p92 = scmp.eq.s32.totalorder %s39, 0
      %p93 = por %p91, %p92
      %p94 = scmp.ne.s32.totalorder %s82, %s83
      %p95 = scmp.eq.s32.totalorder %s40, 3
      %p96 = por %p94, %p95
      %p98 = scmp.ne.s32.totalorder %s83, %s97
      %p99 = scmp.eq.s32.totalorder %s40, 0
      %p100 = por %p98, %p99
      %s102 = sadd.s32 %s101, 1
      %p105 = scmp.eq.s32.totalorder %s34, 3
      %p106 = scmp.ne.s32.totalorder %s101, %s103
      %p107 = scmp.eq.s32.totalorder %s34, 0
      %p108 = por %p106, %p107
      %p109 = scmp.ne.s32.totalorder %s101, %s103
      %p110 = scmp.eq.s32.totalorder %s39, 3
      %p111 = por %p109, %p110
      %p112 = scmp.ne.s32.totalorder %s103, %s104
      %p113 = scmp.eq.s32.totalorder %s39, 0
      %p114 = por %p112, %p113
      %p115 = scmp.ne.s32.totalorder %s103, %s104
      %p116 = scmp.eq.s32.totalorder %s40, 3
      %p117 = por %p115, %p116
      %p119 = scmp.ne.s32.totalorder %s104, %s118
      %p120 = scmp.eq.s32.totalorder %s40, 0
      %p121 = por %p119, %p120
      %s122 = ssub.s32 %s42, %s49
      %p123 = scmp.eq.s32.totalorder %s122, 0
      %s125 = sadd.s32 %s124, 1
      %s126 = scalar_select %p123, %s124, %s125
      %p129 = pneg %p123
      %p130 = scmp.eq.s32.totalorder %s34, 3
      %p131 = por %p129, %p130
      %p132 = scmp.ne.s32.totalorder %s124, %s127
      %p133 = scmp.eq.s32.totalorder %s34, 0
      %p134 = por %p132, %p133
      %p135 = scmp.ne.s32.totalorder %s124, %s127
      %p136 = scmp.eq.s32.totalorder %s39, 3
      %p137 = por %p135, %p136
      %p138 = scmp.ne.s32.totalorder %s127, %s128
      %p139 = scmp.eq.s32.totalorder %s39, 0
      %p140 = por %p138, %p139
      %p141 = scmp.ne.s32.totalorder %s127, %s128
      %p142 = scmp.eq.s32.totalorder %s40, 3
      %p143 = por %p141, %p142
      %p145 = scmp.ne.s32.totalorder %s128, %s144
      %p146 = scmp.eq.s32.totalorder %s40, 0
      %p147 = por %p145, %p146
      %s148 = ssub.s32 %s42, %s49
      %p149 = scmp.eq.s32.totalorder %s148, 0
      %s151 = sadd.s32 %s150, 1
      %s152 = scalar_select %p149, %s150, %s151
      %p155 = pneg %p149
      %p156 = scmp.eq.s32.totalorder %s34, 3
      %p157 = por %p155, %p156
      %p158 = scmp.ne.s32.totalorder %s150, %s153
      %p159 = scmp.eq.s32.totalorder %s34, 0
      %p160 = por %p158, %p159
      %p161 = scmp.ne.s32.totalorder %s150, %s153
      %p162 = scmp.eq.s32.totalorder %s39, 3
      %p163 = por %p161, %p162
      %p164 = scmp.ne.s32.totalorder %s153, %s154
      %p165 = scmp.eq.s32.totalorder %s39, 0
      %p166 = por %p164, %p165
      %p167 = scmp.ne.s32.totalorder %s153, %s154
      %p168 = scmp.eq.s32.totalorder %s40, 3
      %p169 = por %p167, %p168
      %p171 = scmp.ne.s32.totalorder %s154, %s170
      %p172 = scmp.eq.s32.totalorder %s40, 0
      %p173 = por %p171, %p172
      %s174 = ssub.s32 %s42, %s49
      %p175 = scmp.eq.s32.totalorder %s174, 0
      %s177 = sadd.s32 %s176, 1
      %s178 = scalar_select %p175, %s176, %s177
      %p181 = pneg %p175
      %p182 = scmp.eq.s32.totalorder %s34, 3
      %p183 = por %p181, %p182
      %p184 = scmp.ne.s32.totalorder %s176, %s179
      %p185 = scmp.eq.s32.totalorder %s34, 0
      %p186 = por %p184, %p185
      %p187 = scmp.ne.s32.totalorder %s176, %s179
      %p188 = scmp.eq.s32.totalorder %s39, 3
      %p189 = por %p187, %p188
      %p190 = scmp.ne.s32.totalorder %s179, %s180
      %p191 = scmp.eq.s32.totalorder %s39, 0
      %p192 = por %p190, %p191
      %p193 = scmp.ne.s32.totalorder %s179, %s180
      %p194 = scmp.eq.s32.totalorder %s40, 3
      %p195 = por %p193, %p194
      %p197 = scmp.ne.s32.totalorder %s180, %s196
      %p198 = scmp.eq.s32.totalorder %s40, 0
      %p199 = por %p197, %p198
      %s201 = sadd.s32 %s200, 1
      %p204 = scmp.eq.s32.totalorder %s34, 3
      %p205 = scmp.ne.s32.totalorder %s200, %s202
      %p206 = scmp.eq.s32.totalorder %s34, 0
      %p207 = por %p205, %p206
      %p208 = scmp.ne.s32.totalorder %s200, %s202
      %p209 = scmp.eq.s32.totalorder %s39, 3
      %p210 = por %p208, %p209
      %p211 = scmp.ne.s32.totalorder %s202, %s203
      %p212 = scmp.eq.s32.totalorder %s39, 0
      %p213 = por %p211, %p212
      %p214 = scmp.ne.s32.totalorder %s202, %s203
      %p215 = scmp.eq.s32.totalorder %s40, 3
      %p216 = por %p214, %p215
      %p218 = scmp.ne.s32.totalorder %s203, %s217
      %p219 = scmp.eq.s32.totalorder %s40, 0
      %p220 = por %p218, %p219
      %s222 = sadd.s32 %s221, 1
      %p225 = scmp.eq.s32.totalorder %s34, 3
      %p226 = scmp.ne.s32.totalorder %s221, %s223
      %p227 = scmp.eq.s32.totalorder %s34, 0
      %p228 = por %p226, %p227
      %p229 = scmp.ne.s32.totalorder %s221, %s223
      %p230 = scmp.eq.s32.totalorder %s39, 3
      %p231 = por %p229, %p230
      %p232 = scmp.ne.s32.totalorder %s223, %s224
      %p233 = scmp.eq.s32.totalorder %s39, 0
      %p234 = por %p232, %p233
      %p235 = scmp.ne.s32.totalorder %s223, %s224
      %p236 = scmp.eq.s32.totalorder %s40, 3
      %p237 = por %p235, %p236
      %p239 = scmp.ne.s32.totalorder %s224, %s238
      %p240 = scmp.eq.s32.totalorder %s40, 0
      %p241 = por %p239, %p240
      %s243 = sadd.s32 %s242, 1
      %p246 = scmp.eq.s32.totalorder %s34, 3
      %p247 = scmp.ne.s32.totalorder %s242, %s244
      %p248 = scmp.eq.s32.totalorder %s34, 0
      %p249 = por %p247, %p248
      %p250 = scmp.ne.s32.totalorder %s242, %s244
      %p251 = scmp.eq.s32.totalorder %s39, 3
      %p252 = por %p250, %p251
      %p253 = scmp.ne.s32.totalorder %s244, %s245
      %p254 = scmp.eq.s32.totalorder %s39, 0
      %p255 = por %p253, %p254
      %p256 = scmp.ne.s32.totalorder %s244, %s245
      %p257 = scmp.eq.s32.totalorder %s40, 3
      %p258 = por %p256, %p257
      %p260 = scmp.ne.s32.totalorder %s245, %s259
      %p261 = scmp.eq.s32.totalorder %s40, 0
      %p262 = por %p260, %p261
      %s264 = sadd.s32 %s263, 1
      %p267 = scmp.eq.s32.totalorder %s34, 3
      %p268 = scmp.ne.s32.totalorder %s263, %s265
      %p269 = scmp.eq.s32.totalorder %s34, 0
      %p270 = por %p268, %p269
      %p271 = scmp.ne.s32.totalorder %s263, %s265
      %p272 = scmp.eq.s32.totalorder %s39, 3
      %p273 = por %p271, %p272
      %p274 = scmp.ne.s32.totalorder %s265, %s266
      %p275 = scmp.eq.s32.totalorder %s39, 0
      %p276 = por %p274, %p275
      %p277 = scmp.ne.s32.totalorder %s265, %s266
      %p278 = scmp.eq.s32.totalorder %s40, 3
      %p279 = por %p277, %p278
      %p281 = scmp.ne.s32.totalorder %s266, %s280
      %p282 = scmp.eq.s32.totalorder %s40, 0
      %p283 = por %p281, %p282
      %s285 = sadd.s32 %s284, 1
      %p288 = scmp.eq.s32.totalorder %s34, 3
      %p289 = scmp.ne.s32.totalorder %s284, %s286
      %p290 = scmp.eq.s32.totalorder %s34, 0
      %p291 = por %p289, %p290
      %p292 = scmp.ne.s32.totalorder %s284, %s286
      %p293 = scmp.eq.s32.totalorder %s39, 3
      %p294 = por %p292, %p293
      %p295 = scmp.ne.s32.totalorder %s286, %s287
      %p296 = scmp.eq.s32.totalorder %s39, 0
      %p297 = por %p295, %p296
      %p298 = scmp.ne.s32.totalorder %s286, %s287
      %p299 = scmp.eq.s32.totalorder %s40, 3
      %p300 = por %p298, %p299
      %p302 = scmp.ne.s32.totalorder %s287, %s301
      %p303 = scmp.eq.s32.totalorder %s40, 0
      %p304 = por %p302, %p303
      %s306 = sadd.s32 %s305, 1
      %p309 = scmp.eq.s32.totalorder %s34, 3
      %p310 = scmp.ne.s32.totalorder %s305, %s307
      %p311 = scmp.eq.s32.totalorder %s34, 0
      %p312 = por %p310, %p311
      %p313 = scmp.ne.s32.totalorder %s305, %s307
      %p314 = scmp.eq.s32.totalorder %s39, 3
      %p315 = por %p313, %p314
      %p316 = scmp.ne.s32.totalorder %s307, %s308
      %p317 = scmp.eq.s32.totalorder %s39, 0
      %p318 = por %p316, %p317
      %p319 = scmp.ne.s32.totalorder %s307, %s308
      %p320 = scmp.eq.s32.totalorder %s40, 3
      %p321 = por %p319, %p320
      %p323 = scmp.ne.s32.totalorder %s308, %s322
      %p324 = scmp.eq.s32.totalorder %s40, 0
      %p325 = por %p323, %p324
      %s327 = sadd.s32 %s326, 1
      %p330 = scmp.eq.s32.totalorder %s34, 3
      %p331 = scmp.ne.s32.totalorder %s326, %s328
      %p332 = scmp.eq.s32.totalorder %s34, 0
      %p333 = por %p331, %p332
      %p334 = scmp.ne.s32.totalorder %s326, %s328
      %p335 = scmp.eq.s32.totalorder %s39, 3
      %p336 = por %p334, %p335
      %p337 = scmp.ne.s32.totalorder %s328, %s329
      %p338 = scmp.eq.s32.totalorder %s39, 0
      %p339 = por %p337, %p338
      %p340 = scmp.ne.s32.totalorder %s328, %s329
      %p341 = scmp.eq.s32.totalorder %s40, 3
      %p342 = por %p340, %p341
      %p344 = scmp.ne.s32.totalorder %s329, %s343
      %p345 = scmp.eq.s32.totalorder %s40, 0
      %p346 = por %p344, %p345
      %s347 = ssub.s32 %s41, %s53
      %p348 = scmp.eq.s32.totalorder %s347, 0
      %s350 = sadd.s32 %s349, 1
      %s351 = scalar_select %p348, %s349, %s350
      %p354 = pneg %p348
      %p355 = scmp.eq.s32.totalorder %s34, 3
      %p356 = por %p354, %p355
      %p357 = scmp.ne.s32.totalorder %s349, %s352
      %p358 = scmp.eq.s32.totalorder %s34, 0
      %p359 = por %p357, %p358
      %p360 = scmp.ne.s32.totalorder %s349, %s352
      %p361 = scmp.eq.s32.totalorder %s39, 3
      %p362 = por %p360, %p361
      %p363 = scmp.ne.s32.totalorder %s352, %s353
      %p364 = scmp.eq.s32.totalorder %s39, 0
      %p365 = por %p363, %p364
      %p366 = scmp.ne.s32.totalorder %s352, %s353
      %p367 = scmp.eq.s32.totalorder %s40, 3
      %p368 = por %p366, %p367
      %p370 = scmp.ne.s32.totalorder %s353, %s369
      %p371 = scmp.eq.s32.totalorder %s40, 0
      %p372 = por %p370, %p371
      %p373 = scmp.le.s32.totalorder 1, %s34
      %p374 = scmp.lt.s32.totalorder %s34, 5
      %p375 = pnand %p373, %p374
      %p376 = pneg %p375
      // Predicated region
      $region9: #{tpu_custom_call.1} parent=5 // pred_check
        _
      $region10: #{tpu_custom_call.1} parent=5 // pred_check_branch
        %378 = sbr.rel (%p375) target = $region12
      $region11: #{tpu_custom_call.1} parent=5 // pred_region
        %s379 = ssub.s32 %s34, 1
        // Predicated region
        $region13: #{tpu_custom_call.1} parent=11 // pred_check
          %p380 = pneg %p93
        $region14: #{tpu_custom_call.1} parent=11 // pred_check_branch
          %382 = sbr.rel (%p380) target = $region16
        $region15: #{tpu_custom_call.1} parent=11 // pred_region
          %384 = vsyncadd [#allocation8], 0
          %s386 = sshll.u32 %s1, 4
          %s387 = int_to_ptr.hbm [resolvable:$true] %s386
          %s388 = sshll.u32 [#allocation7], 4
          %s389 = int_to_ptr.vmem [resolvable:$true] %s388
          %391 = dma.hbm_to_vmem [thread:$0]  %s387, 32, %s389, [#allocation8]
        $region16: #{tpu_custom_call.1} parent=11 // pred_fallthru
          _
        // Predicated region
        $region17: #{tpu_custom_call.1} parent=11 // pred_check
          %p392 = pneg %p114
        $region18: #{tpu_custom_call.1} parent=11 // pred_check_branch
          %394 = sbr.rel (%p392) target = $region20
        $region19: #{tpu_custom_call.1} parent=11 // pred_region
          %396 = vsyncadd [#allocation8], 0
          %s398 = sshll.u32 %s2, 4
          %s399 = int_to_ptr.hbm [resolvable:$true] %s398
          %s400 = sshll.u32 [#allocation9], 4
          %s401 = int_to_ptr.vmem [resolvable:$true] %s400
          %403 = dma.hbm_to_vmem [thread:$0]  %s399, 32, %s401, [#allocation8]
        $region20: #{tpu_custom_call.1} parent=11 // pred_fallthru
          _
        // Predicated region
        $region21: #{tpu_custom_call.1} parent=11 // pred_check
          %p404 = pneg %p213
        $region22: #{tpu_custom_call.1} parent=11 // pred_check_branch
          %406 = sbr.rel (%p404) target = $region24
        $region23: #{tpu_custom_call.1} parent=11 // pred_region
          %408 = vsyncadd [#allocation14], 0
          %s410 = sshll.u32 %s6, 4
          %s411 = int_to_ptr.hbm [resolvable:$true] %s410
          %s412 = sshll.u32 [#allocation15], 4
          %s413 = int_to_ptr.vmem [resolvable:$true] %s412
          %415 = dma.hbm_to_vmem [thread:$0]  %s411, 32, %s413, [#allocation14]
        $region24: #{tpu_custom_call.1} parent=11 // pred_fallthru
          _
        // Predicated region
        $region25: #{tpu_custom_call.1} parent=11 // pred_check
          %p416 = pneg %p234
        $region26: #{tpu_custom_call.1} parent=11 // pred_check_branch
          %418 = sbr.rel (%p416) target = $region28
        $region27: #{tpu_custom_call.1} parent=11 // pred_region
          %420 = vsyncadd [#allocation17], 0
          %s422 = sshll.u32 %s7, 4
          %s423 = int_to_ptr.hbm [resolvable:$true] %s422
          %s424 = sshll.u32 [#allocation16], 4
          %s425 = int_to_ptr.vmem [resolvable:$true] %s424
          %427 = dma.hbm_to_vmem [thread:$0]  %s423, 32, %s425, [#allocation17]
        $region28: #{tpu_custom_call.1} parent=11 // pred_fallthru
          _
        // Predicated region
        $region29: #{tpu_custom_call.1} parent=11 // pred_check
          %p428 = pneg %p255
        $region30: #{tpu_custom_call.1} parent=11 // pred_check_branch
          %430 = sbr.rel (%p428) target = $region32
        $region31: #{tpu_custom_call.1} parent=11 // pred_region
          %432 = vsyncadd [#allocation17], 0
          %s434 = sshll.u32 %s8, 4
          %s435 = int_to_ptr.hbm [resolvable:$true] %s434
          %s436 = sshll.u32 [#allocation18], 4
          %s437 = int_to_ptr.vmem [resolvable:$true] %s436
          %439 = dma.hbm_to_vmem [thread:$0]  %s435, 32, %s437, [#allocation17]
        $region32: #{tpu_custom_call.1} parent=11 // pred_fallthru
          _
        // Predicated region
        $region33: #{tpu_custom_call.1} parent=11 // pred_check
          %p440 = pneg %p276
        $region34: #{tpu_custom_call.1} parent=11 // pred_check_branch
          %442 = sbr.rel (%p440) target = $region36
        $region35: #{tpu_custom_call.1} parent=11 // pred_region
          %444 = vsyncadd [#allocation20], 0
          %s445 = sshll.u32 %s9, 4
          %s446 = int_to_ptr.hbm [resolvable:$true] %s445
          %s447 = sshll.u32 [#allocation19], 4
          %s448 = int_to_ptr.vmem [resolvable:$true] %s447
          %453 = dma.hbm_to_vmem [thread:$0]  %s446, 16384, %s448, [#allocation20], 512, 512, 32
        $region36: #{tpu_custom_call.1} parent=11 // pred_fallthru
          _
        // Predicated region
        $region37: #{tpu_custom_call.1} parent=11 // pred_check
          %p454 = pneg %p297
        $region38: #{tpu_custom_call.1} parent=11 // pred_check_branch
          %456 = sbr.rel (%p454) target = $region40
        $region39: #{tpu_custom_call.1} parent=11 // pred_region
          _
        $region40: #{tpu_custom_call.1} parent=11 // pred_fallthru
          _
        // Predicated region
        $region41: #{tpu_custom_call.1} parent=11 // pred_check
          %p457 = pneg %p318
        $region42: #{tpu_custom_call.1} parent=11 // pred_check_branch
          %459 = sbr.rel (%p457) target = $region44
        $region43: #{tpu_custom_call.1} parent=11 // pred_region
          %461 = vsyncadd [#allocation20], 0
          %s462 = sshll.u32 %s11, 4
          %s463 = int_to_ptr.hbm [resolvable:$true] %s462
          %s464 = sshll.u32 [#allocation21], 4
          %s465 = int_to_ptr.vmem [resolvable:$true] %s464
          %470 = dma.hbm_to_vmem [thread:$0]  %s463, 16384, %s465, [#allocation20], 128, 128, 8
        $region44: #{tpu_custom_call.1} parent=11 // pred_fallthru
          _
        // Predicated region
        $region45: #{tpu_custom_call.1} parent=11 // pred_check
          %p471 = pneg %p339
        $region46: #{tpu_custom_call.1} parent=11 // pred_check_branch
          %473 = sbr.rel (%p471) target = $region48
        $region47: #{tpu_custom_call.1} parent=11 // pred_region
          _
        $region48: #{tpu_custom_call.1} parent=11 // pred_fallthru
          _
      $region12: #{tpu_custom_call.1} parent=5 // pred_fallthru
        _
      %p474 = scmp.lt.s32.totalorder %s34, 4
      // Predicated region
      $region49: #{tpu_custom_call.1} parent=5 // pred_check
        %p475 = pneg %p474
      $region50: #{tpu_custom_call.1} parent=5 // pred_check_branch
        %477 = sbr.rel (%p475) target = $region52
      $region51: #{tpu_custom_call.1} parent=5 // pred_region
        // Predicated region
        $region53: #{tpu_custom_call.1} parent=51 // pred_check
          %p478 = pneg %p66
        $region54: #{tpu_custom_call.1} parent=51 // pred_check_branch
          %480 = sbr.rel (%p478) target = $region56
        $region55: #{tpu_custom_call.1} parent=51 // pred_region
          %s481 = sand.u32 %s56, 1
          %s482 = scalar_lea.sflag [#allocation5], %s481
          %s483 = sand.u32 %s56, 1
          %s484 = smul.addr %s483, 128
          %s485 = scalar_lea.vmem [#allocation4], %s484
          %487 = vsyncadd %s482, 0
          %s488 = smul.addr %s41, 16
          %s489 = smul.addr %s488, 8
          %s490 = scalar_lea.hbm %s0, %s489
          %s491 = sshll.u32 %s490, 4
          %s492 = int_to_ptr.hbm [resolvable:$true] %s491
          %s493 = sshll.u32 %s485, 4
          %s494 = int_to_ptr.vmem [resolvable:$true] %s493
          %499 = dma.hbm_to_vmem [thread:$0]  %s492, 2048, %s494, %s482, 256, 256, 16
        $region56: #{tpu_custom_call.1} parent=51 // pred_fallthru
          _
        // Predicated region
        $region57: #{tpu_custom_call.1} parent=51 // pred_check
          %p500 = pneg %p134
        $region58: #{tpu_custom_call.1} parent=51 // pred_check_branch
          %502 = sbr.rel (%p500) target = $region60
        $region59: #{tpu_custom_call.1} parent=51 // pred_region
          %s503 = sand.u32 %s34, 1
          %s504 = scalar_lea.sflag [#allocation11], %s503
          %s505 = sand.u32 %s124, 1
          %s506 = smul.addr %s505, 384
          %s507 = scalar_lea.vmem [#allocation10], %s506
          %509 = vsyncadd %s504, 0
          %s510 = smul.addr %s42, 96
          %s511 = smul.addr %s510, 4
          %s512 = scalar_lea.hbm %s3, %s511
          %s513 = sshll.u32 %s512, 4
          %s514 = int_to_ptr.hbm [resolvable:$true] %s513
          %s515 = sshll.u32 %s507, 4
          %s516 = int_to_ptr.vmem [resolvable:$true] %s515
          %521 = dma.hbm_to_vmem [thread:$0]  %s514, 6144, %s516, %s504, 192, 192, 12
        $region60: #{tpu_custom_call.1} parent=51 // pred_fallthru
          _
        // Predicated region
        $region61: #{tpu_custom_call.1} parent=51 // pred_check
          %p522 = pneg %p160
        $region62: #{tpu_custom_call.1} parent=51 // pred_check_branch
          %524 = sbr.rel (%p522) target = $region64
        $region63: #{tpu_custom_call.1} parent=51 // pred_region
          %s525 = sand.u32 %s34, 1
          %s526 = scalar_lea.sflag [#allocation11], %s525
          %s527 = sand.u32 %s150, 1
          %s528 = smul.addr %s527, 3
          %s529 = scalar_lea.vmem [#allocation12], %s528
          %531 = vsyncadd %s526, 0
          %s532 = smul.addr %s42, 3
          %s533 = scalar_lea.hbm %s4, %s532
          %s535 = sshll.u32 %s533, 4
          %s536 = int_to_ptr.hbm [resolvable:$true] %s535
          %s537 = sshll.u32 %s529, 4
          %s538 = int_to_ptr.vmem [resolvable:$true] %s537
          %540 = dma.hbm_to_vmem [thread:$0]  %s536, 48, %s538, %s526
        $region64: #{tpu_custom_call.1} parent=51 // pred_fallthru
          _
        // Predicated region
        $region65: #{tpu_custom_call.1} parent=51 // pred_check
          %p541 = pneg %p186
        $region66: #{tpu_custom_call.1} parent=51 // pred_check_branch
          %543 = sbr.rel (%p541) target = $region68
        $region67: #{tpu_custom_call.1} parent=51 // pred_region
          %s544 = sand.u32 %s34, 1
          %s545 = scalar_lea.sflag [#allocation14], %s544
          %s546 = sand.u32 %s176, 1
          %s547 = smul.addr %s546, 128
          %s548 = scalar_lea.vmem [#allocation13], %s547
          %550 = vsyncadd %s545, 0
          %s551 = smul.addr %s42, 32
          %s552 = smul.addr %s551, 4
          %s553 = scalar_lea.hbm %s5, %s552
          %s554 = sshll.u32 %s553, 4
          %s555 = int_to_ptr.hbm [resolvable:$true] %s554
          %s556 = sshll.u32 %s548, 4
          %s557 = int_to_ptr.vmem [resolvable:$true] %s556
          %562 = dma.hbm_to_vmem [thread:$0]  %s555, 2048, %s557, %s545, 128, 128, 8
        $region68: #{tpu_custom_call.1} parent=51 // pred_fallthru
          _
      $region52: #{tpu_custom_call.1} parent=5 // pred_fallthru
        _
      %p563 = scmp.le.s32.totalorder 1, %s34
      %p564 = scmp.lt.s32.totalorder %s34, 5
      %p565 = pnand %p563, %p564
      %p566 = pneg %p565
      // Predicated region
      $region69: #{tpu_custom_call.1} parent=5 // pred_check
        _
      $region70: #{tpu_custom_call.1} parent=5 // pred_check_branch
        %568 = sbr.rel (%p565) target = $region72
      $region71: #{tpu_custom_call.1} parent=5 // pred_region
        %s569 = ssub.s32 %s34, 1
        %s570 = sand.u32 %s59, 1
        %s571 = scalar_lea.sflag [#allocation5], %s570
        %s572 = sand.u32 %s59, 1
        %s573 = smul.addr %s572, 128
        %s574 = scalar_lea.vmem [#allocation4], %s573
        // Predicated region
        $region73: #{tpu_custom_call.1} parent=71 // pred_check
          %p575 = pneg %p72
        $region74: #{tpu_custom_call.1} parent=71 // pred_check_branch
          %577 = sbr.rel (%p575) target = $region76
        $region75: #{tpu_custom_call.1} parent=71 // pred_region
          %579 = dma.done %s571, 2048
        $region76: #{tpu_custom_call.1} parent=71 // pred_fallthru
          _
        // Predicated region
        $region77: #{tpu_custom_call.1} parent=71 // pred_check
          %p580 = pneg %p93
        $region78: #{tpu_custom_call.1} parent=71 // pred_check_branch
          %582 = sbr.rel (%p580) target = $region80
        $region79: #{tpu_custom_call.1} parent=71 // pred_region
          %584 = dma.done [#allocation8], 32
        $region80: #{tpu_custom_call.1} parent=71 // pred_fallthru
          _
        // Predicated region
        $region81: #{tpu_custom_call.1} parent=71 // pred_check
          %p585 = pneg %p114
        $region82: #{tpu_custom_call.1} parent=71 // pred_check_branch
          %587 = sbr.rel (%p585) target = $region84
        $region83: #{tpu_custom_call.1} parent=71 // pred_region
          %589 = dma.done [#allocation8], 32
        $region84: #{tpu_custom_call.1} parent=71 // pred_fallthru
          _
        %s590 = sand.u32 %s39, 1
        %s591 = scalar_lea.sflag [#allocation11], %s590
        %s592 = sand.u32 %s127, 1
        %s593 = smul.addr %s592, 384
        %s594 = scalar_lea.vmem [#allocation10], %s593
        // Predicated region
        $region85: #{tpu_custom_call.1} parent=71 // pred_check
          %p595 = pneg %p140
        $region86: #{tpu_custom_call.1} parent=71 // pred_check_branch
          %597 = sbr.rel (%p595) target = $region88
        $region87: #{tpu_custom_call.1} parent=71 // pred_region
          %599 = dma.done %s591, 6144
        $region88: #{tpu_custom_call.1} parent=71 // pred_fallthru
          _
        %s600 = sand.u32 %s39, 1
        %s601 = scalar_lea.sflag [#allocation11], %s600
        %s602 = sand.u32 %s153, 1
        %s603 = smul.addr %s602, 3
        %s604 = scalar_lea.vmem [#allocation12], %s603
        // Predicated region
        $region89: #{tpu_custom_call.1} parent=71 // pred_check
          %p605 = pneg %p166
        $region90: #{tpu_custom_call.1} parent=71 // pred_check_branch
          %607 = sbr.rel (%p605) target = $region92
        $region91: #{tpu_custom_call.1} parent=71 // pred_region
          %609 = dma.done %s601, 48
        $region92: #{tpu_custom_call.1} parent=71 // pred_fallthru
          _
        %s610 = sand.u32 %s39, 1
        %s611 = scalar_lea.sflag [#allocation14], %s610
        %s612 = sand.u32 %s179, 1
        %s613 = smul.addr %s612, 128
        %s614 = scalar_lea.vmem [#allocation13], %s613
        // Predicated region
        $region93: #{tpu_custom_call.1} parent=71 // pred_check
          %p615 = pneg %p192
        $region94: #{tpu_custom_call.1} parent=71 // pred_check_branch
          %617 = sbr.rel (%p615) target = $region96
        $region95: #{tpu_custom_call.1} parent=71 // pred_region
          %619 = dma.done %s611, 2048
        $region96: #{tpu_custom_call.1} parent=71 // pred_fallthru
          _
        // Predicated region
        $region97: #{tpu_custom_call.1} parent=71 // pred_check
          %p620 = pneg %p213
        $region98: #{tpu_custom_call.1} parent=71 // pred_check_branch
          %622 = sbr.rel (%p620) target = $region100
        $region99: #{tpu_custom_call.1} parent=71 // pred_region
          %624 = dma.done [#allocation14], 32
        $region100: #{tpu_custom_call.1} parent=71 // pred_fallthru
          _
        // Predicated region
        $region101: #{tpu_custom_call.1} parent=71 // pred_check
          %p625 = pneg %p234
        $region102: #{tpu_custom_call.1} parent=71 // pred_check_branch
          %627 = sbr.rel (%p625) target = $region104
        $region103: #{tpu_custom_call.1} parent=71 // pred_region
          %629 = dma.done [#allocation17], 32
        $region104: #{tpu_custom_call.1} parent=71 // pred_fallthru
          _
        // Predicated region
        $region105: #{tpu_custom_call.1} parent=71 // pred_check
          %p630 = pneg %p255
        $region106: #{tpu_custom_call.1} parent=71 // pred_check_branch
          %632 = sbr.rel (%p630) target = $region108
        $region107: #{tpu_custom_call.1} parent=71 // pred_region
          %634 = dma.done [#allocation17], 32
        $region108: #{tpu_custom_call.1} parent=71 // pred_fallthru
          _
        // Predicated region
        $region109: #{tpu_custom_call.1} parent=71 // pred_check
          %p635 = pneg %p276
        $region110: #{tpu_custom_call.1} parent=71 // pred_check_branch
          %637 = sbr.rel (%p635) target = $region112
        $region111: #{tpu_custom_call.1} parent=71 // pred_region
          %639 = dma.done [#allocation20], 16384
        $region112: #{tpu_custom_call.1} parent=71 // pred_fallthru
          _
        // Predicated region
        $region113: #{tpu_custom_call.1} parent=71 // pred_check
          %p640 = pneg %p318
        $region114: #{tpu_custom_call.1} parent=71 // pred_check_branch
          %642 = sbr.rel (%p640) target = $region116
        $region115: #{tpu_custom_call.1} parent=71 // pred_region
          %644 = dma.done [#allocation20], 16384
        $region116: #{tpu_custom_call.1} parent=71 // pred_fallthru
          _
        %s645 = sand.u32 %s59, 1
        %s646 = scalar_lea.sflag [#allocation5], %s645
        %s647 = sand.u32 %s59, 1
        %s648 = smul.addr %s647, 128
        %s649 = scalar_lea.vmem [#allocation4], %s648
        %p650 = pneg %p72
        %p651 = pneg %p69
        %p652 = pneg %p93
        %p653 = pneg %p90
        %p654 = pneg %p114
        %p655 = pneg %p111
        %s656 = sand.u32 %s39, 1
        %s657 = scalar_lea.sflag [#allocation11], %s656
        %s658 = sand.u32 %s127, 1
        %s659 = smul.addr %s658, 384
        %s660 = scalar_lea.vmem [#allocation10], %s659
        %p661 = pneg %p140
        %p662 = pneg %p137
        %s663 = sand.u32 %s39, 1
        %s664 = scalar_lea.sflag [#allocation11], %s663
        %s665 = sand.u32 %s153, 1
        %s666 = smul.addr %s665, 3
        %s667 = scalar_lea.vmem [#allocation12], %s666
        %p668 = pneg %p166
        %p669 = pneg %p163
        %s670 = sand.u32 %s39, 1
        %s671 = scalar_lea.sflag [#allocation14], %s670
        %s672 = sand.u32 %s179, 1
        %s673 = smul.addr %s672, 128
        %s674 = scalar_lea.vmem [#allocation13], %s673
        %p675 = pneg %p192
        %p676 = pneg %p189
        %p677 = pneg %p213
        %p678 = pneg %p210
        %p679 = pneg %p234
        %p680 = pneg %p231
        %p681 = pneg %p255
        %p682 = pneg %p252
        %p683 = pneg %p276
        %p684 = pneg %p273
        %p685 = pneg %p297
        %p686 = pneg %p294
        %p687 = pneg %p318
        %p688 = pneg %p315
        %p689 = pneg %p339
        %p690 = pneg %p336
        %p691 = pneg %p365
        %p692 = pneg %p362
        %s693 = sand.u32 %s352, 1
        %s694 = scalar_lea.sflag [#allocation6], %s693
        %s695 = sand.u32 %s352, 1
        %s696 = smul.addr %s695, 128
        %s697 = scalar_lea.vmem [#allocation22], %s696
        %p699 = scmp.eq.s32.totalorder %s44, 0
        // Predicated region
        $region117: #{tpu_custom_call.1} parent=71 // pred_check
          %p700 = pneg %p699
        $region118: #{tpu_custom_call.1} parent=71 // pred_check_branch
          %702 = sbr.rel (%p700) target = $region120
        $region119: #{tpu_custom_call.1} parent=71 // pred_region
          %v703 = vld [vmem:[%s574] sm:$0xff]
          %v704 = vld [vmem:[%s574 + $0x8] sm:$0xff]
          %v705 = vld [vmem:[%s574 + $0x10] sm:$0xff]
          %v706 = vld [vmem:[%s574 + $0x18] sm:$0xff]
          %v707 = vld [vmem:[%s574 + $0x20] sm:$0xff]
          %v708 = vld [vmem:[%s574 + $0x28] sm:$0xff]
          %v709 = vld [vmem:[%s574 + $0x30] sm:$0xff]
          %v710 = vld [vmem:[%s574 + $0x38] sm:$0xff]
          %v711 = vld [vmem:[%s574 + $0x40] sm:$0xff]
          %v712 = vld [vmem:[%s574 + $0x48] sm:$0xff]
          %v713 = vld [vmem:[%s574 + $0x50] sm:$0xff]
          %v714 = vld [vmem:[%s574 + $0x58] sm:$0xff]
          %v715 = vld [vmem:[%s574 + $0x60] sm:$0xff]
          %v716 = vld [vmem:[%s574 + $0x68] sm:$0xff]
          %v717 = vld [vmem:[%s574 + $0x70] sm:$0xff]
          %v718 = vld [vmem:[%s574 + $0x78] sm:$0xff]
          %v719 = vld [vmem:[#allocation7] sm:$0x3]
          %v720 = vld [vmem:[#allocation9] sm:$0x3]
          %v721 = vadd.f32 %v703, %v704
          %722 = vadd.xlane.f32.xlu0 %v721
          %v723 = vpop.xlane.xlu0 %722
          %v724 = vadd.f32 %v705, %v706
          %725 = vadd.xlane.f32.xlu0 %v724
          %v726 = vpop.xlane.xlu0 %725
          %v727 = vadd.f32 %v707, %v708
          %728 = vadd.xlane.f32.xlu0 %v727
          %v729 = vpop.xlane.xlu0 %728
          %v730 = vadd.f32 %v709, %v710
          %731 = vadd.xlane.f32.xlu0 %v730
          %v732 = vpop.xlane.xlu0 %731
          %v733 = vadd.f32 %v711, %v712
          %734 = vadd.xlane.f32.xlu0 %v733
          %v735 = vpop.xlane.xlu0 %734
          %v736 = vadd.f32 %v713, %v714
          %737 = vadd.xlane.f32.xlu0 %v736
          %v738 = vpop.xlane.xlu0 %737
          %v739 = vadd.f32 %v715, %v716
          %740 = vadd.xlane.f32.xlu0 %v739
          %v741 = vpop.xlane.xlu0 %740
          %v742 = vadd.f32 %v717, %v718
          %743 = vadd.xlane.f32.xlu0 %v742
          %v744 = vpop.xlane.xlu0 %743
          %v745 = vrcp.pop 256.0
          %v746 = vmul.f32 256.0, %v745
          %v747 = vsub.f32 1.0, %v746
          %v748 = vmul.f32 %v745, %v747
          %v749 = vadd.f32 %v745, %v748
          %vm750 = vweird.f32 %v745
          %v751 = vsel %vm750, %v745, %v749
          %v752 = vmul.f32 %v723, %v751
          %v753 = vmul.f32 %v726, %v751
          %v754 = vmul.f32 %v729, %v751
          %v755 = vmul.f32 %v732, %v751
          %v756 = vmul.f32 %v735, %v751
          %v757 = vmul.f32 %v738, %v751
          %v758 = vmul.f32 %v741, %v751
          %v759 = vmul.f32 %v744, %v751
          %v760 = vsub.f32 %v703, %v752
          %v761 = vsub.f32 %v704, %v752
          %v762 = vsub.f32 %v705, %v753
          %v763 = vsub.f32 %v706, %v753
          %v764 = vsub.f32 %v707, %v754
          %v765 = vsub.f32 %v708, %v754
          %v766 = vsub.f32 %v709, %v755
          %v767 = vsub.f32 %v710, %v755
          %v768 = vsub.f32 %v711, %v756
          %v769 = vsub.f32 %v712, %v756
          %v770 = vsub.f32 %v713, %v757
          %v771 = vsub.f32 %v714, %v757
          %v772 = vsub.f32 %v715, %v758
          %v773 = vsub.f32 %v716, %v758
          %v774 = vsub.f32 %v717, %v759
          %v775 = vsub.f32 %v718, %v759
          %v776 = vmul.f32 %v760, %v760
          %v777 = vmul.f32 %v761, %v761
          %v778 = vmul.f32 %v762, %v762
          %v779 = vmul.f32 %v763, %v763
          %v780 = vmul.f32 %v764, %v764
          %v781 = vmul.f32 %v765, %v765
          %v782 = vmul.f32 %v766, %v766
          %v783 = vmul.f32 %v767, %v767
          %v784 = vmul.f32 %v768, %v768
          %v785 = vmul.f32 %v769, %v769
          %v786 = vmul.f32 %v770, %v770
          %v787 = vmul.f32 %v771, %v771
          %v788 = vmul.f32 %v772, %v772
          %v789 = vmul.f32 %v773, %v773
          %v790 = vmul.f32 %v774, %v774
          %v791 = vmul.f32 %v775, %v775
          %v792 = vadd.f32 %v776, %v777
          %793 = vadd.xlane.f32.xlu0 %v792
          %v794 = vpop.xlane.xlu0 %793
          %v795 = vadd.f32 %v778, %v779
          %796 = vadd.xlane.f32.xlu0 %v795
          %v797 = vpop.xlane.xlu0 %796
          %v798 = vadd.f32 %v780, %v781
          %799 = vadd.xlane.f32.xlu0 %v798
          %v800 = vpop.xlane.xlu0 %799
          %v801 = vadd.f32 %v782, %v783
          %802 = vadd.xlane.f32.xlu0 %v801
          %v803 = vpop.xlane.xlu0 %802
          %v804 = vadd.f32 %v784, %v785
          %805 = vadd.xlane.f32.xlu0 %v804
          %v806 = vpop.xlane.xlu0 %805
          %v807 = vadd.f32 %v786, %v787
          %808 = vadd.xlane.f32.xlu0 %v807
          %v809 = vpop.xlane.xlu0 %808
          %v810 = vadd.f32 %v788, %v789
          %811 = vadd.xlane.f32.xlu0 %v810
          %v812 = vpop.xlane.xlu0 %811
          %v813 = vadd.f32 %v790, %v791
          %814 = vadd.xlane.f32.xlu0 %v813
          %v815 = vpop.xlane.xlu0 %814
          %v816 = vmul.f32 %v794, %v751
          %v817 = vmul.f32 %v797, %v751
          %v818 = vmul.f32 %v800, %v751
          %v819 = vmul.f32 %v803, %v751
          %v820 = vmul.f32 %v806, %v751
          %v821 = vmul.f32 %v809, %v751
          %v822 = vmul.f32 %v812, %v751
          %v823 = vmul.f32 %v815, %v751
          %v824 = vadd.f32 %v816, 1e-05
          %v825 = vadd.f32 %v817, 1e-05
          %v826 = vadd.f32 %v818, 1e-05
          %v827 = vadd.f32 %v819, 1e-05
          %v828 = vadd.f32 %v820, 1e-05
          %v829 = vadd.f32 %v821, 1e-05
          %v830 = vadd.f32 %v822, 1e-05
          %v831 = vadd.f32 %v823, 1e-05
          %v832 = vrsqrt.pop %v824
          %v833 = vmul.f32 %v832, %v824
          %v834 = vmul.f32 %v833, %v832
          %v835 = vmul.f32 0.5, %v834
          %v836 = vsub.f32 1.5, %v835
          %v837 = vmul.f32 %v832, %v836
          %vm838 = vweird.f32 %v824
          %vm839 = vweird.f32 %v832
          %vm840 = vmor %vm838, %vm839
          %v841 = vsel %vm840, %v832, %v837
          %v842 = vrsqrt.pop %v825
          %v843 = vmul.f32 %v842, %v825
          %v844 = vmul.f32 %v843, %v842
          %v845 = vmul.f32 0.5, %v844
          %v846 = vsub.f32 1.5, %v845
          %v847 = vmul.f32 %v842, %v846
          %vm848 = vweird.f32 %v825
          %vm849 = vweird.f32 %v842
          %vm850 = vmor %vm848, %vm849
          %v851 = vsel %vm850, %v842, %v847
          %v852 = vrsqrt.pop %v826
          %v853 = vmul.f32 %v852, %v826
          %v854 = vmul.f32 %v853, %v852
          %v855 = vmul.f32 0.5, %v854
          %v856 = vsub.f32 1.5, %v855
          %v857 = vmul.f32 %v852, %v856
          %vm858 = vweird.f32 %v826
          %vm859 = vweird.f32 %v852
          %vm860 = vmor %vm858, %vm859
          %v861 = vsel %vm860, %v852, %v857
          %v862 = vrsqrt.pop %v827
          %v863 = vmul.f32 %v862, %v827
          %v864 = vmul.f32 %v863, %v862
          %v865 = vmul.f32 0.5, %v864
          %v866 = vsub.f32 1.5, %v865
          %v867 = vmul.f32 %v862, %v866
          %vm868 = vweird.f32 %v827
          %vm869 = vweird.f32 %v862
          %vm870 = vmor %vm868, %vm869
          %v871 = vsel %vm870, %v862, %v867
          %v872 = vrsqrt.pop %v828
          %v873 = vmul.f32 %v872, %v828
          %v874 = vmul.f32 %v873, %v872
          %v875 = vmul.f32 0.5, %v874
          %v876 = vsub.f32 1.5, %v875
          %v877 = vmul.f32 %v872, %v876
          %vm878 = vweird.f32 %v828
          %vm879 = vweird.f32 %v872
          %vm880 = vmor %vm878, %vm879
          %v881 = vsel %vm880, %v872, %v877
          %v882 = vrsqrt.pop %v829
          %v883 = vmul.f32 %v882, %v829
          %v884 = vmul.f32 %v883, %v882
          %v885 = vmul.f32 0.5, %v884
          %v886 = vsub.f32 1.5, %v885
          %v887 = vmul.f32 %v882, %v886
          %vm888 = vweird.f32 %v829
          %vm889 = vweird.f32 %v882
          %vm890 = vmor %vm888, %vm889
          %v891 = vsel %vm890, %v882, %v887
          %v892 = vrsqrt.pop %v830
          %v893 = vmul.f32 %v892, %v830
          %v894 = vmul.f32 %v893, %v892
          %v895 = vmul.f32 0.5, %v894
          %v896 = vsub.f32 1.5, %v895
          %v897 = vmul.f32 %v892, %v896
          %vm898 = vweird.f32 %v830
          %vm899 = vweird.f32 %v892
          %vm900 = vmor %vm898, %vm899
          %v901 = vsel %vm900, %v892, %v897
          %v902 = vrsqrt.pop %v831
          %v903 = vmul.f32 %v902, %v831
          %v904 = vmul.f32 %v903, %v902
          %v905 = vmul.f32 0.5, %v904
          %v906 = vsub.f32 1.5, %v905
          %v907 = vmul.f32 %v902, %v906
          %vm908 = vweird.f32 %v831
          %vm909 = vweird.f32 %v902
          %vm910 = vmor %vm908, %vm909
          %v911 = vsel %vm910, %v902, %v907
          %v912 = vmul.f32 %v760, %v841
          %v913 = vmul.f32 %v761, %v841
          %v914 = vmul.f32 %v762, %v851
          %v915 = vmul.f32 %v763, %v851
          %v916 = vmul.f32 %v764, %v861
          %v917 = vmul.f32 %v765, %v861
          %v918 = vmul.f32 %v766, %v871
          %v919 = vmul.f32 %v767, %v871
          %v920 = vmul.f32 %v768, %v881
          %v921 = vmul.f32 %v769, %v881
          %v922 = vmul.f32 %v770, %v891
          %v923 = vmul.f32 %v771, %v891
          %v924 = vmul.f32 %v772, %v901
          %v925 = vmul.f32 %v773, %v901
          %v926 = vmul.f32 %v774, %v911
          %v927 = vmul.f32 %v775, %v911
          %v929 = vperm.slane %v719, 0
          %v930 = vperm.slane %v719, 1
          %v933 = vmul.f32 %v912, %v929
          %v934 = vmul.f32 %v913, %v930
          %v935 = vmul.f32 %v914, %v929
          %v936 = vmul.f32 %v915, %v930
          %v937 = vmul.f32 %v916, %v929
          %v938 = vmul.f32 %v917, %v930
          %v939 = vmul.f32 %v918, %v929
          %v940 = vmul.f32 %v919, %v930
          %v941 = vmul.f32 %v920, %v929
          %v942 = vmul.f32 %v921, %v930
          %v943 = vmul.f32 %v922, %v929
          %v944 = vmul.f32 %v923, %v930
          %v945 = vmul.f32 %v924, %v929
          %v946 = vmul.f32 %v925, %v930
          %v947 = vmul.f32 %v926, %v929
          %v948 = vmul.f32 %v927, %v930
          %v950 = vperm.slane %v720, 0
          %v951 = vperm.slane %v720, 1
          %v954 = vadd.f32 %v933, %v950
          %v955 = vadd.f32 %v934, %v951
          %v956 = vadd.f32 %v935, %v950
          %v957 = vadd.f32 %v936, %v951
          %v958 = vadd.f32 %v937, %v950
          %v959 = vadd.f32 %v938, %v951
          %v960 = vadd.f32 %v939, %v950
          %v961 = vadd.f32 %v940, %v951
          %v962 = vadd.f32 %v941, %v950
          %v963 = vadd.f32 %v942, %v951
          %v964 = vadd.f32 %v943, %v950
          %v965 = vadd.f32 %v944, %v951
          %v966 = vadd.f32 %v945, %v950
          %v967 = vadd.f32 %v946, %v951
          %v968 = vadd.f32 %v947, %v950
          %v969 = vadd.f32 %v948, %v951
          %v970 = vpack.c.bf16 %v955, %v954
          %v971 = vpack.c.bf16 %v957, %v956
          %v972 = vpack.c.bf16 %v959, %v958
          %v973 = vpack.c.bf16 %v961, %v960
          %v974 = vpack.c.bf16 %v963, %v962
          %v975 = vpack.c.bf16 %v965, %v964
          %v976 = vpack.c.bf16 %v967, %v966
          %v977 = vpack.c.bf16 %v969, %v968
          %978 = vst [vmem:[#allocation2] sm:$0xff] %v970
          %979 = vst [vmem:[#allocation2 + $0x8] sm:$0xff] %v971
          %980 = vst [vmem:[#allocation2 + $0x10] sm:$0xff] %v972
          %981 = vst [vmem:[#allocation2 + $0x18] sm:$0xff] %v973
          %982 = vst [vmem:[#allocation2 + $0x20] sm:$0xff] %v974
          %983 = vst [vmem:[#allocation2 + $0x28] sm:$0xff] %v975
          %984 = vst [vmem:[#allocation2 + $0x30] sm:$0xff] %v976
          %985 = vst [vmem:[#allocation2 + $0x38] sm:$0xff] %v977
          %v986 = vld [vmem:[#allocation15] sm:$0x3]
          %v988 = vperm.slane %v986, 0
          %v989 = vperm.slane %v986, 1
          %v992 = vadd.f32 %v703, %v988
          %v993 = vadd.f32 %v704, %v989
          %v994 = vadd.f32 %v705, %v988
          %v995 = vadd.f32 %v706, %v989
          %v996 = vadd.f32 %v707, %v988
          %v997 = vadd.f32 %v708, %v989
          %v998 = vadd.f32 %v709, %v988
          %v999 = vadd.f32 %v710, %v989
          %v1000 = vadd.f32 %v711, %v988
          %v1001 = vadd.f32 %v712, %v989
          %v1002 = vadd.f32 %v713, %v988
          %v1003 = vadd.f32 %v714, %v989
          %v1004 = vadd.f32 %v715, %v988
          %v1005 = vadd.f32 %v716, %v989
          %v1006 = vadd.f32 %v717, %v988
          %v1007 = vadd.f32 %v718, %v989
          %1008 = vst [vmem:[#allocation3] sm:$0xff] %v992
          %1009 = vst [vmem:[#allocation3 + $0x8] sm:$0xff] %v993
          %1010 = vst [vmem:[#allocation3 + $0x10] sm:$0xff] %v994
          %1011 = vst [vmem:[#allocation3 + $0x18] sm:$0xff] %v995
          %1012 = vst [vmem:[#allocation3 + $0x20] sm:$0xff] %v996
          %1013 = vst [vmem:[#allocation3 + $0x28] sm:$0xff] %v997
          %1014 = vst [vmem:[#allocation3 + $0x30] sm:$0xff] %v998
          %1015 = vst [vmem:[#allocation3 + $0x38] sm:$0xff] %v999
          %1016 = vst [vmem:[#allocation3 + $0x40] sm:$0xff] %v1000
          %1017 = vst [vmem:[#allocation3 + $0x48] sm:$0xff] %v1001
          %1018 = vst [vmem:[#allocation3 + $0x50] sm:$0xff] %v1002
          %1019 = vst [vmem:[#allocation3 + $0x58] sm:$0xff] %v1003
          %1020 = vst [vmem:[#allocation3 + $0x60] sm:$0xff] %v1004
          %1021 = vst [vmem:[#allocation3 + $0x68] sm:$0xff] %v1005
          %1022 = vst [vmem:[#allocation3 + $0x70] sm:$0xff] %v1006
          %1023 = vst [vmem:[#allocation3 + $0x78] sm:$0xff] %v1007
        $region120: #{tpu_custom_call.1} parent=71 // pred_fallthru
          _
        %v1024 = vld [vmem:[#allocation2] sm:$0xff]
        %v1025 = vld [vmem:[#allocation2 + $0x8] sm:$0xff]
        %v1026 = vld [vmem:[#allocation2 + $0x10] sm:$0xff]
        %v1027 = vld [vmem:[#allocation2 + $0x18] sm:$0xff]
        %v1028 = vld [vmem:[#allocation2 + $0x20] sm:$0xff]
        %v1029 = vld [vmem:[#allocation2 + $0x28] sm:$0xff]
        %v1030 = vld [vmem:[#allocation2 + $0x30] sm:$0xff]
        %v1031 = vld [vmem:[#allocation2 + $0x38] sm:$0xff]
        %v1032 = vld [vmem:[%s594] sm:$0xff]
        %v1033 = vld [vmem:[%s594 + $0x8] sm:$0xf]
        %v1034 = vld [vmem:[%s594 + $0xc] sm:$0xff]
        %v1035 = vld [vmem:[%s594 + $0x14] sm:$0xf]
        %v1036 = vld [vmem:[%s594 + $0x18] sm:$0xff]
        %v1037 = vld [vmem:[%s594 + $0x20] sm:$0xf]
        %v1038 = vld [vmem:[%s594 + $0x24] sm:$0xff]
        %v1039 = vld [vmem:[%s594 + $0x2c] sm:$0xf]
        %v1040 = vld [vmem:[%s594 + $0x30] sm:$0xff]
        %v1041 = vld [vmem:[%s594 + $0x38] sm:$0xf]
        %v1042 = vld [vmem:[%s594 + $0x3c] sm:$0xff]
        %v1043 = vld [vmem:[%s594 + $0x44] sm:$0xf]
        %v1044 = vld [vmem:[%s594 + $0x48] sm:$0xff]
        %v1045 = vld [vmem:[%s594 + $0x50] sm:$0xf]
        %v1046 = vld [vmem:[%s594 + $0x54] sm:$0xff]
        %v1047 = vld [vmem:[%s594 + $0x5c] sm:$0xf]
        %v1048 = vld [vmem:[%s594 + $0x60] sm:$0xff]
        %v1049 = vld [vmem:[%s594 + $0x68] sm:$0xf]
        %v1050 = vld [vmem:[%s594 + $0x6c] sm:$0xff]
        %v1051 = vld [vmem:[%s594 + $0x74] sm:$0xf]
        %v1052 = vld [vmem:[%s594 + $0x78] sm:$0xff]
        %v1053 = vld [vmem:[%s594 + $0x80] sm:$0xf]
        %v1054 = vld [vmem:[%s594 + $0x84] sm:$0xff]
        %v1055 = vld [vmem:[%s594 + $0x8c] sm:$0xf]
        %v1056 = vld [vmem:[%s594 + $0x90] sm:$0xff]
        %v1057 = vld [vmem:[%s594 + $0x98] sm:$0xf]
        %v1058 = vld [vmem:[%s594 + $0x9c] sm:$0xff]
        %v1059 = vld [vmem:[%s594 + $0xa4] sm:$0xf]
        %v1060 = vld [vmem:[%s594 + $0xa8] sm:$0xff]
        %v1061 = vld [vmem:[%s594 + $0xb0] sm:$0xf]
        %v1062 = vld [vmem:[%s594 + $0xb4] sm:$0xff]
        %v1063 = vld [vmem:[%s594 + $0xbc] sm:$0xf]
        %v1064 = vld [vmem:[%s594 + $0xc0] sm:$0xff]
        %v1065 = vld [vmem:[%s594 + $0xc8] sm:$0xf]
        %v1066 = vld [vmem:[%s594 + $0xcc] sm:$0xff]
        %v1067 = vld [vmem:[%s594 + $0xd4] sm:$0xf]
        %v1068 = vld [vmem:[%s594 + $0xd8] sm:$0xff]
        %v1069 = vld [vmem:[%s594 + $0xe0] sm:$0xf]
        %v1070 = vld [vmem:[%s594 + $0xe4] sm:$0xff]
        %v1071 = vld [vmem:[%s594 + $0xec] sm:$0xf]
        %v1072 = vld [vmem:[%s594 + $0xf0] sm:$0xff]
        %v1073 = vld [vmem:[%s594 + $0xf8] sm:$0xf]
        %v1074 = vld [vmem:[%s594 + $0xfc] sm:$0xff]
        %v1075 = vld [vmem:[%s594 + $0x104] sm:$0xf]
        %v1076 = vld [vmem:[%s594 + $0x108] sm:$0xff]
        %v1077 = vld [vmem:[%s594 + $0x110] sm:$0xf]
        %v1078 = vld [vmem:[%s594 + $0x114] sm:$0xff]
        %v1079 = vld [vmem:[%s594 + $0x11c] sm:$0xf]
        %v1080 = vld [vmem:[%s594 + $0x120] sm:$0xff]
        %v1081 = vld [vmem:[%s594 + $0x128] sm:$0xf]
        %v1082 = vld [vmem:[%s594 + $0x12c] sm:$0xff]
        %v1083 = vld [vmem:[%s594 + $0x134] sm:$0xf]
        %v1084 = vld [vmem:[%s594 + $0x138] sm:$0xff]
        %v1085 = vld [vmem:[%s594 + $0x140] sm:$0xf]
        %v1086 = vld [vmem:[%s594 + $0x144] sm:$0xff]
        %v1087 = vld [vmem:[%s594 + $0x14c] sm:$0xf]
        %v1088 = vld [vmem:[%s594 + $0x150] sm:$0xff]
        %v1089 = vld [vmem:[%s594 + $0x158] sm:$0xf]
        %v1090 = vld [vmem:[%s594 + $0x15c] sm:$0xff]
        %v1091 = vld [vmem:[%s594 + $0x164] sm:$0xf]
        %v1092 = vld [vmem:[%s594 + $0x168] sm:$0xff]
        %v1093 = vld [vmem:[%s594 + $0x170] sm:$0xf]
        %v1094 = vld [vmem:[%s594 + $0x174] sm:$0xff]
        %v1095 = vld [vmem:[%s594 + $0x17c] sm:$0xf]
        %v1096 = vld [vmem:[%s604] sm:$0x7]
        %v1098 = vperm.slane %v1096, 0
        %v1099 = vperm.slane %v1096, 1
        %v1100 = vperm.slane %v1096, 2
        %v1112 = vunpack.c.l.b16 %v1024
        %v1113 = vunpack.c.h.b16 %v1024
        %v1114 = vunpack.c.l.b16 %v1025
        %v1115 = vunpack.c.h.b16 %v1025
        %v1116 = vunpack.c.l.b16 %v1026
        %v1117 = vunpack.c.h.b16 %v1026
        %v1118 = vunpack.c.l.b16 %v1027
        %v1119 = vunpack.c.h.b16 %v1027
        %v1120 = vunpack.c.l.b16 %v1028
        %v1121 = vunpack.c.h.b16 %v1028
        %v1122 = vunpack.c.l.b16 %v1029
        %v1123 = vunpack.c.h.b16 %v1029
        %v1124 = vunpack.c.l.b16 %v1030
        %v1125 = vunpack.c.h.b16 %v1030
        %v1126 = vunpack.c.l.b16 %v1031
        %v1127 = vunpack.c.h.b16 %v1031
        %v1128 = vpack.c.b16 %v1114, %v1112
        %v1129 = vpack.c.b16 %v1115, %v1113
        %v1130 = vpack.c.b16 %v1118, %v1116
        %v1131 = vpack.c.b16 %v1119, %v1117
        %v1132 = vpack.c.b16 %v1122, %v1120
        %v1133 = vpack.c.b16 %v1123, %v1121
        %v1134 = vpack.c.b16 %v1126, %v1124
        %v1135 = vpack.c.b16 %v1127, %v1125
        %v1208 = vunpack.c.l.b16 %v1032
        %v1209 = vunpack.c.h.b16 %v1032
        %v1210 = vunpack.c.l.b16 %v1033
        %v1211 = vunpack.c.l.b16 %v1034
        %v1212 = vunpack.c.h.b16 %v1034
        %v1213 = vunpack.c.l.b16 %v1035
        %v1214 = vunpack.c.l.b16 %v1036
        %v1215 = vunpack.c.h.b16 %v1036
        %v1216 = vunpack.c.l.b16 %v1037
        %v1217 = vunpack.c.l.b16 %v1038
        %v1218 = vunpack.c.h.b16 %v1038
        %v1219 = vunpack.c.l.b16 %v1039
        %v1220 = vunpack.c.l.b16 %v1040
        %v1221 = vunpack.c.h.b16 %v1040
        %v1222 = vunpack.c.l.b16 %v1041
        %v1223 = vunpack.c.l.b16 %v1042
        %v1224 = vunpack.c.h.b16 %v1042
        %v1225 = vunpack.c.l.b16 %v1043
        %v1226 = vunpack.c.l.b16 %v1044
        %v1227 = vunpack.c.h.b16 %v1044
        %v1228 = vunpack.c.l.b16 %v1045
        %v1229 = vunpack.c.l.b16 %v1046
        %v1230 = vunpack.c.h.b16 %v1046
        %v1231 = vunpack.c.l.b16 %v1047
        %v1232 = vunpack.c.l.b16 %v1048
        %v1233 = vunpack.c.h.b16 %v1048
        %v1234 = vunpack.c.l.b16 %v1049
        %v1235 = vunpack.c.l.b16 %v1050
        %v1236 = vunpack.c.h.b16 %v1050
        %v1237 = vunpack.c.l.b16 %v1051
        %v1238 = vunpack.c.l.b16 %v1052
        %v1239 = vunpack.c.h.b16 %v1052
        %v1240 = vunpack.c.l.b16 %v1053
        %v1241 = vunpack.c.l.b16 %v1054
        %v1242 = vunpack.c.h.b16 %v1054
        %v1243 = vunpack.c.l.b16 %v1055
        %v1244 = vunpack.c.l.b16 %v1056
        %v1245 = vunpack.c.h.b16 %v1056
        %v1246 = vunpack.c.l.b16 %v1057
        %v1247 = vunpack.c.l.b16 %v1058
        %v1248 = vunpack.c.h.b16 %v1058
        %v1249 = vunpack.c.l.b16 %v1059
        %v1250 = vunpack.c.l.b16 %v1060
        %v1251 = vunpack.c.h.b16 %v1060
        %v1252 = vunpack.c.l.b16 %v1061
        %v1253 = vunpack.c.l.b16 %v1062
        %v1254 = vunpack.c.h.b16 %v1062
        %v1255 = vunpack.c.l.b16 %v1063
        %v1256 = vunpack.c.l.b16 %v1064
        %v1257 = vunpack.c.h.b16 %v1064
        %v1258 = vunpack.c.l.b16 %v1065
        %v1259 = vunpack.c.l.b16 %v1066
        %v1260 = vunpack.c.h.b16 %v1066
        %v1261 = vunpack.c.l.b16 %v1067
        %v1262 = vunpack.c.l.b16 %v1068
        %v1263 = vunpack.c.h.b16 %v1068
        %v1264 = vunpack.c.l.b16 %v1069
        %v1265 = vunpack.c.l.b16 %v1070
        %v1266 = vunpack.c.h.b16 %v1070
        %v1267 = vunpack.c.l.b16 %v1071
        %v1268 = vunpack.c.l.b16 %v1072
        %v1269 = vunpack.c.h.b16 %v1072
        %v1270 = vunpack.c.l.b16 %v1073
        %v1271 = vunpack.c.l.b16 %v1074
        %v1272 = vunpack.c.h.b16 %v1074
        %v1273 = vunpack.c.l.b16 %v1075
        %v1274 = vunpack.c.l.b16 %v1076
        %v1275 = vunpack.c.h.b16 %v1076
        %v1276 = vunpack.c.l.b16 %v1077
        %v1277 = vunpack.c.l.b16 %v1078
        %v1278 = vunpack.c.h.b16 %v1078
        %v1279 = vunpack.c.l.b16 %v1079
        %v1280 = vunpack.c.l.b16 %v1080
        %v1281 = vunpack.c.h.b16 %v1080
        %v1282 = vunpack.c.l.b16 %v1081
        %v1283 = vunpack.c.l.b16 %v1082
        %v1284 = vunpack.c.h.b16 %v1082
        %v1285 = vunpack.c.l.b16 %v1083
        %v1286 = vunpack.c.l.b16 %v1084
        %v1287 = vunpack.c.h.b16 %v1084
        %v1288 = vunpack.c.l.b16 %v1085
        %v1289 = vunpack.c.l.b16 %v1086
        %v1290 = vunpack.c.h.b16 %v1086
        %v1291 = vunpack.c.l.b16 %v1087
        %v1292 = vunpack.c.l.b16 %v1088
        %v1293 = vunpack.c.h.b16 %v1088
        %v1294 = vunpack.c.l.b16 %v1089
        %v1295 = vunpack.c.l.b16 %v1090
        %v1296 = vunpack.c.h.b16 %v1090
        %v1297 = vunpack.c.l.b16 %v1091
        %v1298 = vunpack.c.l.b16 %v1092
        %v1299 = vunpack.c.h.b16 %v1092
        %v1300 = vunpack.c.l.b16 %v1093
        %v1301 = vunpack.c.l.b16 %v1094
        %v1302 = vunpack.c.h.b16 %v1094
        %v1303 = vunpack.c.l.b16 %v1095
        %v1304 = vpack.c.b16 %v1211, %v1208
        %v1305 = vpack.c.b16 %v1212, %v1209
        %v1306 = vpack.c.b16 %v1213, %v1210
        %v1307 = vpack.c.b16 %v1217, %v1214
        %v1308 = vpack.c.b16 %v1218, %v1215
        %v1309 = vpack.c.b16 %v1219, %v1216
        %v1310 = vpack.c.b16 %v1223, %v1220
        %v1311 = vpack.c.b16 %v1224, %v1221
        %v1312 = vpack.c.b16 %v1225, %v1222
        %v1313 = vpack.c.b16 %v1229, %v1226
        %v1314 = vpack.c.b16 %v1230, %v1227
        %v1315 = vpack.c.b16 %v1231, %v1228
        %v1316 = vpack.c.b16 %v1235, %v1232
        %v1317 = vpack.c.b16 %v1236, %v1233
        %v1318 = vpack.c.b16 %v1237, %v1234
        %v1319 = vpack.c.b16 %v1241, %v1238
        %v1320 = vpack.c.b16 %v1242, %v1239
        %v1321 = vpack.c.b16 %v1243, %v1240
        %v1322 = vpack.c.b16 %v1247, %v1244
        %v1323 = vpack.c.b16 %v1248, %v1245
        %v1324 = vpack.c.b16 %v1249, %v1246
        %v1325 = vpack.c.b16 %v1253, %v1250
        %v1326 = vpack.c.b16 %v1254, %v1251
        %v1327 = vpack.c.b16 %v1255, %v1252
        %v1328 = vpack.c.b16 %v1259, %v1256
        %v1329 = vpack.c.b16 %v1260, %v1257
        %v1330 = vpack.c.b16 %v1261, %v1258
        %v1331 = vpack.c.b16 %v1265, %v1262
        %v1332 = vpack.c.b16 %v1266, %v1263
        %v1333 = vpack.c.b16 %v1267, %v1264
        %v1334 = vpack.c.b16 %v1271, %v1268
        %v1335 = vpack.c.b16 %v1272, %v1269
        %v1336 = vpack.c.b16 %v1273, %v1270
        %v1337 = vpack.c.b16 %v1277, %v1274
        %v1338 = vpack.c.b16 %v1278, %v1275
        %v1339 = vpack.c.b16 %v1279, %v1276
        %v1340 = vpack.c.b16 %v1283, %v1280
        %v1341 = vpack.c.b16 %v1284, %v1281
        %v1342 = vpack.c.b16 %v1285, %v1282
        %v1343 = vpack.c.b16 %v1289, %v1286
        %v1344 = vpack.c.b16 %v1290, %v1287
        %v1345 = vpack.c.b16 %v1291, %v1288
        %v1346 = vpack.c.b16 %v1295, %v1292
        %v1347 = vpack.c.b16 %v1296, %v1293
        %v1348 = vpack.c.b16 %v1297, %v1294
        %v1349 = vpack.c.b16 %v1301, %v1298
        %v1350 = vpack.c.b16 %v1302, %v1299
        %v1351 = vpack.c.b16 %v1303, %v1300
        %1400 = vmatpush.bf16.msra.mxu0 %v1325
        %1401 = vmatpush.bf16.msra.mxu0 %v1322
        %1402 = vmatpush.bf16.msra.mxu0 %v1319
        %1403 = vmatpush.bf16.msra.mxu0 %v1316
        %1404 = vmatpush.bf16.msra.mxu0 %v1313
        %1405 = vmatpush.bf16.msra.mxu0 %v1310
        %1406 = vmatpush.bf16.msra.mxu0 %v1307
        %1407 = vmatpush.bf16.msra.mxu0 %v1304
        %1408 = vmatmul.bf16.gmra.mxu0 %v1128
        %v1409 = vpop.f32.mrf.mxu0
        %v1410 = vadd.f32 %v1098, %v1409
        %v1411 = vpop.f32.mrf.mxu0
        %v1412 = vadd.f32 %v1098, %v1411
        %1413 = vmatmul.bf16.gmra.mxu0 %v1130
        %v1414 = vpop.f32.mrf.mxu0
        %v1415 = vadd.f32 %v1098, %v1414
        %v1416 = vpop.f32.mrf.mxu0
        %v1417 = vadd.f32 %v1098, %v1416
        %1418 = vmatmul.bf16.gmra.mxu0 %v1132
        %v1419 = vpop.f32.mrf.mxu0
        %v1420 = vadd.f32 %v1098, %v1419
        %v1421 = vpop.f32.mrf.mxu0
        %v1422 = vadd.f32 %v1098, %v1421
        %1423 = vmatmul.bf16.gmra.mxu0 %v1134
        %v1424 = vpop.f32.mrf.mxu0
        %v1425 = vadd.f32 %v1098, %v1424
        %v1426 = vpop.f32.mrf.mxu0
        %v1427 = vadd.f32 %v1098, %v1426
        %1428 = vdwg.mxu0
        %1429 = vmatpush.bf16.msra.mxu0 %v1349
        %1430 = vmatpush.bf16.msra.mxu0 %v1346
        %1431 = vmatpush.bf16.msra.mxu0 %v1343
        %1432 = vmatpush.bf16.msra.mxu0 %v1340
        %1433 = vmatpush.bf16.msra.mxu0 %v1337
        %1434 = vmatpush.bf16.msra.mxu0 %v1334
        %1435 = vmatpush.bf16.msra.mxu0 %v1331
        %1436 = vmatpush.bf16.msra.mxu0 %v1328
        %1437 = vmatmul.bf16.gmra.mxu0 %v1129
        %v1438 = vpop.f32.mrf.mxu0
        %v1439 = vadd.f32 %v1410, %v1438
        %v1440 = vpop.f32.mrf.mxu0
        %v1441 = vadd.f32 %v1412, %v1440
        %1442 = vmatmul.bf16.gmra.mxu0 %v1131
        %v1443 = vpop.f32.mrf.mxu0
        %v1444 = vadd.f32 %v1415, %v1443
        %v1445 = vpop.f32.mrf.mxu0
        %v1446 = vadd.f32 %v1417, %v1445
        %1447 = vmatmul.bf16.gmra.mxu0 %v1133
        %v1448 = vpop.f32.mrf.mxu0
        %v1449 = vadd.f32 %v1420, %v1448
        %v1450 = vpop.f32.mrf.mxu0
        %v1451 = vadd.f32 %v1422, %v1450
        %1452 = vmatmul.bf16.gmra.mxu0 %v1135
        %v1453 = vpop.f32.mrf.mxu0
        %v1454 = vadd.f32 %v1425, %v1453
        %v1455 = vpop.f32.mrf.mxu0
        %v1456 = vadd.f32 %v1427, %v1455
        %1457 = vdwg.mxu0
        %1458 = vmatpush.bf16.msra.mxu0 %v1326
        %1459 = vmatpush.bf16.msra.mxu0 %v1323
        %1460 = vmatpush.bf16.msra.mxu0 %v1320
        %1461 = vmatpush.bf16.msra.mxu0 %v1317
        %1462 = vmatpush.bf16.msra.mxu0 %v1314
        %1463 = vmatpush.bf16.msra.mxu0 %v1311
        %1464 = vmatpush.bf16.msra.mxu0 %v1308
        %1465 = vmatpush.bf16.msra.mxu0 %v1305
        %1466 = vmatmul.bf16.gmra.mxu0 %v1128
        %v1467 = vpop.f32.mrf.mxu0
        %v1468 = vadd.f32 %v1099, %v1467
        %v1469 = vpop.f32.mrf.mxu0
        %v1470 = vadd.f32 %v1099, %v1469
        %1471 = vmatmul.bf16.gmra.mxu0 %v1130
        %v1472 = vpop.f32.mrf.mxu0
        %v1473 = vadd.f32 %v1099, %v1472
        %v1474 = vpop.f32.mrf.mxu0
        %v1475 = vadd.f32 %v1099, %v1474
        %1476 = vmatmul.bf16.gmra.mxu0 %v1132
        %v1477 = vpop.f32.mrf.mxu0
        %v1478 = vadd.f32 %v1099, %v1477
        %v1479 = vpop.f32.mrf.mxu0
        %v1480 = vadd.f32 %v1099, %v1479
        %1481 = vmatmul.bf16.gmra.mxu0 %v1134
        %v1482 = vpop.f32.mrf.mxu0
        %v1483 = vadd.f32 %v1099, %v1482
        %v1484 = vpop.f32.mrf.mxu0
        %v1485 = vadd.f32 %v1099, %v1484
        %1486 = vdwg.mxu0
        %1487 = vmatpush.bf16.msra.mxu0 %v1350
        %1488 = vmatpush.bf16.msra.mxu0 %v1347
        %1489 = vmatpush.bf16.msra.mxu0 %v1344
        %1490 = vmatpush.bf16.msra.mxu0 %v1341
        %1491 = vmatpush.bf16.msra.mxu0 %v1338
        %1492 = vmatpush.bf16.msra.mxu0 %v1335
        %1493 = vmatpush.bf16.msra.mxu0 %v1332
        %1494 = vmatpush.bf16.msra.mxu0 %v1329
        %1495 = vmatmul.bf16.gmra.mxu0 %v1129
        %v1496 = vpop.f32.mrf.mxu0
        %v1497 = vadd.f32 %v1468, %v1496
        %v1498 = vpop.f32.mrf.mxu0
        %v1499 = vadd.f32 %v1470, %v1498
        %1500 = vmatmul.bf16.gmra.mxu0 %v1131
        %v1501 = vpop.f32.mrf.mxu0
        %v1502 = vadd.f32 %v1473, %v1501
        %v1503 = vpop.f32.mrf.mxu0
        %v1504 = vadd.f32 %v1475, %v1503
        %1505 = vmatmul.bf16.gmra.mxu0 %v1133
        %v1506 = vpop.f32.mrf.mxu0
        %v1507 = vadd.f32 %v1478, %v1506
        %v1508 = vpop.f32.mrf.mxu0
        %v1509 = vadd.f32 %v1480, %v1508
        %1510 = vmatmul.bf16.gmra.mxu0 %v1135
        %v1511 = vpop.f32.mrf.mxu0
        %v1512 = vadd.f32 %v1483, %v1511
        %v1513 = vpop.f32.mrf.mxu0
        %v1514 = vadd.f32 %v1485, %v1513
        %1515 = vdwg.mxu0
        %1516 = vmatpush.bf16.msra.mxu0 %v1327
        %1517 = vmatpush.bf16.msra.mxu0 %v1324
        %1518 = vmatpush.bf16.msra.mxu0 %v1321
        %1519 = vmatpush.bf16.msra.mxu0 %v1318
        %1520 = vmatpush.bf16.msra.mxu0 %v1315
        %1521 = vmatpush.bf16.msra.mxu0 %v1312
        %1522 = vmatpush.bf16.msra.mxu0 %v1309
        %1523 = vmatpush.bf16.msra.mxu0 %v1306
        %1524 = vmatmul.bf16.gmra.mxu0 %v1128
        %v1525 = vpop.f32.mrf.mxu0
        %v1526 = vadd.f32 %v1100, %v1525
        %v1527 = vpop.f32.mrf.mxu0
        %v1528 = vadd.f32 %v1100, %v1527
        %1529 = vmatmul.bf16.gmra.mxu0 %v1130
        %v1530 = vpop.f32.mrf.mxu0
        %v1531 = vadd.f32 %v1100, %v1530
        %v1532 = vpop.f32.mrf.mxu0
        %v1533 = vadd.f32 %v1100, %v1532
        %1534 = vmatmul.bf16.gmra.mxu0 %v1132
        %v1535 = vpop.f32.mrf.mxu0
        %v1536 = vadd.f32 %v1100, %v1535
        %v1537 = vpop.f32.mrf.mxu0
        %v1538 = vadd.f32 %v1100, %v1537
        %1539 = vmatmul.bf16.gmra.mxu0 %v1134
        %v1540 = vpop.f32.mrf.mxu0
        %v1541 = vadd.f32 %v1100, %v1540
        %v1542 = vpop.f32.mrf.mxu0
        %v1543 = vadd.f32 %v1100, %v1542
        %1544 = vdwg.mxu0
        %1545 = vmatpush.bf16.msra.mxu0 %v1351
        %1546 = vmatpush.bf16.msra.mxu0 %v1348
        %1547 = vmatpush.bf16.msra.mxu0 %v1345
        %1548 = vmatpush.bf16.msra.mxu0 %v1342
        %1549 = vmatpush.bf16.msra.mxu0 %v1339
        %1550 = vmatpush.bf16.msra.mxu0 %v1336
        %1551 = vmatpush.bf16.msra.mxu0 %v1333
        %1552 = vmatpush.bf16.msra.mxu0 %v1330
        %1553 = vmatmul.bf16.gmra.mxu0 %v1129
        %v1554 = vpop.f32.mrf.mxu0
        %v1555 = vadd.f32 %v1526, %v1554
        %v1556 = vpop.f32.mrf.mxu0
        %v1557 = vadd.f32 %v1528, %v1556
        %1558 = vmatmul.bf16.gmra.mxu0 %v1131
        %v1559 = vpop.f32.mrf.mxu0
        %v1560 = vadd.f32 %v1531, %v1559
        %v1561 = vpop.f32.mrf.mxu0
        %v1562 = vadd.f32 %v1533, %v1561
        %1563 = vmatmul.bf16.gmra.mxu0 %v1133
        %v1564 = vpop.f32.mrf.mxu0
        %v1565 = vadd.f32 %v1536, %v1564
        %v1566 = vpop.f32.mrf.mxu0
        %v1567 = vadd.f32 %v1538, %v1566
        %1568 = vmatmul.bf16.gmra.mxu0 %v1135
        %v1569 = vpop.f32.mrf.mxu0
        %v1570 = vadd.f32 %v1541, %v1569
        %v1571 = vpop.f32.mrf.mxu0
        %v1572 = vadd.f32 %v1543, %v1571
        %1573 = vdwg.mxu0
        %v1574 = vpack.c.bf16 %v1441, %v1439
        %v1575 = vpack.c.bf16 %v1446, %v1444
        %v1576 = vpack.c.bf16 %v1451, %v1449
        %v1577 = vpack.c.bf16 %v1456, %v1454
        %v1578 = vpack.c.bf16 %v1499, %v1497
        %v1579 = vpack.c.bf16 %v1504, %v1502
        %v1580 = vpack.c.bf16 %v1509, %v1507
        %v1581 = vpack.c.bf16 %v1514, %v1512
        %v1582 = vpack.c.bf16 %v1557, %v1555
        %v1583 = vpack.c.bf16 %v1562, %v1560
        %v1584 = vpack.c.bf16 %v1567, %v1565
        %v1585 = vpack.c.bf16 %v1572, %v1570
        %vm1586 = vcmask 523264
        %v1588 = vsel %vm1586, %v1574, 0
        %v1591 = vsel %vm1586, %v1575, 0
        %v1594 = vsel %vm1586, %v1576, 0
        %v1597 = vsel %vm1586, %v1577, 0
        %v1600 = vsel %vm1586, %v1578, 0
        %v1603 = vsel %vm1586, %v1579, 0
        %v1606 = vsel %vm1586, %v1580, 0
        %v1609 = vsel %vm1586, %v1581, 0
        %1611 = vmatpush.bf16.xpose.msra.mxu0 0
        %1612 = vmatpush.bf16.xpose.msra.mxu0 0
        %1613 = vmatpush.bf16.xpose.msra.mxu0 0
        %1614 = vmatpush.bf16.xpose.msra.mxu0 0
        %1615 = vmatpush.bf16.xpose.msra.mxu0 %v1609
        %1616 = vmatpush.bf16.xpose.msra.mxu0 %v1606
        %1617 = vmatpush.bf16.xpose.msra.mxu0 %v1603
        %1618 = vmatpush.bf16.xpose.msra.mxu0 %v1600
        %1619 = vmatmul.bf16.gmra.mxu0 %v1588
        %v1620 = vpop.f32.mrf.mxu0
        %v1621 = vadd.f32 0.0, %v1620
        %v1622 = vpop.f32.mrf.mxu0
        %v1623 = vadd.f32 0.0, %v1622
        %1624 = vmatmul.bf16.gmra.mxu0 %v1591
        %v1625 = vpop.f32.mrf.mxu0
        %v1626 = vadd.f32 0.0, %v1625
        %v1627 = vpop.f32.mrf.mxu0
        %v1628 = vadd.f32 0.0, %v1627
        %1629 = vmatmul.bf16.gmra.mxu0 %v1594
        %v1630 = vpop.f32.mrf.mxu0
        %v1631 = vadd.f32 0.0, %v1630
        %v1632 = vpop.f32.mrf.mxu0
        %v1633 = vadd.f32 0.0, %v1632
        %1634 = vmatmul.bf16.gmra.mxu0 %v1597
        %v1635 = vpop.f32.mrf.mxu0
        %v1636 = vadd.f32 0.0, %v1635
        %v1637 = vpop.f32.mrf.mxu0
        %v1638 = vadd.f32 0.0, %v1637
        %1639 = vdwg.mxu0
        %v1640 = vsel %vm1586, %v1621, -inf
        %1641 = vmax.xlane.f32.xlu0 %v1640
        %v1642 = vpop.xlane.xlu0 %1641
        %v1643 = vsel %vm1586, %v1623, -inf
        %1644 = vmax.xlane.f32.xlu0 %v1643
        %v1645 = vpop.xlane.xlu0 %1644
        %v1646 = vsel %vm1586, %v1626, -inf
        %1647 = vmax.xlane.f32.xlu0 %v1646
        %v1648 = vpop.xlane.xlu0 %1647
        %v1649 = vsel %vm1586, %v1628, -inf
        %1650 = vmax.xlane.f32.xlu0 %v1649
        %v1651 = vpop.xlane.xlu0 %1650
        %v1652 = vsel %vm1586, %v1631, -inf
        %1653 = vmax.xlane.f32.xlu0 %v1652
        %v1654 = vpop.xlane.xlu0 %1653
        %v1655 = vsel %vm1586, %v1633, -inf
        %1656 = vmax.xlane.f32.xlu0 %v1655
        %v1657 = vpop.xlane.xlu0 %1656
        %v1658 = vsel %vm1586, %v1636, -inf
        %1659 = vmax.xlane.f32.xlu0 %v1658
        %v1660 = vpop.xlane.xlu0 %1659
        %v1661 = vsel %vm1586, %v1638, -inf
        %1662 = vmax.xlane.f32.xlu0 %v1661
        %v1663 = vpop.xlane.xlu0 %1662
        %v1664 = vsub.f32 %v1621, %v1642
        %v1665 = vsub.f32 %v1623, %v1645
        %v1666 = vsub.f32 %v1626, %v1648
        %v1667 = vsub.f32 %v1628, %v1651
        %v1668 = vsub.f32 %v1631, %v1654
        %v1669 = vsub.f32 %v1633, %v1657
        %v1670 = vsub.f32 %v1636, %v1660
        %v1671 = vsub.f32 %v1638, %v1663
        %v1672 = vmul.f32 %v1664, 1.442695
        %v1673 = vpow.pop %v1672
        %v1674 = vmul.f32 %v1665, 1.442695
        %v1675 = vpow.pop %v1674
        %v1676 = vmul.f32 %v1666, 1.442695
        %v1677 = vpow.pop %v1676
        %v1678 = vmul.f32 %v1667, 1.442695
        %v1679 = vpow.pop %v1678
        %v1680 = vmul.f32 %v1668, 1.442695
        %v1681 = vpow.pop %v1680
        %v1682 = vmul.f32 %v1669, 1.442695
        %v1683 = vpow.pop %v1682
        %v1684 = vmul.f32 %v1670, 1.442695
        %v1685 = vpow.pop %v1684
        %v1686 = vmul.f32 %v1671, 1.442695
        %v1687 = vpow.pop %v1686
        %v1688 = vsel %vm1586, %v1673, 0.0
        %1689 = vadd.xlane.f32.xlu0 %v1688
        %v1690 = vpop.xlane.xlu0 %1689
        %v1691 = vsel %vm1586, %v1675, 0.0
        %1692 = vadd.xlane.f32.xlu0 %v1691
        %v1693 = vpop.xlane.xlu0 %1692
        %v1694 = vsel %vm1586, %v1677, 0.0
        %1695 = vadd.xlane.f32.xlu0 %v1694
        %v1696 = vpop.xlane.xlu0 %1695
        %v1697 = vsel %vm1586, %v1679, 0.0
        %1698 = vadd.xlane.f32.xlu0 %v1697
        %v1699 = vpop.xlane.xlu0 %1698
        %v1700 = vsel %vm1586, %v1681, 0.0
        %1701 = vadd.xlane.f32.xlu0 %v1700
        %v1702 = vpop.xlane.xlu0 %1701
        %v1703 = vsel %vm1586, %v1683, 0.0
        %1704 = vadd.xlane.f32.xlu0 %v1703
        %v1705 = vpop.xlane.xlu0 %1704
        %v1706 = vsel %vm1586, %v1685, 0.0
        %1707 = vadd.xlane.f32.xlu0 %v1706
        %v1708 = vpop.xlane.xlu0 %1707
        %v1709 = vsel %vm1586, %v1687, 0.0
        %1710 = vadd.xlane.f32.xlu0 %v1709
        %v1711 = vpop.xlane.xlu0 %1710
        %v1712 = vrcp.pop %v1690
        %v1713 = vrcp.pop %v1693
        %v1714 = vrcp.pop %v1696
        %v1715 = vrcp.pop %v1699
        %v1716 = vrcp.pop %v1702
        %v1717 = vrcp.pop %v1705
        %v1718 = vrcp.pop %v1708
        %v1719 = vrcp.pop %v1711
        %v1720 = vmul.f32 %v1673, %v1712
        %v1721 = vmul.f32 %v1675, %v1713
        %v1722 = vmul.f32 %v1677, %v1714
        %v1723 = vmul.f32 %v1679, %v1715
        %v1724 = vmul.f32 %v1681, %v1716
        %v1725 = vmul.f32 %v1683, %v1717
        %v1726 = vmul.f32 %v1685, %v1718
        %v1727 = vmul.f32 %v1687, %v1719
        %v1728 = vpack.c.bf16 %v1721, %v1720
        %v1729 = vpack.c.bf16 %v1723, %v1722
        %v1730 = vpack.c.bf16 %v1725, %v1724
        %v1731 = vpack.c.bf16 %v1727, %v1726
        %v1733 = vsel %vm1586, %v1728, 0
        %v1736 = vsel %vm1586, %v1729, 0
        %v1739 = vsel %vm1586, %v1730, 0
        %v1742 = vsel %vm1586, %v1731, 0
        %1744 = vmatpush.bf16.msra.mxu0 0
        %1745 = vmatpush.bf16.msra.mxu0 0
        %1746 = vmatpush.bf16.msra.mxu0 0
        %1747 = vmatpush.bf16.msra.mxu0 0
        %1748 = vmatpush.bf16.msra.mxu0 %v1585
        %1749 = vmatpush.bf16.msra.mxu0 %v1584
        %1750 = vmatpush.bf16.msra.mxu0 %v1583
        %1751 = vmatpush.bf16.msra.mxu0 %v1582
        %1752 = vmatmul.bf16.gmra.mxu0 %v1733
        %v1753 = vpop.f32.mrf.mxu0
        %v1754 = vadd.f32 0.0, %v1753
        %v1755 = vpop.f32.mrf.mxu0
        %v1756 = vadd.f32 0.0, %v1755
        %1757 = vmatmul.bf16.gmra.mxu0 %v1736
        %v1758 = vpop.f32.mrf.mxu0
        %v1759 = vadd.f32 0.0, %v1758
        %v1760 = vpop.f32.mrf.mxu0
        %v1761 = vadd.f32 0.0, %v1760
        %1762 = vmatmul.bf16.gmra.mxu0 %v1739
        %v1763 = vpop.f32.mrf.mxu0
        %v1764 = vadd.f32 0.0, %v1763
        %v1765 = vpop.f32.mrf.mxu0
        %v1766 = vadd.f32 0.0, %v1765
        %1767 = vmatmul.bf16.gmra.mxu0 %v1742
        %v1768 = vpop.f32.mrf.mxu0
        %v1769 = vadd.f32 0.0, %v1768
        %v1770 = vpop.f32.mrf.mxu0
        %v1771 = vadd.f32 0.0, %v1770
        %1772 = vdwg.mxu0
        %1777 = vrot.lane.b32.xlu0 %v1574, 64
        %v1778 = vpop.permute.xlu0 %1777
        %1779 = vrot.lane.b32.xlu0 %v1575, 64
        %v1780 = vpop.permute.xlu0 %1779
        %1781 = vrot.lane.b32.xlu0 %v1576, 64
        %v1782 = vpop.permute.xlu0 %1781
        %1783 = vrot.lane.b32.xlu0 %v1577, 64
        %v1784 = vpop.permute.xlu0 %1783
        %1789 = vrot.lane.b32.xlu0 %v1578, 64
        %v1790 = vpop.permute.xlu0 %1789
        %1791 = vrot.lane.b32.xlu0 %v1579, 64
        %v1792 = vpop.permute.xlu0 %1791
        %1793 = vrot.lane.b32.xlu0 %v1580, 64
        %v1794 = vpop.permute.xlu0 %1793
        %1795 = vrot.lane.b32.xlu0 %v1581, 64
        %v1796 = vpop.permute.xlu0 %1795
        %v1798 = vsel %vm1586, %v1778, 0
        %v1801 = vsel %vm1586, %v1780, 0
        %v1804 = vsel %vm1586, %v1782, 0
        %v1807 = vsel %vm1586, %v1784, 0
        %v1810 = vsel %vm1586, %v1790, 0
        %v1813 = vsel %vm1586, %v1792, 0
        %v1816 = vsel %vm1586, %v1794, 0
        %v1819 = vsel %vm1586, %v1796, 0
        %1821 = vmatpush.bf16.xpose.msra.mxu0 0
        %1822 = vmatpush.bf16.xpose.msra.mxu0 0
        %1823 = vmatpush.bf16.xpose.msra.mxu0 0
        %1824 = vmatpush.bf16.xpose.msra.mxu0 0
        %1825 = vmatpush.bf16.xpose.msra.mxu0 %v1819
        %1826 = vmatpush.bf16.xpose.msra.mxu0 %v1816
        %1827 = vmatpush.bf16.xpose.msra.mxu0 %v1813
        %1828 = vmatpush.bf16.xpose.msra.mxu0 %v1810
        %1829 = vmatmul.bf16.gmra.mxu0 %v1798
        %v1830 = vpop.f32.mrf.mxu0
        %v1831 = vadd.f32 0.0, %v1830
        %v1832 = vpop.f32.mrf.mxu0
        %v1833 = vadd.f32 0.0, %v1832
        %1834 = vmatmul.bf16.gmra.mxu0 %v1801
        %v1835 = vpop.f32.mrf.mxu0
        %v1836 = vadd.f32 0.0, %v1835
        %v1837 = vpop.f32.mrf.mxu0
        %v1838 = vadd.f32 0.0, %v1837
        %1839 = vmatmul.bf16.gmra.mxu0 %v1804
        %v1840 = vpop.f32.mrf.mxu0
        %v1841 = vadd.f32 0.0, %v1840
        %v1842 = vpop.f32.mrf.mxu0
        %v1843 = vadd.f32 0.0, %v1842
        %1844 = vmatmul.bf16.gmra.mxu0 %v1807
        %v1845 = vpop.f32.mrf.mxu0
        %v1846 = vadd.f32 0.0, %v1845
        %v1847 = vpop.f32.mrf.mxu0
        %v1848 = vadd.f32 0.0, %v1847
        %1849 = vdwg.mxu0
        %v1850 = vsel %vm1586, %v1831, -inf
        %1851 = vmax.xlane.f32.xlu0 %v1850
        %v1852 = vpop.xlane.xlu0 %1851
        %v1853 = vsel %vm1586, %v1833, -inf
        %1854 = vmax.xlane.f32.xlu0 %v1853
        %v1855 = vpop.xlane.xlu0 %1854
        %v1856 = vsel %vm1586, %v1836, -inf
        %1857 = vmax.xlane.f32.xlu0 %v1856
        %v1858 = vpop.xlane.xlu0 %1857
        %v1859 = vsel %vm1586, %v1838, -inf
        %1860 = vmax.xlane.f32.xlu0 %v1859
        %v1861 = vpop.xlane.xlu0 %1860
        %v1862 = vsel %vm1586, %v1841, -inf
        %1863 = vmax.xlane.f32.xlu0 %v1862
        %v1864 = vpop.xlane.xlu0 %1863
        %v1865 = vsel %vm1586, %v1843, -inf
        %1866 = vmax.xlane.f32.xlu0 %v1865
        %v1867 = vpop.xlane.xlu0 %1866
        %v1868 = vsel %vm1586, %v1846, -inf
        %1869 = vmax.xlane.f32.xlu0 %v1868
        %v1870 = vpop.xlane.xlu0 %1869
        %v1871 = vsel %vm1586, %v1848, -inf
        %1872 = vmax.xlane.f32.xlu0 %v1871
        %v1873 = vpop.xlane.xlu0 %1872
        %v1874 = vsub.f32 %v1831, %v1852
        %v1875 = vsub.f32 %v1833, %v1855
        %v1876 = vsub.f32 %v1836, %v1858
        %v1877 = vsub.f32 %v1838, %v1861
        %v1878 = vsub.f32 %v1841, %v1864
        %v1879 = vsub.f32 %v1843, %v1867
        %v1880 = vsub.f32 %v1846, %v1870
        %v1881 = vsub.f32 %v1848, %v1873
        %v1882 = vmul.f32 %v1874, 1.442695
        %v1883 = vpow.pop %v1882
        %v1884 = vmul.f32 %v1875, 1.442695
        %v1885 = vpow.pop %v1884
        %v1886 = vmul.f32 %v1876, 1.442695
        %v1887 = vpow.pop %v1886
        %v1888 = vmul.f32 %v1877, 1.442695
        %v1889 = vpow.pop %v1888
        %v1890 = vmul.f32 %v1878, 1.442695
        %v1891 = vpow.pop %v1890
        %v1892 = vmul.f32 %v1879, 1.442695
        %v1893 = vpow.pop %v1892
        %v1894 = vmul.f32 %v1880, 1.442695
        %v1895 = vpow.pop %v1894
        %v1896 = vmul.f32 %v1881, 1.442695
        %v1897 = vpow.pop %v1896
        %v1898 = vsel %vm1586, %v1883, 0.0
        %1899 = vadd.xlane.f32.xlu0 %v1898
        %v1900 = vpop.xlane.xlu0 %1899
        %v1901 = vsel %vm1586, %v1885, 0.0
        %1902 = vadd.xlane.f32.xlu0 %v1901
        %v1903 = vpop.xlane.xlu0 %1902
        %v1904 = vsel %vm1586, %v1887, 0.0
        %1905 = vadd.xlane.f32.xlu0 %v1904
        %v1906 = vpop.xlane.xlu0 %1905
        %v1907 = vsel %vm1586, %v1889, 0.0
        %1908 = vadd.xlane.f32.xlu0 %v1907
        %v1909 = vpop.xlane.xlu0 %1908
        %v1910 = vsel %vm1586, %v1891, 0.0
        %1911 = vadd.xlane.f32.xlu0 %v1910
        %v1912 = vpop.xlane.xlu0 %1911
        %v1913 = vsel %vm1586, %v1893, 0.0
        %1914 = vadd.xlane.f32.xlu0 %v1913
        %v1915 = vpop.xlane.xlu0 %1914
        %v1916 = vsel %vm1586, %v1895, 0.0
        %1917 = vadd.xlane.f32.xlu0 %v1916
        %v1918 = vpop.xlane.xlu0 %1917
        %v1919 = vsel %vm1586, %v1897, 0.0
        %1920 = vadd.xlane.f32.xlu0 %v1919
        %v1921 = vpop.xlane.xlu0 %1920
        %v1922 = vrcp.pop %v1900
        %v1923 = vrcp.pop %v1903
        %v1924 = vrcp.pop %v1906
        %v1925 = vrcp.pop %v1909
        %v1926 = vrcp.pop %v1912
        %v1927 = vrcp.pop %v1915
        %v1928 = vrcp.pop %v1918
        %v1929 = vrcp.pop %v1921
        %v1930 = vmul.f32 %v1883, %v1922
        %v1931 = vmul.f32 %v1885, %v1923
        %v1932 = vmul.f32 %v1887, %v1924
        %v1933 = vmul.f32 %v1889, %v1925
        %v1934 = vmul.f32 %v1891, %v1926
        %v1935 = vmul.f32 %v1893, %v1927
        %v1936 = vmul.f32 %v1895, %v1928
        %v1937 = vmul.f32 %v1897, %v1929
        %v1938 = vpack.c.bf16 %v1931, %v1930
        %v1939 = vpack.c.bf16 %v1933, %v1932
        %v1940 = vpack.c.bf16 %v1935, %v1934
        %v1941 = vpack.c.bf16 %v1937, %v1936
        %1946 = vrot.lane.b32.xlu0 %v1582, 64
        %v1947 = vpop.permute.xlu0 %1946
        %1948 = vrot.lane.b32.xlu0 %v1583, 64
        %v1949 = vpop.permute.xlu0 %1948
        %1950 = vrot.lane.b32.xlu0 %v1584, 64
        %v1951 = vpop.permute.xlu0 %1950
        %1952 = vrot.lane.b32.xlu0 %v1585, 64
        %v1953 = vpop.permute.xlu0 %1952
        %v1959 = vsel %vm1586, %v1938, 0
        %v1962 = vsel %vm1586, %v1939, 0
        %v1965 = vsel %vm1586, %v1940, 0
        %v1968 = vsel %vm1586, %v1941, 0
        %1970 = vmatpush.bf16.msra.mxu0 0
        %1971 = vmatpush.bf16.msra.mxu0 0
        %1972 = vmatpush.bf16.msra.mxu0 0
        %1973 = vmatpush.bf16.msra.mxu0 0
        %1974 = vmatpush.bf16.msra.mxu0 %v1953
        %1975 = vmatpush.bf16.msra.mxu0 %v1951
        %1976 = vmatpush.bf16.msra.mxu0 %v1949
        %1977 = vmatpush.bf16.msra.mxu0 %v1947
        %1978 = vmatmul.bf16.gmra.mxu0 %v1959
        %v1979 = vpop.f32.mrf.mxu0
        %v1980 = vadd.f32 0.0, %v1979
        %v1981 = vpop.f32.mrf.mxu0
        %v1982 = vadd.f32 0.0, %v1981
        %1983 = vmatmul.bf16.gmra.mxu0 %v1962
        %v1984 = vpop.f32.mrf.mxu0
        %v1985 = vadd.f32 0.0, %v1984
        %v1986 = vpop.f32.mrf.mxu0
        %v1987 = vadd.f32 0.0, %v1986
        %1988 = vmatmul.bf16.gmra.mxu0 %v1965
        %v1989 = vpop.f32.mrf.mxu0
        %v1990 = vadd.f32 0.0, %v1989
        %v1991 = vpop.f32.mrf.mxu0
        %v1992 = vadd.f32 0.0, %v1991
        %1993 = vmatmul.bf16.gmra.mxu0 %v1968
        %v1994 = vpop.f32.mrf.mxu0
        %v1995 = vadd.f32 0.0, %v1994
        %v1996 = vpop.f32.mrf.mxu0
        %v1997 = vadd.f32 0.0, %v1996
        %1998 = vdwg.mxu0
        %2007 = vrot.lane.b32.xlu0 %v1980, 64
        %v2008 = vpop.permute.xlu0 %2007
        %2009 = vrot.lane.b32.xlu0 %v1982, 64
        %v2010 = vpop.permute.xlu0 %2009
        %2011 = vrot.lane.b32.xlu0 %v1985, 64
        %v2012 = vpop.permute.xlu0 %2011
        %2013 = vrot.lane.b32.xlu0 %v1987, 64
        %v2014 = vpop.permute.xlu0 %2013
        %2015 = vrot.lane.b32.xlu0 %v1990, 64
        %v2016 = vpop.permute.xlu0 %2015
        %2017 = vrot.lane.b32.xlu0 %v1992, 64
        %v2018 = vpop.permute.xlu0 %2017
        %2019 = vrot.lane.b32.xlu0 %v1995, 64
        %v2020 = vpop.permute.xlu0 %2019
        %2021 = vrot.lane.b32.xlu0 %v1997, 64
        %v2022 = vpop.permute.xlu0 %2021
        %v2031 = vsel %vm1586, %v1754, %v2008
        %v2032 = vsel %vm1586, %v1756, %v2010
        %v2033 = vsel %vm1586, %v1759, %v2012
        %v2034 = vsel %vm1586, %v1761, %v2014
        %v2035 = vsel %vm1586, %v1764, %v2016
        %v2036 = vsel %vm1586, %v1766, %v2018
        %v2037 = vsel %vm1586, %v1769, %v2020
        %v2038 = vsel %vm1586, %v1771, %v2022
        %v2039 = vpack.c.bf16 %v2032, %v2031
        %v2040 = vpack.c.bf16 %v2034, %v2033
        %v2041 = vpack.c.bf16 %v2036, %v2035
        %v2042 = vpack.c.bf16 %v2038, %v2037
        %v2043 = vld [vmem:[#allocation3] sm:$0xff]
        %v2044 = vld [vmem:[#allocation3 + $0x8] sm:$0xff]
        %v2045 = vld [vmem:[#allocation3 + $0x10] sm:$0xff]
        %v2046 = vld [vmem:[#allocation3 + $0x18] sm:$0xff]
        %v2047 = vld [vmem:[#allocation3 + $0x20] sm:$0xff]
        %v2048 = vld [vmem:[#allocation3 + $0x28] sm:$0xff]
        %v2049 = vld [vmem:[#allocation3 + $0x30] sm:$0xff]
        %v2050 = vld [vmem:[#allocation3 + $0x38] sm:$0xff]
        %v2051 = vld [vmem:[#allocation3 + $0x40] sm:$0xff]
        %v2052 = vld [vmem:[#allocation3 + $0x48] sm:$0xff]
        %v2053 = vld [vmem:[#allocation3 + $0x50] sm:$0xff]
        %v2054 = vld [vmem:[#allocation3 + $0x58] sm:$0xff]
        %v2055 = vld [vmem:[#allocation3 + $0x60] sm:$0xff]
        %v2056 = vld [vmem:[#allocation3 + $0x68] sm:$0xff]
        %v2057 = vld [vmem:[#allocation3 + $0x70] sm:$0xff]
        %v2058 = vld [vmem:[#allocation3 + $0x78] sm:$0xff]
        %v2059 = vld [vmem:[%s614] sm:$0xff]
        %v2060 = vld [vmem:[%s614 + $0x8] sm:$0xff]
        %v2061 = vld [vmem:[%s614 + $0x10] sm:$0xff]
        %v2062 = vld [vmem:[%s614 + $0x18] sm:$0xff]
        %v2063 = vld [vmem:[%s614 + $0x20] sm:$0xff]
        %v2064 = vld [vmem:[%s614 + $0x28] sm:$0xff]
        %v2065 = vld [vmem:[%s614 + $0x30] sm:$0xff]
        %v2066 = vld [vmem:[%s614 + $0x38] sm:$0xff]
        %v2067 = vld [vmem:[%s614 + $0x40] sm:$0xff]
        %v2068 = vld [vmem:[%s614 + $0x48] sm:$0xff]
        %v2069 = vld [vmem:[%s614 + $0x50] sm:$0xff]
        %v2070 = vld [vmem:[%s614 + $0x58] sm:$0xff]
        %v2071 = vld [vmem:[%s614 + $0x60] sm:$0xff]
        %v2072 = vld [vmem:[%s614 + $0x68] sm:$0xff]
        %v2073 = vld [vmem:[%s614 + $0x70] sm:$0xff]
        %v2074 = vld [vmem:[%s614 + $0x78] sm:$0xff]
        %v2091 = vunpack.c.l.b16 %v2059
        %v2092 = vunpack.c.h.b16 %v2059
        %v2093 = vunpack.c.l.b16 %v2060
        %v2094 = vunpack.c.h.b16 %v2060
        %v2095 = vunpack.c.l.b16 %v2061
        %v2096 = vunpack.c.h.b16 %v2061
        %v2097 = vunpack.c.l.b16 %v2062
        %v2098 = vunpack.c.h.b16 %v2062
        %v2099 = vunpack.c.l.b16 %v2063
        %v2100 = vunpack.c.h.b16 %v2063
        %v2101 = vunpack.c.l.b16 %v2064
        %v2102 = vunpack.c.h.b16 %v2064
        %v2103 = vunpack.c.l.b16 %v2065
        %v2104 = vunpack.c.h.b16 %v2065
        %v2105 = vunpack.c.l.b16 %v2066
        %v2106 = vunpack.c.h.b16 %v2066
        %v2107 = vunpack.c.l.b16 %v2067
        %v2108 = vunpack.c.h.b16 %v2067
        %v2109 = vunpack.c.l.b16 %v2068
        %v2110 = vunpack.c.h.b16 %v2068
        %v2111 = vunpack.c.l.b16 %v2069
        %v2112 = vunpack.c.h.b16 %v2069
        %v2113 = vunpack.c.l.b16 %v2070
        %v2114 = vunpack.c.h.b16 %v2070
        %v2115 = vunpack.c.l.b16 %v2071
        %v2116 = vunpack.c.h.b16 %v2071
        %v2117 = vunpack.c.l.b16 %v2072
        %v2118 = vunpack.c.h.b16 %v2072
        %v2119 = vunpack.c.l.b16 %v2073
        %v2120 = vunpack.c.h.b16 %v2073
        %v2121 = vunpack.c.l.b16 %v2074
        %v2122 = vunpack.c.h.b16 %v2074
        %v2123 = vpack.c.b16 %v2093, %v2091
        %v2124 = vpack.c.b16 %v2094, %v2092
        %v2125 = vpack.c.b16 %v2097, %v2095
        %v2126 = vpack.c.b16 %v2098, %v2096
        %v2127 = vpack.c.b16 %v2101, %v2099
        %v2128 = vpack.c.b16 %v2102, %v2100
        %v2129 = vpack.c.b16 %v2105, %v2103
        %v2130 = vpack.c.b16 %v2106, %v2104
        %v2131 = vpack.c.b16 %v2109, %v2107
        %v2132 = vpack.c.b16 %v2110, %v2108
        %v2133 = vpack.c.b16 %v2113, %v2111
        %v2134 = vpack.c.b16 %v2114, %v2112
        %v2135 = vpack.c.b16 %v2117, %v2115
        %v2136 = vpack.c.b16 %v2118, %v2116
        %v2137 = vpack.c.b16 %v2121, %v2119
        %v2138 = vpack.c.b16 %v2122, %v2120
        %2155 = vmatpush.bf16.msra.mxu0 %v2137
        %2156 = vmatpush.bf16.msra.mxu0 %v2135
        %2157 = vmatpush.bf16.msra.mxu0 %v2133
        %2158 = vmatpush.bf16.msra.mxu0 %v2131
        %2159 = vmatpush.bf16.msra.mxu0 %v2129
        %2160 = vmatpush.bf16.msra.mxu0 %v2127
        %2161 = vmatpush.bf16.msra.mxu0 %v2125
        %2162 = vmatpush.bf16.msra.mxu0 %v2123
        %2163 = vmatmul.bf16.gmra.mxu0 %v2039
        %v2164 = vpop.f32.mrf.mxu0
        %v2165 = vadd.f32 0.0, %v2164
        %v2166 = vpop.f32.mrf.mxu0
        %v2167 = vadd.f32 0.0, %v2166
        %2168 = vmatmul.bf16.gmra.mxu0 %v2040
        %v2169 = vpop.f32.mrf.mxu0
        %v2170 = vadd.f32 0.0, %v2169
        %v2171 = vpop.f32.mrf.mxu0
        %v2172 = vadd.f32 0.0, %v2171
        %2173 = vmatmul.bf16.gmra.mxu0 %v2041
        %v2174 = vpop.f32.mrf.mxu0
        %v2175 = vadd.f32 0.0, %v2174
        %v2176 = vpop.f32.mrf.mxu0
        %v2177 = vadd.f32 0.0, %v2176
        %2178 = vmatmul.bf16.gmra.mxu0 %v2042
        %v2179 = vpop.f32.mrf.mxu0
        %v2180 = vadd.f32 0.0, %v2179
        %v2181 = vpop.f32.mrf.mxu0
        %v2182 = vadd.f32 0.0, %v2181
        %2183 = vdwg.mxu0
        %2184 = vmatpush.bf16.msra.mxu0 %v2138
        %2185 = vmatpush.bf16.msra.mxu0 %v2136
        %2186 = vmatpush.bf16.msra.mxu0 %v2134
        %2187 = vmatpush.bf16.msra.mxu0 %v2132
        %2188 = vmatpush.bf16.msra.mxu0 %v2130
        %2189 = vmatpush.bf16.msra.mxu0 %v2128
        %2190 = vmatpush.bf16.msra.mxu0 %v2126
        %2191 = vmatpush.bf16.msra.mxu0 %v2124
        %2192 = vmatmul.bf16.gmra.mxu0 %v2039
        %v2193 = vpop.f32.mrf.mxu0
        %v2194 = vadd.f32 0.0, %v2193
        %v2195 = vpop.f32.mrf.mxu0
        %v2196 = vadd.f32 0.0, %v2195
        %2197 = vmatmul.bf16.gmra.mxu0 %v2040
        %v2198 = vpop.f32.mrf.mxu0
        %v2199 = vadd.f32 0.0, %v2198
        %v2200 = vpop.f32.mrf.mxu0
        %v2201 = vadd.f32 0.0, %v2200
        %2202 = vmatmul.bf16.gmra.mxu0 %v2041
        %v2203 = vpop.f32.mrf.mxu0
        %v2204 = vadd.f32 0.0, %v2203
        %v2205 = vpop.f32.mrf.mxu0
        %v2206 = vadd.f32 0.0, %v2205
        %2207 = vmatmul.bf16.gmra.mxu0 %v2042
        %v2208 = vpop.f32.mrf.mxu0
        %v2209 = vadd.f32 0.0, %v2208
        %v2210 = vpop.f32.mrf.mxu0
        %v2211 = vadd.f32 0.0, %v2210
        %2212 = vdwg.mxu0
        %v2213 = vadd.f32 %v2043, %v2165
        %v2214 = vadd.f32 %v2044, %v2194
        %v2215 = vadd.f32 %v2045, %v2167
        %v2216 = vadd.f32 %v2046, %v2196
        %v2217 = vadd.f32 %v2047, %v2170
        %v2218 = vadd.f32 %v2048, %v2199
        %v2219 = vadd.f32 %v2049, %v2172
        %v2220 = vadd.f32 %v2050, %v2201
        %v2221 = vadd.f32 %v2051, %v2175
        %v2222 = vadd.f32 %v2052, %v2204
        %v2223 = vadd.f32 %v2053, %v2177
        %v2224 = vadd.f32 %v2054, %v2206
        %v2225 = vadd.f32 %v2055, %v2180
        %v2226 = vadd.f32 %v2056, %v2209
        %v2227 = vadd.f32 %v2057, %v2182
        %v2228 = vadd.f32 %v2058, %v2211
        %2229 = vst [vmem:[#allocation3] sm:$0xff] %v2213
        %2230 = vst [vmem:[#allocation3 + $0x8] sm:$0xff] %v2214
        %2231 = vst [vmem:[#allocation3 + $0x10] sm:$0xff] %v2215
        %2232 = vst [vmem:[#allocation3 + $0x18] sm:$0xff] %v2216
        %2233 = vst [vmem:[#allocation3 + $0x20] sm:$0xff] %v2217
        %2234 = vst [vmem:[#allocation3 + $0x28] sm:$0xff] %v2218
        %2235 = vst [vmem:[#allocation3 + $0x30] sm:$0xff] %v2219
        %2236 = vst [vmem:[#allocation3 + $0x38] sm:$0xff] %v2220
        %2237 = vst [vmem:[#allocation3 + $0x40] sm:$0xff] %v2221
        %2238 = vst [vmem:[#allocation3 + $0x48] sm:$0xff] %v2222
        %2239 = vst [vmem:[#allocation3 + $0x50] sm:$0xff] %v2223
        %2240 = vst [vmem:[#allocation3 + $0x58] sm:$0xff] %v2224
        %2241 = vst [vmem:[#allocation3 + $0x60] sm:$0xff] %v2225
        %2242 = vst [vmem:[#allocation3 + $0x68] sm:$0xff] %v2226
        %2243 = vst [vmem:[#allocation3 + $0x70] sm:$0xff] %v2227
        %2244 = vst [vmem:[#allocation3 + $0x78] sm:$0xff] %v2228
        %p2245 = scmp.eq.s32.totalorder %s44, 1
        // Predicated region
        $region121: #{tpu_custom_call.1} parent=71 // pred_check
          %p2246 = pneg %p2245
        $region122: #{tpu_custom_call.1} parent=71 // pred_check_branch
          %2248 = sbr.rel (%p2246) target = $region124
        $region123: #{tpu_custom_call.1} parent=71 // pred_region
          %v2249 = vld [vmem:[#allocation3] sm:$0xff]
          %v2250 = vld [vmem:[#allocation3 + $0x8] sm:$0xff]
          %v2251 = vld [vmem:[#allocation3 + $0x10] sm:$0xff]
          %v2252 = vld [vmem:[#allocation3 + $0x18] sm:$0xff]
          %v2253 = vld [vmem:[#allocation3 + $0x20] sm:$0xff]
          %v2254 = vld [vmem:[#allocation3 + $0x28] sm:$0xff]
          %v2255 = vld [vmem:[#allocation3 + $0x30] sm:$0xff]
          %v2256 = vld [vmem:[#allocation3 + $0x38] sm:$0xff]
          %v2257 = vld [vmem:[#allocation3 + $0x40] sm:$0xff]
          %v2258 = vld [vmem:[#allocation3 + $0x48] sm:$0xff]
          %v2259 = vld [vmem:[#allocation3 + $0x50] sm:$0xff]
          %v2260 = vld [vmem:[#allocation3 + $0x58] sm:$0xff]
          %v2261 = vld [vmem:[#allocation3 + $0x60] sm:$0xff]
          %v2262 = vld [vmem:[#allocation3 + $0x68] sm:$0xff]
          %v2263 = vld [vmem:[#allocation3 + $0x70] sm:$0xff]
          %v2264 = vld [vmem:[#allocation3 + $0x78] sm:$0xff]
          %v2265 = vld [vmem:[#allocation16] sm:$0x3]
          %v2266 = vld [vmem:[#allocation18] sm:$0x3]
          %v2267 = vadd.f32 %v2249, %v2250
          %2268 = vadd.xlane.f32.xlu0 %v2267
          %v2269 = vpop.xlane.xlu0 %2268
          %v2270 = vadd.f32 %v2251, %v2252
          %2271 = vadd.xlane.f32.xlu0 %v2270
          %v2272 = vpop.xlane.xlu0 %2271
          %v2273 = vadd.f32 %v2253, %v2254
          %2274 = vadd.xlane.f32.xlu0 %v2273
          %v2275 = vpop.xlane.xlu0 %2274
          %v2276 = vadd.f32 %v2255, %v2256
          %2277 = vadd.xlane.f32.xlu0 %v2276
          %v2278 = vpop.xlane.xlu0 %2277
          %v2279 = vadd.f32 %v2257, %v2258
          %2280 = vadd.xlane.f32.xlu0 %v2279
          %v2281 = vpop.xlane.xlu0 %2280
          %v2282 = vadd.f32 %v2259, %v2260
          %2283 = vadd.xlane.f32.xlu0 %v2282
          %v2284 = vpop.xlane.xlu0 %2283
          %v2285 = vadd.f32 %v2261, %v2262
          %2286 = vadd.xlane.f32.xlu0 %v2285
          %v2287 = vpop.xlane.xlu0 %2286
          %v2288 = vadd.f32 %v2263, %v2264
          %2289 = vadd.xlane.f32.xlu0 %v2288
          %v2290 = vpop.xlane.xlu0 %2289
          %v2291 = vrcp.pop 256.0
          %v2292 = vmul.f32 256.0, %v2291
          %v2293 = vsub.f32 1.0, %v2292
          %v2294 = vmul.f32 %v2291, %v2293
          %v2295 = vadd.f32 %v2291, %v2294
          %vm2296 = vweird.f32 %v2291
          %v2297 = vsel %vm2296, %v2291, %v2295
          %v2298 = vmul.f32 %v2269, %v2297
          %v2299 = vmul.f32 %v2272, %v2297
          %v2300 = vmul.f32 %v2275, %v2297
          %v2301 = vmul.f32 %v2278, %v2297
          %v2302 = vmul.f32 %v2281, %v2297
          %v2303 = vmul.f32 %v2284, %v2297
          %v2304 = vmul.f32 %v2287, %v2297
          %v2305 = vmul.f32 %v2290, %v2297
          %v2306 = vsub.f32 %v2249, %v2298
          %v2307 = vsub.f32 %v2250, %v2298
          %v2308 = vsub.f32 %v2251, %v2299
          %v2309 = vsub.f32 %v2252, %v2299
          %v2310 = vsub.f32 %v2253, %v2300
          %v2311 = vsub.f32 %v2254, %v2300
          %v2312 = vsub.f32 %v2255, %v2301
          %v2313 = vsub.f32 %v2256, %v2301
          %v2314 = vsub.f32 %v2257, %v2302
          %v2315 = vsub.f32 %v2258, %v2302
          %v2316 = vsub.f32 %v2259, %v2303
          %v2317 = vsub.f32 %v2260, %v2303
          %v2318 = vsub.f32 %v2261, %v2304
          %v2319 = vsub.f32 %v2262, %v2304
          %v2320 = vsub.f32 %v2263, %v2305
          %v2321 = vsub.f32 %v2264, %v2305
          %v2322 = vmul.f32 %v2306, %v2306
          %v2323 = vmul.f32 %v2307, %v2307
          %v2324 = vmul.f32 %v2308, %v2308
          %v2325 = vmul.f32 %v2309, %v2309
          %v2326 = vmul.f32 %v2310, %v2310
          %v2327 = vmul.f32 %v2311, %v2311
          %v2328 = vmul.f32 %v2312, %v2312
          %v2329 = vmul.f32 %v2313, %v2313
          %v2330 = vmul.f32 %v2314, %v2314
          %v2331 = vmul.f32 %v2315, %v2315
          %v2332 = vmul.f32 %v2316, %v2316
          %v2333 = vmul.f32 %v2317, %v2317
          %v2334 = vmul.f32 %v2318, %v2318
          %v2335 = vmul.f32 %v2319, %v2319
          %v2336 = vmul.f32 %v2320, %v2320
          %v2337 = vmul.f32 %v2321, %v2321
          %v2338 = vadd.f32 %v2322, %v2323
          %2339 = vadd.xlane.f32.xlu0 %v2338
          %v2340 = vpop.xlane.xlu0 %2339
          %v2341 = vadd.f32 %v2324, %v2325
          %2342 = vadd.xlane.f32.xlu0 %v2341
          %v2343 = vpop.xlane.xlu0 %2342
          %v2344 = vadd.f32 %v2326, %v2327
          %2345 = vadd.xlane.f32.xlu0 %v2344
          %v2346 = vpop.xlane.xlu0 %2345
          %v2347 = vadd.f32 %v2328, %v2329
          %2348 = vadd.xlane.f32.xlu0 %v2347
          %v2349 = vpop.xlane.xlu0 %2348
          %v2350 = vadd.f32 %v2330, %v2331
          %2351 = vadd.xlane.f32.xlu0 %v2350
          %v2352 = vpop.xlane.xlu0 %2351
          %v2353 = vadd.f32 %v2332, %v2333
          %2354 = vadd.xlane.f32.xlu0 %v2353
          %v2355 = vpop.xlane.xlu0 %2354
          %v2356 = vadd.f32 %v2334, %v2335
          %2357 = vadd.xlane.f32.xlu0 %v2356
          %v2358 = vpop.xlane.xlu0 %2357
          %v2359 = vadd.f32 %v2336, %v2337
          %2360 = vadd.xlane.f32.xlu0 %v2359
          %v2361 = vpop.xlane.xlu0 %2360
          %v2362 = vmul.f32 %v2340, %v2297
          %v2363 = vmul.f32 %v2343, %v2297
          %v2364 = vmul.f32 %v2346, %v2297
          %v2365 = vmul.f32 %v2349, %v2297
          %v2366 = vmul.f32 %v2352, %v2297
          %v2367 = vmul.f32 %v2355, %v2297
          %v2368 = vmul.f32 %v2358, %v2297
          %v2369 = vmul.f32 %v2361, %v2297
          %v2370 = vadd.f32 %v2362, 1e-05
          %v2371 = vadd.f32 %v2363, 1e-05
          %v2372 = vadd.f32 %v2364, 1e-05
          %v2373 = vadd.f32 %v2365, 1e-05
          %v2374 = vadd.f32 %v2366, 1e-05
          %v2375 = vadd.f32 %v2367, 1e-05
          %v2376 = vadd.f32 %v2368, 1e-05
          %v2377 = vadd.f32 %v2369, 1e-05
          %v2378 = vrsqrt.pop %v2370
          %v2379 = vmul.f32 %v2378, %v2370
          %v2380 = vmul.f32 %v2379, %v2378
          %v2381 = vmul.f32 0.5, %v2380
          %v2382 = vsub.f32 1.5, %v2381
          %v2383 = vmul.f32 %v2378, %v2382
          %vm2384 = vweird.f32 %v2370
          %vm2385 = vweird.f32 %v2378
          %vm2386 = vmor %vm2384, %vm2385
          %v2387 = vsel %vm2386, %v2378, %v2383
          %v2388 = vrsqrt.pop %v2371
          %v2389 = vmul.f32 %v2388, %v2371
          %v2390 = vmul.f32 %v2389, %v2388
          %v2391 = vmul.f32 0.5, %v2390
          %v2392 = vsub.f32 1.5, %v2391
          %v2393 = vmul.f32 %v2388, %v2392
          %vm2394 = vweird.f32 %v2371
          %vm2395 = vweird.f32 %v2388
          %vm2396 = vmor %vm2394, %vm2395
          %v2397 = vsel %vm2396, %v2388, %v2393
          %v2398 = vrsqrt.pop %v2372
          %v2399 = vmul.f32 %v2398, %v2372
          %v2400 = vmul.f32 %v2399, %v2398
          %v2401 = vmul.f32 0.5, %v2400
          %v2402 = vsub.f32 1.5, %v2401
          %v2403 = vmul.f32 %v2398, %v2402
          %vm2404 = vweird.f32 %v2372
          %vm2405 = vweird.f32 %v2398
          %vm2406 = vmor %vm2404, %vm2405
          %v2407 = vsel %vm2406, %v2398, %v2403
          %v2408 = vrsqrt.pop %v2373
          %v2409 = vmul.f32 %v2408, %v2373
          %v2410 = vmul.f32 %v2409, %v2408
          %v2411 = vmul.f32 0.5, %v2410
          %v2412 = vsub.f32 1.5, %v2411
          %v2413 = vmul.f32 %v2408, %v2412
          %vm2414 = vweird.f32 %v2373
          %vm2415 = vweird.f32 %v2408
          %vm2416 = vmor %vm2414, %vm2415
          %v2417 = vsel %vm2416, %v2408, %v2413
          %v2418 = vrsqrt.pop %v2374
          %v2419 = vmul.f32 %v2418, %v2374
          %v2420 = vmul.f32 %v2419, %v2418
          %v2421 = vmul.f32 0.5, %v2420
          %v2422 = vsub.f32 1.5, %v2421
          %v2423 = vmul.f32 %v2418, %v2422
          %vm2424 = vweird.f32 %v2374
          %vm2425 = vweird.f32 %v2418
          %vm2426 = vmor %vm2424, %vm2425
          %v2427 = vsel %vm2426, %v2418, %v2423
          %v2428 = vrsqrt.pop %v2375
          %v2429 = vmul.f32 %v2428, %v2375
          %v2430 = vmul.f32 %v2429, %v2428
          %v2431 = vmul.f32 0.5, %v2430
          %v2432 = vsub.f32 1.5, %v2431
          %v2433 = vmul.f32 %v2428, %v2432
          %vm2434 = vweird.f32 %v2375
          %vm2435 = vweird.f32 %v2428
          %vm2436 = vmor %vm2434, %vm2435
          %v2437 = vsel %vm2436, %v2428, %v2433
          %v2438 = vrsqrt.pop %v2376
          %v2439 = vmul.f32 %v2438, %v2376
          %v2440 = vmul.f32 %v2439, %v2438
          %v2441 = vmul.f32 0.5, %v2440
          %v2442 = vsub.f32 1.5, %v2441
          %v2443 = vmul.f32 %v2438, %v2442
          %vm2444 = vweird.f32 %v2376
          %vm2445 = vweird.f32 %v2438
          %vm2446 = vmor %vm2444, %vm2445
          %v2447 = vsel %vm2446, %v2438, %v2443
          %v2448 = vrsqrt.pop %v2377
          %v2449 = vmul.f32 %v2448, %v2377
          %v2450 = vmul.f32 %v2449, %v2448
          %v2451 = vmul.f32 0.5, %v2450
          %v2452 = vsub.f32 1.5, %v2451
          %v2453 = vmul.f32 %v2448, %v2452
          %vm2454 = vweird.f32 %v2377
          %vm2455 = vweird.f32 %v2448
          %vm2456 = vmor %vm2454, %vm2455
          %v2457 = vsel %vm2456, %v2448, %v2453
          %v2458 = vmul.f32 %v2306, %v2387
          %v2459 = vmul.f32 %v2307, %v2387
          %v2460 = vmul.f32 %v2308, %v2397
          %v2461 = vmul.f32 %v2309, %v2397
          %v2462 = vmul.f32 %v2310, %v2407
          %v2463 = vmul.f32 %v2311, %v2407
          %v2464 = vmul.f32 %v2312, %v2417
          %v2465 = vmul.f32 %v2313, %v2417
          %v2466 = vmul.f32 %v2314, %v2427
          %v2467 = vmul.f32 %v2315, %v2427
          %v2468 = vmul.f32 %v2316, %v2437
          %v2469 = vmul.f32 %v2317, %v2437
          %v2470 = vmul.f32 %v2318, %v2447
          %v2471 = vmul.f32 %v2319, %v2447
          %v2472 = vmul.f32 %v2320, %v2457
          %v2473 = vmul.f32 %v2321, %v2457
          %v2475 = vperm.slane %v2265, 0
          %v2476 = vperm.slane %v2265, 1
          %v2479 = vmul.f32 %v2458, %v2475
          %v2480 = vmul.f32 %v2459, %v2476
          %v2481 = vmul.f32 %v2460, %v2475
          %v2482 = vmul.f32 %v2461, %v2476
          %v2483 = vmul.f32 %v2462, %v2475
          %v2484 = vmul.f32 %v2463, %v2476
          %v2485 = vmul.f32 %v2464, %v2475
          %v2486 = vmul.f32 %v2465, %v2476
          %v2487 = vmul.f32 %v2466, %v2475
          %v2488 = vmul.f32 %v2467, %v2476
          %v2489 = vmul.f32 %v2468, %v2475
          %v2490 = vmul.f32 %v2469, %v2476
          %v2491 = vmul.f32 %v2470, %v2475
          %v2492 = vmul.f32 %v2471, %v2476
          %v2493 = vmul.f32 %v2472, %v2475
          %v2494 = vmul.f32 %v2473, %v2476
          %v2496 = vperm.slane %v2266, 0
          %v2497 = vperm.slane %v2266, 1
          %v2500 = vadd.f32 %v2479, %v2496
          %v2501 = vadd.f32 %v2480, %v2497
          %v2502 = vadd.f32 %v2481, %v2496
          %v2503 = vadd.f32 %v2482, %v2497
          %v2504 = vadd.f32 %v2483, %v2496
          %v2505 = vadd.f32 %v2484, %v2497
          %v2506 = vadd.f32 %v2485, %v2496
          %v2507 = vadd.f32 %v2486, %v2497
          %v2508 = vadd.f32 %v2487, %v2496
          %v2509 = vadd.f32 %v2488, %v2497
          %v2510 = vadd.f32 %v2489, %v2496
          %v2511 = vadd.f32 %v2490, %v2497
          %v2512 = vadd.f32 %v2491, %v2496
          %v2513 = vadd.f32 %v2492, %v2497
          %v2514 = vadd.f32 %v2493, %v2496
          %v2515 = vadd.f32 %v2494, %v2497
          %v2516 = vpack.c.bf16 %v2502, %v2500
          %v2517 = vpack.c.bf16 %v2503, %v2501
          %v2518 = vpack.c.bf16 %v2506, %v2504
          %v2519 = vpack.c.bf16 %v2507, %v2505
          %v2520 = vpack.c.bf16 %v2510, %v2508
          %v2521 = vpack.c.bf16 %v2511, %v2509
          %v2522 = vpack.c.bf16 %v2514, %v2512
          %v2523 = vpack.c.bf16 %v2515, %v2513
          %v2524 = vld [vmem:[#allocation19] sm:$0xff]
          %v2525 = vld [vmem:[#allocation19 + $0x8] sm:$0xff]
          %v2526 = vld [vmem:[#allocation19 + $0x10] sm:$0xff]
          %v2527 = vld [vmem:[#allocation19 + $0x18] sm:$0xff]
          %v2528 = vld [vmem:[#allocation19 + $0x20] sm:$0xff]
          %v2529 = vld [vmem:[#allocation19 + $0x28] sm:$0xff]
          %v2530 = vld [vmem:[#allocation19 + $0x30] sm:$0xff]
          %v2531 = vld [vmem:[#allocation19 + $0x38] sm:$0xff]
          %v2532 = vld [vmem:[#allocation19 + $0x40] sm:$0xff]
          %v2533 = vld [vmem:[#allocation19 + $0x48] sm:$0xff]
          %v2534 = vld [vmem:[#allocation19 + $0x50] sm:$0xff]
          %v2535 = vld [vmem:[#allocation19 + $0x58] sm:$0xff]
          %v2536 = vld [vmem:[#allocation19 + $0x60] sm:$0xff]
          %v2537 = vld [vmem:[#allocation19 + $0x68] sm:$0xff]
          %v2538 = vld [vmem:[#allocation19 + $0x70] sm:$0xff]
          %v2539 = vld [vmem:[#allocation19 + $0x78] sm:$0xff]
          %v2540 = vld [vmem:[#allocation19 + $0x80] sm:$0xff]
          %v2541 = vld [vmem:[#allocation19 + $0x88] sm:$0xff]
          %v2542 = vld [vmem:[#allocation19 + $0x90] sm:$0xff]
          %v2543 = vld [vmem:[#allocation19 + $0x98] sm:$0xff]
          %v2544 = vld [vmem:[#allocation19 + $0xa0] sm:$0xff]
          %v2545 = vld [vmem:[#allocation19 + $0xa8] sm:$0xff]
          %v2546 = vld [vmem:[#allocation19 + $0xb0] sm:$0xff]
          %v2547 = vld [vmem:[#allocation19 + $0xb8] sm:$0xff]
          %v2548 = vld [vmem:[#allocation19 + $0xc0] sm:$0xff]
          %v2549 = vld [vmem:[#allocation19 + $0xc8] sm:$0xff]
          %v2550 = vld [vmem:[#allocation19 + $0xd0] sm:$0xff]
          %v2551 = vld [vmem:[#allocation19 + $0xd8] sm:$0xff]
          %v2552 = vld [vmem:[#allocation19 + $0xe0] sm:$0xff]
          %v2553 = vld [vmem:[#allocation19 + $0xe8] sm:$0xff]
          %v2554 = vld [vmem:[#allocation19 + $0xf0] sm:$0xff]
          %v2555 = vld [vmem:[#allocation19 + $0xf8] sm:$0xff]
          %v2556 = vld [vmem:[#allocation19 + $0x100] sm:$0xff]
          %v2557 = vld [vmem:[#allocation19 + $0x108] sm:$0xff]
          %v2558 = vld [vmem:[#allocation19 + $0x110] sm:$0xff]
          %v2559 = vld [vmem:[#allocation19 + $0x118] sm:$0xff]
          %v2560 = vld [vmem:[#allocation19 + $0x120] sm:$0xff]
          %v2561 = vld [vmem:[#allocation19 + $0x128] sm:$0xff]
          %v2562 = vld [vmem:[#allocation19 + $0x130] sm:$0xff]
          %v2563 = vld [vmem:[#allocation19 + $0x138] sm:$0xff]
          %v2564 = vld [vmem:[#allocation19 + $0x140] sm:$0xff]
          %v2565 = vld [vmem:[#allocation19 + $0x148] sm:$0xff]
          %v2566 = vld [vmem:[#allocation19 + $0x150] sm:$0xff]
          %v2567 = vld [vmem:[#allocation19 + $0x158] sm:$0xff]
          %v2568 = vld [vmem:[#allocation19 + $0x160] sm:$0xff]
          %v2569 = vld [vmem:[#allocation19 + $0x168] sm:$0xff]
          %v2570 = vld [vmem:[#allocation19 + $0x170] sm:$0xff]
          %v2571 = vld [vmem:[#allocation19 + $0x178] sm:$0xff]
          %v2572 = vld [vmem:[#allocation19 + $0x180] sm:$0xff]
          %v2573 = vld [vmem:[#allocation19 + $0x188] sm:$0xff]
          %v2574 = vld [vmem:[#allocation19 + $0x190] sm:$0xff]
          %v2575 = vld [vmem:[#allocation19 + $0x198] sm:$0xff]
          %v2576 = vld [vmem:[#allocation19 + $0x1a0] sm:$0xff]
          %v2577 = vld [vmem:[#allocation19 + $0x1a8] sm:$0xff]
          %v2578 = vld [vmem:[#allocation19 + $0x1b0] sm:$0xff]
          %v2579 = vld [vmem:[#allocation19 + $0x1b8] sm:$0xff]
          %v2580 = vld [vmem:[#allocation19 + $0x1c0] sm:$0xff]
          %v2581 = vld [vmem:[#allocation19 + $0x1c8] sm:$0xff]
          %v2582 = vld [vmem:[#allocation19 + $0x1d0] sm:$0xff]
          %v2583 = vld [vmem:[#allocation19 + $0x1d8] sm:$0xff]
          %v2584 = vld [vmem:[#allocation19 + $0x1e0] sm:$0xff]
          %v2585 = vld [vmem:[#allocation19 + $0x1e8] sm:$0xff]
          %v2586 = vld [vmem:[#allocation19 + $0x1f0] sm:$0xff]
          %v2587 = vld [vmem:[#allocation19 + $0x1f8] sm:$0xff]
          %v2588 = vld [vmem:[#allocation19 + $0x200] sm:$0xff]
          %v2589 = vld [vmem:[#allocation19 + $0x208] sm:$0xff]
          %v2590 = vld [vmem:[#allocation19 + $0x210] sm:$0xff]
          %v2591 = vld [vmem:[#allocation19 + $0x218] sm:$0xff]
          %v2592 = vld [vmem:[#allocation19 + $0x220] sm:$0xff]
          %v2593 = vld [vmem:[#allocation19 + $0x228] sm:$0xff]
          %v2594 = vld [vmem:[#allocation19 + $0x230] sm:$0xff]
          %v2595 = vld [vmem:[#allocation19 + $0x238] sm:$0xff]
          %v2596 = vld [vmem:[#allocation19 + $0x240] sm:$0xff]
          %v2597 = vld [vmem:[#allocation19 + $0x248] sm:$0xff]
          %v2598 = vld [vmem:[#allocation19 + $0x250] sm:$0xff]
          %v2599 = vld [vmem:[#allocation19 + $0x258] sm:$0xff]
          %v2600 = vld [vmem:[#allocation19 + $0x260] sm:$0xff]
          %v2601 = vld [vmem:[#allocation19 + $0x268] sm:$0xff]
          %v2602 = vld [vmem:[#allocation19 + $0x270] sm:$0xff]
          %v2603 = vld [vmem:[#allocation19 + $0x278] sm:$0xff]
          %v2604 = vld [vmem:[#allocation19 + $0x280] sm:$0xff]
          %v2605 = vld [vmem:[#allocation19 + $0x288] sm:$0xff]
          %v2606 = vld [vmem:[#allocation19 + $0x290] sm:$0xff]
          %v2607 = vld [vmem:[#allocation19 + $0x298] sm:$0xff]
          %v2608 = vld [vmem:[#allocation19 + $0x2a0] sm:$0xff]
          %v2609 = vld [vmem:[#allocation19 + $0x2a8] sm:$0xff]
          %v2610 = vld [vmem:[#allocation19 + $0x2b0] sm:$0xff]
          %v2611 = vld [vmem:[#allocation19 + $0x2b8] sm:$0xff]
          %v2612 = vld [vmem:[#allocation19 + $0x2c0] sm:$0xff]
          %v2613 = vld [vmem:[#allocation19 + $0x2c8] sm:$0xff]
          %v2614 = vld [vmem:[#allocation19 + $0x2d0] sm:$0xff]
          %v2615 = vld [vmem:[#allocation19 + $0x2d8] sm:$0xff]
          %v2616 = vld [vmem:[#allocation19 + $0x2e0] sm:$0xff]
          %v2617 = vld [vmem:[#allocation19 + $0x2e8] sm:$0xff]
          %v2618 = vld [vmem:[#allocation19 + $0x2f0] sm:$0xff]
          %v2619 = vld [vmem:[#allocation19 + $0x2f8] sm:$0xff]
          %v2620 = vld [vmem:[#allocation19 + $0x300] sm:$0xff]
          %v2621 = vld [vmem:[#allocation19 + $0x308] sm:$0xff]
          %v2622 = vld [vmem:[#allocation19 + $0x310] sm:$0xff]
          %v2623 = vld [vmem:[#allocation19 + $0x318] sm:$0xff]
          %v2624 = vld [vmem:[#allocation19 + $0x320] sm:$0xff]
          %v2625 = vld [vmem:[#allocation19 + $0x328] sm:$0xff]
          %v2626 = vld [vmem:[#allocation19 + $0x330] sm:$0xff]
          %v2627 = vld [vmem:[#allocation19 + $0x338] sm:$0xff]
          %v2628 = vld [vmem:[#allocation19 + $0x340] sm:$0xff]
          %v2629 = vld [vmem:[#allocation19 + $0x348] sm:$0xff]
          %v2630 = vld [vmem:[#allocation19 + $0x350] sm:$0xff]
          %v2631 = vld [vmem:[#allocation19 + $0x358] sm:$0xff]
          %v2632 = vld [vmem:[#allocation19 + $0x360] sm:$0xff]
          %v2633 = vld [vmem:[#allocation19 + $0x368] sm:$0xff]
          %v2634 = vld [vmem:[#allocation19 + $0x370] sm:$0xff]
          %v2635 = vld [vmem:[#allocation19 + $0x378] sm:$0xff]
          %v2636 = vld [vmem:[#allocation19 + $0x380] sm:$0xff]
          %v2637 = vld [vmem:[#allocation19 + $0x388] sm:$0xff]
          %v2638 = vld [vmem:[#allocation19 + $0x390] sm:$0xff]
          %v2639 = vld [vmem:[#allocation19 + $0x398] sm:$0xff]
          %v2640 = vld [vmem:[#allocation19 + $0x3a0] sm:$0xff]
          %v2641 = vld [vmem:[#allocation19 + $0x3a8] sm:$0xff]
          %v2642 = vld [vmem:[#allocation19 + $0x3b0] sm:$0xff]
          %v2643 = vld [vmem:[#allocation19 + $0x3b8] sm:$0xff]
          %v2644 = vld [vmem:[#allocation19 + $0x3c0] sm:$0xff]
          %v2645 = vld [vmem:[#allocation19 + $0x3c8] sm:$0xff]
          %v2646 = vld [vmem:[#allocation19 + $0x3d0] sm:$0xff]
          %v2647 = vld [vmem:[#allocation19 + $0x3d8] sm:$0xff]
          %v2648 = vld [vmem:[#allocation19 + $0x3e0] sm:$0xff]
          %v2649 = vld [vmem:[#allocation19 + $0x3e8] sm:$0xff]
          %v2650 = vld [vmem:[#allocation19 + $0x3f0] sm:$0xff]
          %v2651 = vld [vmem:[#allocation19 + $0x3f8] sm:$0xff]
          %v2652 = vld [vmem:[%s10] sm:$0xff]
          %v2654 = vperm.slane %v2652, 0
          %v2655 = vperm.slane %v2652, 1
          %v2656 = vperm.slane %v2652, 2
          %v2657 = vperm.slane %v2652, 3
          %v2658 = vperm.slane %v2652, 4
          %v2659 = vperm.slane %v2652, 5
          %v2660 = vperm.slane %v2652, 6
          %v2661 = vperm.slane %v2652, 7
          %v2798 = vunpack.c.l.b16 %v2524
          %v2799 = vunpack.c.h.b16 %v2524
          %v2800 = vunpack.c.l.b16 %v2525
          %v2801 = vunpack.c.h.b16 %v2525
          %v2802 = vunpack.c.l.b16 %v2526
          %v2803 = vunpack.c.h.b16 %v2526
          %v2804 = vunpack.c.l.b16 %v2527
          %v2805 = vunpack.c.h.b16 %v2527
          %v2806 = vunpack.c.l.b16 %v2528
          %v2807 = vunpack.c.h.b16 %v2528
          %v2808 = vunpack.c.l.b16 %v2529
          %v2809 = vunpack.c.h.b16 %v2529
          %v2810 = vunpack.c.l.b16 %v2530
          %v2811 = vunpack.c.h.b16 %v2530
          %v2812 = vunpack.c.l.b16 %v2531
          %v2813 = vunpack.c.h.b16 %v2531
          %v2814 = vunpack.c.l.b16 %v2532
          %v2815 = vunpack.c.h.b16 %v2532
          %v2816 = vunpack.c.l.b16 %v2533
          %v2817 = vunpack.c.h.b16 %v2533
          %v2818 = vunpack.c.l.b16 %v2534
          %v2819 = vunpack.c.h.b16 %v2534
          %v2820 = vunpack.c.l.b16 %v2535
          %v2821 = vunpack.c.h.b16 %v2535
          %v2822 = vunpack.c.l.b16 %v2536
          %v2823 = vunpack.c.h.b16 %v2536
          %v2824 = vunpack.c.l.b16 %v2537
          %v2825 = vunpack.c.h.b16 %v2537
          %v2826 = vunpack.c.l.b16 %v2538
          %v2827 = vunpack.c.h.b16 %v2538
          %v2828 = vunpack.c.l.b16 %v2539
          %v2829 = vunpack.c.h.b16 %v2539
          %v2830 = vunpack.c.l.b16 %v2540
          %v2831 = vunpack.c.h.b16 %v2540
          %v2832 = vunpack.c.l.b16 %v2541
          %v2833 = vunpack.c.h.b16 %v2541
          %v2834 = vunpack.c.l.b16 %v2542
          %v2835 = vunpack.c.h.b16 %v2542
          %v2836 = vunpack.c.l.b16 %v2543
          %v2837 = vunpack.c.h.b16 %v2543
          %v2838 = vunpack.c.l.b16 %v2544
          %v2839 = vunpack.c.h.b16 %v2544
          %v2840 = vunpack.c.l.b16 %v2545
          %v2841 = vunpack.c.h.b16 %v2545
          %v2842 = vunpack.c.l.b16 %v2546
          %v2843 = vunpack.c.h.b16 %v2546
          %v2844 = vunpack.c.l.b16 %v2547
          %v2845 = vunpack.c.h.b16 %v2547
          %v2846 = vunpack.c.l.b16 %v2548
          %v2847 = vunpack.c.h.b16 %v2548
          %v2848 = vunpack.c.l.b16 %v2549
          %v2849 = vunpack.c.h.b16 %v2549
          %v2850 = vunpack.c.l.b16 %v2550
          %v2851 = vunpack.c.h.b16 %v2550
          %v2852 = vunpack.c.l.b16 %v2551
          %v2853 = vunpack.c.h.b16 %v2551
          %v2854 = vunpack.c.l.b16 %v2552
          %v2855 = vunpack.c.h.b16 %v2552
          %v2856 = vunpack.c.l.b16 %v2553
          %v2857 = vunpack.c.h.b16 %v2553
          %v2858 = vunpack.c.l.b16 %v2554
          %v2859 = vunpack.c.h.b16 %v2554
          %v2860 = vunpack.c.l.b16 %v2555
          %v2861 = vunpack.c.h.b16 %v2555
          %v2862 = vunpack.c.l.b16 %v2556
          %v2863 = vunpack.c.h.b16 %v2556
          %v2864 = vunpack.c.l.b16 %v2557
          %v2865 = vunpack.c.h.b16 %v2557
          %v2866 = vunpack.c.l.b16 %v2558
          %v2867 = vunpack.c.h.b16 %v2558
          %v2868 = vunpack.c.l.b16 %v2559
          %v2869 = vunpack.c.h.b16 %v2559
          %v2870 = vunpack.c.l.b16 %v2560
          %v2871 = vunpack.c.h.b16 %v2560
          %v2872 = vunpack.c.l.b16 %v2561
          %v2873 = vunpack.c.h.b16 %v2561
          %v2874 = vunpack.c.l.b16 %v2562
          %v2875 = vunpack.c.h.b16 %v2562
          %v2876 = vunpack.c.l.b16 %v2563
          %v2877 = vunpack.c.h.b16 %v2563
          %v2878 = vunpack.c.l.b16 %v2564
          %v2879 = vunpack.c.h.b16 %v2564
          %v2880 = vunpack.c.l.b16 %v2565
          %v2881 = vunpack.c.h.b16 %v2565
          %v2882 = vunpack.c.l.b16 %v2566
          %v2883 = vunpack.c.h.b16 %v2566
          %v2884 = vunpack.c.l.b16 %v2567
          %v2885 = vunpack.c.h.b16 %v2567
          %v2886 = vunpack.c.l.b16 %v2568
          %v2887 = vunpack.c.h.b16 %v2568
          %v2888 = vunpack.c.l.b16 %v2569
          %v2889 = vunpack.c.h.b16 %v2569
          %v2890 = vunpack.c.l.b16 %v2570
          %v2891 = vunpack.c.h.b16 %v2570
          %v2892 = vunpack.c.l.b16 %v2571
          %v2893 = vunpack.c.h.b16 %v2571
          %v2894 = vunpack.c.l.b16 %v2572
          %v2895 = vunpack.c.h.b16 %v2572
          %v2896 = vunpack.c.l.b16 %v2573
          %v2897 = vunpack.c.h.b16 %v2573
          %v2898 = vunpack.c.l.b16 %v2574
          %v2899 = vunpack.c.h.b16 %v2574
          %v2900 = vunpack.c.l.b16 %v2575
          %v2901 = vunpack.c.h.b16 %v2575
          %v2902 = vunpack.c.l.b16 %v2576
          %v2903 = vunpack.c.h.b16 %v2576
          %v2904 = vunpack.c.l.b16 %v2577
          %v2905 = vunpack.c.h.b16 %v2577
          %v2906 = vunpack.c.l.b16 %v2578
          %v2907 = vunpack.c.h.b16 %v2578
          %v2908 = vunpack.c.l.b16 %v2579
          %v2909 = vunpack.c.h.b16 %v2579
          %v2910 = vunpack.c.l.b16 %v2580
          %v2911 = vunpack.c.h.b16 %v2580
          %v2912 = vunpack.c.l.b16 %v2581
          %v2913 = vunpack.c.h.b16 %v2581
          %v2914 = vunpack.c.l.b16 %v2582
          %v2915 = vunpack.c.h.b16 %v2582
          %v2916 = vunpack.c.l.b16 %v2583
          %v2917 = vunpack.c.h.b16 %v2583
          %v2918 = vunpack.c.l.b16 %v2584
          %v2919 = vunpack.c.h.b16 %v2584
          %v2920 = vunpack.c.l.b16 %v2585
          %v2921 = vunpack.c.h.b16 %v2585
          %v2922 = vunpack.c.l.b16 %v2586
          %v2923 = vunpack.c.h.b16 %v2586
          %v2924 = vunpack.c.l.b16 %v2587
          %v2925 = vunpack.c.h.b16 %v2587
          %v2926 = vunpack.c.l.b16 %v2588
          %v2927 = vunpack.c.h.b16 %v2588
          %v2928 = vunpack.c.l.b16 %v2589
          %v2929 = vunpack.c.h.b16 %v2589
          %v2930 = vunpack.c.l.b16 %v2590
          %v2931 = vunpack.c.h.b16 %v2590
          %v2932 = vunpack.c.l.b16 %v2591
          %v2933 = vunpack.c.h.b16 %v2591
          %v2934 = vunpack.c.l.b16 %v2592
          %v2935 = vunpack.c.h.b16 %v2592
          %v2936 = vunpack.c.l.b16 %v2593
          %v2937 = vunpack.c.h.b16 %v2593
          %v2938 = vunpack.c.l.b16 %v2594
          %v2939 = vunpack.c.h.b16 %v2594
          %v2940 = vunpack.c.l.b16 %v2595
          %v2941 = vunpack.c.h.b16 %v2595
          %v2942 = vunpack.c.l.b16 %v2596
          %v2943 = vunpack.c.h.b16 %v2596
          %v2944 = vunpack.c.l.b16 %v2597
          %v2945 = vunpack.c.h.b16 %v2597
          %v2946 = vunpack.c.l.b16 %v2598
          %v2947 = vunpack.c.h.b16 %v2598
          %v2948 = vunpack.c.l.b16 %v2599
          %v2949 = vunpack.c.h.b16 %v2599
          %v2950 = vunpack.c.l.b16 %v2600
          %v2951 = vunpack.c.h.b16 %v2600
          %v2952 = vunpack.c.l.b16 %v2601
          %v2953 = vunpack.c.h.b16 %v2601
          %v2954 = vunpack.c.l.b16 %v2602
          %v2955 = vunpack.c.h.b16 %v2602
          %v2956 = vunpack.c.l.b16 %v2603
          %v2957 = vunpack.c.h.b16 %v2603
          %v2958 = vunpack.c.l.b16 %v2604
          %v2959 = vunpack.c.h.b16 %v2604
          %v2960 = vunpack.c.l.b16 %v2605
          %v2961 = vunpack.c.h.b16 %v2605
          %v2962 = vunpack.c.l.b16 %v2606
          %v2963 = vunpack.c.h.b16 %v2606
          %v2964 = vunpack.c.l.b16 %v2607
          %v2965 = vunpack.c.h.b16 %v2607
          %v2966 = vunpack.c.l.b16 %v2608
          %v2967 = vunpack.c.h.b16 %v2608
          %v2968 = vunpack.c.l.b16 %v2609
          %v2969 = vunpack.c.h.b16 %v2609
          %v2970 = vunpack.c.l.b16 %v2610
          %v2971 = vunpack.c.h.b16 %v2610
          %v2972 = vunpack.c.l.b16 %v2611
          %v2973 = vunpack.c.h.b16 %v2611
          %v2974 = vunpack.c.l.b16 %v2612
          %v2975 = vunpack.c.h.b16 %v2612
          %v2976 = vunpack.c.l.b16 %v2613
          %v2977 = vunpack.c.h.b16 %v2613
          %v2978 = vunpack.c.l.b16 %v2614
          %v2979 = vunpack.c.h.b16 %v2614
          %v2980 = vunpack.c.l.b16 %v2615
          %v2981 = vunpack.c.h.b16 %v2615
          %v2982 = vunpack.c.l.b16 %v2616
          %v2983 = vunpack.c.h.b16 %v2616
          %v2984 = vunpack.c.l.b16 %v2617
          %v2985 = vunpack.c.h.b16 %v2617
          %v2986 = vunpack.c.l.b16 %v2618
          %v2987 = vunpack.c.h.b16 %v2618
          %v2988 = vunpack.c.l.b16 %v2619
          %v2989 = vunpack.c.h.b16 %v2619
          %v2990 = vunpack.c.l.b16 %v2620
          %v2991 = vunpack.c.h.b16 %v2620
          %v2992 = vunpack.c.l.b16 %v2621
          %v2993 = vunpack.c.h.b16 %v2621
          %v2994 = vunpack.c.l.b16 %v2622
          %v2995 = vunpack.c.h.b16 %v2622
          %v2996 = vunpack.c.l.b16 %v2623
          %v2997 = vunpack.c.h.b16 %v2623
          %v2998 = vunpack.c.l.b16 %v2624
          %v2999 = vunpack.c.h.b16 %v2624
          %v3000 = vunpack.c.l.b16 %v2625
          %v3001 = vunpack.c.h.b16 %v2625
          %v3002 = vunpack.c.l.b16 %v2626
          %v3003 = vunpack.c.h.b16 %v2626
          %v3004 = vunpack.c.l.b16 %v2627
          %v3005 = vunpack.c.h.b16 %v2627
          %v3006 = vunpack.c.l.b16 %v2628
          %v3007 = vunpack.c.h.b16 %v2628
          %v3008 = vunpack.c.l.b16 %v2629
          %v3009 = vunpack.c.h.b16 %v2629
          %v3010 = vunpack.c.l.b16 %v2630
          %v3011 = vunpack.c.h.b16 %v2630
          %v3012 = vunpack.c.l.b16 %v2631
          %v3013 = vunpack.c.h.b16 %v2631
          %v3014 = vunpack.c.l.b16 %v2632
          %v3015 = vunpack.c.h.b16 %v2632
          %v3016 = vunpack.c.l.b16 %v2633
          %v3017 = vunpack.c.h.b16 %v2633
          %v3018 = vunpack.c.l.b16 %v2634
          %v3019 = vunpack.c.h.b16 %v2634
          %v3020 = vunpack.c.l.b16 %v2635
          %v3021 = vunpack.c.h.b16 %v2635
          %v3022 = vunpack.c.l.b16 %v2636
          %v3023 = vunpack.c.h.b16 %v2636
          %v3024 = vunpack.c.l.b16 %v2637
          %v3025 = vunpack.c.h.b16 %v2637
          %v3026 = vunpack.c.l.b16 %v2638
          %v3027 = vunpack.c.h.b16 %v2638
          %v3028 = vunpack.c.l.b16 %v2639
          %v3029 = vunpack.c.h.b16 %v2639
          %v3030 = vunpack.c.l.b16 %v2640
          %v3031 = vunpack.c.h.b16 %v2640
          %v3032 = vunpack.c.l.b16 %v2641
          %v3033 = vunpack.c.h.b16 %v2641
          %v3034 = vunpack.c.l.b16 %v2642
          %v3035 = vunpack.c.h.b16 %v2642
          %v3036 = vunpack.c.l.b16 %v2643
          %v3037 = vunpack.c.h.b16 %v2643
          %v3038 = vunpack.c.l.b16 %v2644
          %v3039 = vunpack.c.h.b16 %v2644
          %v3040 = vunpack.c.l.b16 %v2645
          %v3041 = vunpack.c.h.b16 %v2645
          %v3042 = vunpack.c.l.b16 %v2646
          %v3043 = vunpack.c.h.b16 %v2646
          %v3044 = vunpack.c.l.b16 %v2647
          %v3045 = vunpack.c.h.b16 %v2647
          %v3046 = vunpack.c.l.b16 %v2648
          %v3047 = vunpack.c.h.b16 %v2648
          %v3048 = vunpack.c.l.b16 %v2649
          %v3049 = vunpack.c.h.b16 %v2649
          %v3050 = vunpack.c.l.b16 %v2650
          %v3051 = vunpack.c.h.b16 %v2650
          %v3052 = vunpack.c.l.b16 %v2651
          %v3053 = vunpack.c.h.b16 %v2651
          %v3054 = vpack.c.b16 %v2806, %v2798
          %v3055 = vpack.c.b16 %v2807, %v2799
          %v3056 = vpack.c.b16 %v2808, %v2800
          %v3057 = vpack.c.b16 %v2809, %v2801
          %v3058 = vpack.c.b16 %v2810, %v2802
          %v3059 = vpack.c.b16 %v2811, %v2803
          %v3060 = vpack.c.b16 %v2812, %v2804
          %v3061 = vpack.c.b16 %v2813, %v2805
          %v3062 = vpack.c.b16 %v2822, %v2814
          %v3063 = vpack.c.b16 %v2823, %v2815
          %v3064 = vpack.c.b16 %v2824, %v2816
          %v3065 = vpack.c.b16 %v2825, %v2817
          %v3066 = vpack.c.b16 %v2826, %v2818
          %v3067 = vpack.c.b16 %v2827, %v2819
          %v3068 = vpack.c.b16 %v2828, %v2820
          %v3069 = vpack.c.b16 %v2829, %v2821
          %v3070 = vpack.c.b16 %v2838, %v2830
          %v3071 = vpack.c.b16 %v2839, %v2831
          %v3072 = vpack.c.b16 %v2840, %v2832
          %v3073 = vpack.c.b16 %v2841, %v2833
          %v3074 = vpack.c.b16 %v2842, %v2834
          %v3075 = vpack.c.b16 %v2843, %v2835
          %v3076 = vpack.c.b16 %v2844, %v2836
          %v3077 = vpack.c.b16 %v2845, %v2837
          %v3078 = vpack.c.b16 %v2854, %v2846
          %v3079 = vpack.c.b16 %v2855, %v2847
          %v3080 = vpack.c.b16 %v2856, %v2848
          %v3081 = vpack.c.b16 %v2857, %v2849
          %v3082 = vpack.c.b16 %v2858, %v2850
          %v3083 = vpack.c.b16 %v2859, %v2851
          %v3084 = vpack.c.b16 %v2860, %v2852
          %v3085 = vpack.c.b16 %v2861, %v2853
          %v3086 = vpack.c.b16 %v2870, %v2862
          %v3087 = vpack.c.b16 %v2871, %v2863
          %v3088 = vpack.c.b16 %v2872, %v2864
          %v3089 = vpack.c.b16 %v2873, %v2865
          %v3090 = vpack.c.b16 %v2874, %v2866
          %v3091 = vpack.c.b16 %v2875, %v2867
          %v3092 = vpack.c.b16 %v2876, %v2868
          %v3093 = vpack.c.b16 %v2877, %v2869
          %v3094 = vpack.c.b16 %v2886, %v2878
          %v3095 = vpack.c.b16 %v2887, %v2879
          %v3096 = vpack.c.b16 %v2888, %v2880
          %v3097 = vpack.c.b16 %v2889, %v2881
          %v3098 = vpack.c.b16 %v2890, %v2882
          %v3099 = vpack.c.b16 %v2891, %v2883
          %v3100 = vpack.c.b16 %v2892, %v2884
          %v3101 = vpack.c.b16 %v2893, %v2885
          %v3102 = vpack.c.b16 %v2902, %v2894
          %v3103 = vpack.c.b16 %v2903, %v2895
          %v3104 = vpack.c.b16 %v2904, %v2896
          %v3105 = vpack.c.b16 %v2905, %v2897
          %v3106 = vpack.c.b16 %v2906, %v2898
          %v3107 = vpack.c.b16 %v2907, %v2899
          %v3108 = vpack.c.b16 %v2908, %v2900
          %v3109 = vpack.c.b16 %v2909, %v2901
          %v3110 = vpack.c.b16 %v2918, %v2910
          %v3111 = vpack.c.b16 %v2919, %v2911
          %v3112 = vpack.c.b16 %v2920, %v2912
          %v3113 = vpack.c.b16 %v2921, %v2913
          %v3114 = vpack.c.b16 %v2922, %v2914
          %v3115 = vpack.c.b16 %v2923, %v2915
          %v3116 = vpack.c.b16 %v2924, %v2916
          %v3117 = vpack.c.b16 %v2925, %v2917
          %v3118 = vpack.c.b16 %v2934, %v2926
          %v3119 = vpack.c.b16 %v2935, %v2927
          %v3120 = vpack.c.b16 %v2936, %v2928
          %v3121 = vpack.c.b16 %v2937, %v2929
          %v3122 = vpack.c.b16 %v2938, %v2930
          %v3123 = vpack.c.b16 %v2939, %v2931
          %v3124 = vpack.c.b16 %v2940, %v2932
          %v3125 = vpack.c.b16 %v2941, %v2933
          %v3126 = vpack.c.b16 %v2950, %v2942
          %v3127 = vpack.c.b16 %v2951, %v2943
          %v3128 = vpack.c.b16 %v2952, %v2944
          %v3129 = vpack.c.b16 %v2953, %v2945
          %v3130 = vpack.c.b16 %v2954, %v2946
          %v3131 = vpack.c.b16 %v2955, %v2947
          %v3132 = vpack.c.b16 %v2956, %v2948
          %v3133 = vpack.c.b16 %v2957, %v2949
          %v3134 = vpack.c.b16 %v2966, %v2958
          %v3135 = vpack.c.b16 %v2967, %v2959
          %v3136 = vpack.c.b16 %v2968, %v2960
          %v3137 = vpack.c.b16 %v2969, %v2961
          %v3138 = vpack.c.b16 %v2970, %v2962
          %v3139 = vpack.c.b16 %v2971, %v2963
          %v3140 = vpack.c.b16 %v2972, %v2964
          %v3141 = vpack.c.b16 %v2973, %v2965
          %v3142 = vpack.c.b16 %v2982, %v2974
          %v3143 = vpack.c.b16 %v2983, %v2975
          %v3144 = vpack.c.b16 %v2984, %v2976
          %v3145 = vpack.c.b16 %v2985, %v2977
          %v3146 = vpack.c.b16 %v2986, %v2978
          %v3147 = vpack.c.b16 %v2987, %v2979
          %v3148 = vpack.c.b16 %v2988, %v2980
          %v3149 = vpack.c.b16 %v2989, %v2981
          %v3150 = vpack.c.b16 %v2998, %v2990
          %v3151 = vpack.c.b16 %v2999, %v2991
          %v3152 = vpack.c.b16 %v3000, %v2992
          %v3153 = vpack.c.b16 %v3001, %v2993
          %v3154 = vpack.c.b16 %v3002, %v2994
          %v3155 = vpack.c.b16 %v3003, %v2995
          %v3156 = vpack.c.b16 %v3004, %v2996
          %v3157 = vpack.c.b16 %v3005, %v2997
          %v3158 = vpack.c.b16 %v3014, %v3006
          %v3159 = vpack.c.b16 %v3015, %v3007
          %v3160 = vpack.c.b16 %v3016, %v3008
          %v3161 = vpack.c.b16 %v3017, %v3009
          %v3162 = vpack.c.b16 %v3018, %v3010
          %v3163 = vpack.c.b16 %v3019, %v3011
          %v3164 = vpack.c.b16 %v3020, %v3012
          %v3165 = vpack.c.b16 %v3021, %v3013
          %v3166 = vpack.c.b16 %v3030, %v3022
          %v3167 = vpack.c.b16 %v3031, %v3023
          %v3168 = vpack.c.b16 %v3032, %v3024
          %v3169 = vpack.c.b16 %v3033, %v3025
          %v3170 = vpack.c.b16 %v3034, %v3026
          %v3171 = vpack.c.b16 %v3035, %v3027
          %v3172 = vpack.c.b16 %v3036, %v3028
          %v3173 = vpack.c.b16 %v3037, %v3029
          %v3174 = vpack.c.b16 %v3046, %v3038
          %v3175 = vpack.c.b16 %v3047, %v3039
          %v3176 = vpack.c.b16 %v3048, %v3040
          %v3177 = vpack.c.b16 %v3049, %v3041
          %v3178 = vpack.c.b16 %v3050, %v3042
          %v3179 = vpack.c.b16 %v3051, %v3043
          %v3180 = vpack.c.b16 %v3052, %v3044
          %v3181 = vpack.c.b16 %v3053, %v3045
          %3310 = vmatpush.bf16.msra.mxu0 %v3110
          %3311 = vmatpush.bf16.msra.mxu0 %v3102
          %3312 = vmatpush.bf16.msra.mxu0 %v3094
          %3313 = vmatpush.bf16.msra.mxu0 %v3086
          %3314 = vmatpush.bf16.msra.mxu0 %v3078
          %3315 = vmatpush.bf16.msra.mxu0 %v3070
          %3316 = vmatpush.bf16.msra.mxu0 %v3062
          %3317 = vmatpush.bf16.msra.mxu0 %v3054
          %3318 = vmatmul.bf16.gmra.mxu0 %v2516
          %v3319 = vpop.f32.mrf.mxu0
          %v3320 = vadd.f32 %v2654, %v3319
          %v3321 = vpop.f32.mrf.mxu0
          %v3322 = vadd.f32 %v2654, %v3321
          %3323 = vmatmul.bf16.gmra.mxu0 %v2518
          %v3324 = vpop.f32.mrf.mxu0
          %v3325 = vadd.f32 %v2654, %v3324
          %v3326 = vpop.f32.mrf.mxu0
          %v3327 = vadd.f32 %v2654, %v3326
          %3328 = vmatmul.bf16.gmra.mxu0 %v2520
          %v3329 = vpop.f32.mrf.mxu0
          %v3330 = vadd.f32 %v2654, %v3329
          %v3331 = vpop.f32.mrf.mxu0
          %v3332 = vadd.f32 %v2654, %v3331
          %3333 = vmatmul.bf16.gmra.mxu0 %v2522
          %v3334 = vpop.f32.mrf.mxu0
          %v3335 = vadd.f32 %v2654, %v3334
          %v3336 = vpop.f32.mrf.mxu0
          %v3337 = vadd.f32 %v2654, %v3336
          %3338 = vdwg.mxu0
          %3339 = vmatpush.bf16.msra.mxu0 %v3174
          %3340 = vmatpush.bf16.msra.mxu0 %v3166
          %3341 = vmatpush.bf16.msra.mxu0 %v3158
          %3342 = vmatpush.bf16.msra.mxu0 %v3150
          %3343 = vmatpush.bf16.msra.mxu0 %v3142
          %3344 = vmatpush.bf16.msra.mxu0 %v3134
          %3345 = vmatpush.bf16.msra.mxu0 %v3126
          %3346 = vmatpush.bf16.msra.mxu0 %v3118
          %3347 = vmatmul.bf16.gmra.mxu0 %v2517
          %v3348 = vpop.f32.mrf.mxu0
          %v3349 = vadd.f32 %v3320, %v3348
          %v3350 = vpop.f32.mrf.mxu0
          %v3351 = vadd.f32 %v3322, %v3350
          %3352 = vmatmul.bf16.gmra.mxu0 %v2519
          %v3353 = vpop.f32.mrf.mxu0
          %v3354 = vadd.f32 %v3325, %v3353
          %v3355 = vpop.f32.mrf.mxu0
          %v3356 = vadd.f32 %v3327, %v3355
          %3357 = vmatmul.bf16.gmra.mxu0 %v2521
          %v3358 = vpop.f32.mrf.mxu0
          %v3359 = vadd.f32 %v3330, %v3358
          %v3360 = vpop.f32.mrf.mxu0
          %v3361 = vadd.f32 %v3332, %v3360
          %3362 = vmatmul.bf16.gmra.mxu0 %v2523
          %v3363 = vpop.f32.mrf.mxu0
          %v3364 = vadd.f32 %v3335, %v3363
          %v3365 = vpop.f32.mrf.mxu0
          %v3366 = vadd.f32 %v3337, %v3365
          %3367 = vdwg.mxu0
          %3368 = vmatpush.bf16.msra.mxu0 %v3111
          %3369 = vmatpush.bf16.msra.mxu0 %v3103
          %3370 = vmatpush.bf16.msra.mxu0 %v3095
          %3371 = vmatpush.bf16.msra.mxu0 %v3087
          %3372 = vmatpush.bf16.msra.mxu0 %v3079
          %3373 = vmatpush.bf16.msra.mxu0 %v3071
          %3374 = vmatpush.bf16.msra.mxu0 %v3063
          %3375 = vmatpush.bf16.msra.mxu0 %v3055
          %3376 = vmatmul.bf16.gmra.mxu0 %v2516
          %v3377 = vpop.f32.mrf.mxu0
          %v3378 = vadd.f32 %v2655, %v3377
          %v3379 = vpop.f32.mrf.mxu0
          %v3380 = vadd.f32 %v2655, %v3379
          %3381 = vmatmul.bf16.gmra.mxu0 %v2518
          %v3382 = vpop.f32.mrf.mxu0
          %v3383 = vadd.f32 %v2655, %v3382
          %v3384 = vpop.f32.mrf.mxu0
          %v3385 = vadd.f32 %v2655, %v3384
          %3386 = vmatmul.bf16.gmra.mxu0 %v2520
          %v3387 = vpop.f32.mrf.mxu0
          %v3388 = vadd.f32 %v2655, %v3387
          %v3389 = vpop.f32.mrf.mxu0
          %v3390 = vadd.f32 %v2655, %v3389
          %3391 = vmatmul.bf16.gmra.mxu0 %v2522
          %v3392 = vpop.f32.mrf.mxu0
          %v3393 = vadd.f32 %v2655, %v3392
          %v3394 = vpop.f32.mrf.mxu0
          %v3395 = vadd.f32 %v2655, %v3394
          %3396 = vdwg.mxu0
          %3397 = vmatpush.bf16.msra.mxu0 %v3175
          %3398 = vmatpush.bf16.msra.mxu0 %v3167
          %3399 = vmatpush.bf16.msra.mxu0 %v3159
          %3400 = vmatpush.bf16.msra.mxu0 %v3151
          %3401 = vmatpush.bf16.msra.mxu0 %v3143
          %3402 = vmatpush.bf16.msra.mxu0 %v3135
          %3403 = vmatpush.bf16.msra.mxu0 %v3127
          %3404 = vmatpush.bf16.msra.mxu0 %v3119
          %3405 = vmatmul.bf16.gmra.mxu0 %v2517
          %v3406 = vpop.f32.mrf.mxu0
          %v3407 = vadd.f32 %v3378, %v3406
          %v3408 = vpop.f32.mrf.mxu0
          %v3409 = vadd.f32 %v3380, %v3408
          %3410 = vmatmul.bf16.gmra.mxu0 %v2519
          %v3411 = vpop.f32.mrf.mxu0
          %v3412 = vadd.f32 %v3383, %v3411
          %v3413 = vpop.f32.mrf.mxu0
          %v3414 = vadd.f32 %v3385, %v3413
          %3415 = vmatmul.bf16.gmra.mxu0 %v2521
          %v3416 = vpop.f32.mrf.mxu0
          %v3417 = vadd.f32 %v3388, %v3416
          %v3418 = vpop.f32.mrf.mxu0
          %v3419 = vadd.f32 %v3390, %v3418
          %3420 = vmatmul.bf16.gmra.mxu0 %v2523
          %v3421 = vpop.f32.mrf.mxu0
          %v3422 = vadd.f32 %v3393, %v3421
          %v3423 = vpop.f32.mrf.mxu0
          %v3424 = vadd.f32 %v3395, %v3423
          %3425 = vdwg.mxu0
          %3426 = vmatpush.bf16.msra.mxu0 %v3112
          %3427 = vmatpush.bf16.msra.mxu0 %v3104
          %3428 = vmatpush.bf16.msra.mxu0 %v3096
          %3429 = vmatpush.bf16.msra.mxu0 %v3088
          %3430 = vmatpush.bf16.msra.mxu0 %v3080
          %3431 = vmatpush.bf16.msra.mxu0 %v3072
          %3432 = vmatpush.bf16.msra.mxu0 %v3064
          %3433 = vmatpush.bf16.msra.mxu0 %v3056
          %3434 = vmatmul.bf16.gmra.mxu0 %v2516
          %v3435 = vpop.f32.mrf.mxu0
          %v3436 = vadd.f32 %v2656, %v3435
          %v3437 = vpop.f32.mrf.mxu0
          %v3438 = vadd.f32 %v2656, %v3437
          %3439 = vmatmul.bf16.gmra.mxu0 %v2518
          %v3440 = vpop.f32.mrf.mxu0
          %v3441 = vadd.f32 %v2656, %v3440
          %v3442 = vpop.f32.mrf.mxu0
          %v3443 = vadd.f32 %v2656, %v3442
          %3444 = vmatmul.bf16.gmra.mxu0 %v2520
          %v3445 = vpop.f32.mrf.mxu0
          %v3446 = vadd.f32 %v2656, %v3445
          %v3447 = vpop.f32.mrf.mxu0
          %v3448 = vadd.f32 %v2656, %v3447
          %3449 = vmatmul.bf16.gmra.mxu0 %v2522
          %v3450 = vpop.f32.mrf.mxu0
          %v3451 = vadd.f32 %v2656, %v3450
          %v3452 = vpop.f32.mrf.mxu0
          %v3453 = vadd.f32 %v2656, %v3452
          %3454 = vdwg.mxu0
          %3455 = vmatpush.bf16.msra.mxu0 %v3176
          %3456 = vmatpush.bf16.msra.mxu0 %v3168
          %3457 = vmatpush.bf16.msra.mxu0 %v3160
          %3458 = vmatpush.bf16.msra.mxu0 %v3152
          %3459 = vmatpush.bf16.msra.mxu0 %v3144
          %3460 = vmatpush.bf16.msra.mxu0 %v3136
          %3461 = vmatpush.bf16.msra.mxu0 %v3128
          %3462 = vmatpush.bf16.msra.mxu0 %v3120
          %3463 = vmatmul.bf16.gmra.mxu0 %v2517
          %v3464 = vpop.f32.mrf.mxu0
          %v3465 = vadd.f32 %v3436, %v3464
          %v3466 = vpop.f32.mrf.mxu0
          %v3467 = vadd.f32 %v3438, %v3466
          %3468 = vmatmul.bf16.gmra.mxu0 %v2519
          %v3469 = vpop.f32.mrf.mxu0
          %v3470 = vadd.f32 %v3441, %v3469
          %v3471 = vpop.f32.mrf.mxu0
          %v3472 = vadd.f32 %v3443, %v3471
          %3473 = vmatmul.bf16.gmra.mxu0 %v2521
          %v3474 = vpop.f32.mrf.mxu0
          %v3475 = vadd.f32 %v3446, %v3474
          %v3476 = vpop.f32.mrf.mxu0
          %v3477 = vadd.f32 %v3448, %v3476
          %3478 = vmatmul.bf16.gmra.mxu0 %v2523
          %v3479 = vpop.f32.mrf.mxu0
          %v3480 = vadd.f32 %v3451, %v3479
          %v3481 = vpop.f32.mrf.mxu0
          %v3482 = vadd.f32 %v3453, %v3481
          %3483 = vdwg.mxu0
          %3484 = vmatpush.bf16.msra.mxu0 %v3113
          %3485 = vmatpush.bf16.msra.mxu0 %v3105
          %3486 = vmatpush.bf16.msra.mxu0 %v3097
          %3487 = vmatpush.bf16.msra.mxu0 %v3089
          %3488 = vmatpush.bf16.msra.mxu0 %v3081
          %3489 = vmatpush.bf16.msra.mxu0 %v3073
          %3490 = vmatpush.bf16.msra.mxu0 %v3065
          %3491 = vmatpush.bf16.msra.mxu0 %v3057
          %3492 = vmatmul.bf16.gmra.mxu0 %v2516
          %v3493 = vpop.f32.mrf.mxu0
          %v3494 = vadd.f32 %v2657, %v3493
          %v3495 = vpop.f32.mrf.mxu0
          %v3496 = vadd.f32 %v2657, %v3495
          %3497 = vmatmul.bf16.gmra.mxu0 %v2518
          %v3498 = vpop.f32.mrf.mxu0
          %v3499 = vadd.f32 %v2657, %v3498
          %v3500 = vpop.f32.mrf.mxu0
          %v3501 = vadd.f32 %v2657, %v3500
          %3502 = vmatmul.bf16.gmra.mxu0 %v2520
          %v3503 = vpop.f32.mrf.mxu0
          %v3504 = vadd.f32 %v2657, %v3503
          %v3505 = vpop.f32.mrf.mxu0
          %v3506 = vadd.f32 %v2657, %v3505
          %3507 = vmatmul.bf16.gmra.mxu0 %v2522
          %v3508 = vpop.f32.mrf.mxu0
          %v3509 = vadd.f32 %v2657, %v3508
          %v3510 = vpop.f32.mrf.mxu0
          %v3511 = vadd.f32 %v2657, %v3510
          %3512 = vdwg.mxu0
          %3513 = vmatpush.bf16.msra.mxu0 %v3177
          %3514 = vmatpush.bf16.msra.mxu0 %v3169
          %3515 = vmatpush.bf16.msra.mxu0 %v3161
          %3516 = vmatpush.bf16.msra.mxu0 %v3153
          %3517 = vmatpush.bf16.msra.mxu0 %v3145
          %3518 = vmatpush.bf16.msra.mxu0 %v3137
          %3519 = vmatpush.bf16.msra.mxu0 %v3129
          %3520 = vmatpush.bf16.msra.mxu0 %v3121
          %3521 = vmatmul.bf16.gmra.mxu0 %v2517
          %v3522 = vpop.f32.mrf.mxu0
          %v3523 = vadd.f32 %v3494, %v3522
          %v3524 = vpop.f32.mrf.mxu0
          %v3525 = vadd.f32 %v3496, %v3524
          %3526 = vmatmul.bf16.gmra.mxu0 %v2519
          %v3527 = vpop.f32.mrf.mxu0
          %v3528 = vadd.f32 %v3499, %v3527
          %v3529 = vpop.f32.mrf.mxu0
          %v3530 = vadd.f32 %v3501, %v3529
          %3531 = vmatmul.bf16.gmra.mxu0 %v2521
          %v3532 = vpop.f32.mrf.mxu0
          %v3533 = vadd.f32 %v3504, %v3532
          %v3534 = vpop.f32.mrf.mxu0
          %v3535 = vadd.f32 %v3506, %v3534
          %3536 = vmatmul.bf16.gmra.mxu0 %v2523
          %v3537 = vpop.f32.mrf.mxu0
          %v3538 = vadd.f32 %v3509, %v3537
          %v3539 = vpop.f32.mrf.mxu0
          %v3540 = vadd.f32 %v3511, %v3539
          %3541 = vdwg.mxu0
          %3542 = vmatpush.bf16.msra.mxu0 %v3114
          %3543 = vmatpush.bf16.msra.mxu0 %v3106
          %3544 = vmatpush.bf16.msra.mxu0 %v3098
          %3545 = vmatpush.bf16.msra.mxu0 %v3090
          %3546 = vmatpush.bf16.msra.mxu0 %v3082
          %3547 = vmatpush.bf16.msra.mxu0 %v3074
          %3548 = vmatpush.bf16.msra.mxu0 %v3066
          %3549 = vmatpush.bf16.msra.mxu0 %v3058
          %3550 = vmatmul.bf16.gmra.mxu0 %v2516
          %v3551 = vpop.f32.mrf.mxu0
          %v3552 = vadd.f32 %v2658, %v3551
          %v3553 = vpop.f32.mrf.mxu0
          %v3554 = vadd.f32 %v2658, %v3553
          %3555 = vmatmul.bf16.gmra.mxu0 %v2518
          %v3556 = vpop.f32.mrf.mxu0
          %v3557 = vadd.f32 %v2658, %v3556
          %v3558 = vpop.f32.mrf.mxu0
          %v3559 = vadd.f32 %v2658, %v3558
          %3560 = vmatmul.bf16.gmra.mxu0 %v2520
          %v3561 = vpop.f32.mrf.mxu0
          %v3562 = vadd.f32 %v2658, %v3561
          %v3563 = vpop.f32.mrf.mxu0
          %v3564 = vadd.f32 %v2658, %v3563
          %3565 = vmatmul.bf16.gmra.mxu0 %v2522
          %v3566 = vpop.f32.mrf.mxu0
          %v3567 = vadd.f32 %v2658, %v3566
          %v3568 = vpop.f32.mrf.mxu0
          %v3569 = vadd.f32 %v2658, %v3568
          %3570 = vdwg.mxu0
          %3571 = vmatpush.bf16.msra.mxu0 %v3178
          %3572 = vmatpush.bf16.msra.mxu0 %v3170
          %3573 = vmatpush.bf16.msra.mxu0 %v3162
          %3574 = vmatpush.bf16.msra.mxu0 %v3154
          %3575 = vmatpush.bf16.msra.mxu0 %v3146
          %3576 = vmatpush.bf16.msra.mxu0 %v3138
          %3577 = vmatpush.bf16.msra.mxu0 %v3130
          %3578 = vmatpush.bf16.msra.mxu0 %v3122
          %3579 = vmatmul.bf16.gmra.mxu0 %v2517
          %v3580 = vpop.f32.mrf.mxu0
          %v3581 = vadd.f32 %v3552, %v3580
          %v3582 = vpop.f32.mrf.mxu0
          %v3583 = vadd.f32 %v3554, %v3582
          %3584 = vmatmul.bf16.gmra.mxu0 %v2519
          %v3585 = vpop.f32.mrf.mxu0
          %v3586 = vadd.f32 %v3557, %v3585
          %v3587 = vpop.f32.mrf.mxu0
          %v3588 = vadd.f32 %v3559, %v3587
          %3589 = vmatmul.bf16.gmra.mxu0 %v2521
          %v3590 = vpop.f32.mrf.mxu0
          %v3591 = vadd.f32 %v3562, %v3590
          %v3592 = vpop.f32.mrf.mxu0
          %v3593 = vadd.f32 %v3564, %v3592
          %3594 = vmatmul.bf16.gmra.mxu0 %v2523
          %v3595 = vpop.f32.mrf.mxu0
          %v3596 = vadd.f32 %v3567, %v3595
          %v3597 = vpop.f32.mrf.mxu0
          %v3598 = vadd.f32 %v3569, %v3597
          %3599 = vdwg.mxu0
          %3600 = vmatpush.bf16.msra.mxu0 %v3115
          %3601 = vmatpush.bf16.msra.mxu0 %v3107
          %3602 = vmatpush.bf16.msra.mxu0 %v3099
          %3603 = vmatpush.bf16.msra.mxu0 %v3091
          %3604 = vmatpush.bf16.msra.mxu0 %v3083
          %3605 = vmatpush.bf16.msra.mxu0 %v3075
          %3606 = vmatpush.bf16.msra.mxu0 %v3067
          %3607 = vmatpush.bf16.msra.mxu0 %v3059
          %3608 = vmatmul.bf16.gmra.mxu0 %v2516
          %v3609 = vpop.f32.mrf.mxu0
          %v3610 = vadd.f32 %v2659, %v3609
          %v3611 = vpop.f32.mrf.mxu0
          %v3612 = vadd.f32 %v2659, %v3611
          %3613 = vmatmul.bf16.gmra.mxu0 %v2518
          %v3614 = vpop.f32.mrf.mxu0
          %v3615 = vadd.f32 %v2659, %v3614
          %v3616 = vpop.f32.mrf.mxu0
          %v3617 = vadd.f32 %v2659, %v3616
          %3618 = vmatmul.bf16.gmra.mxu0 %v2520
          %v3619 = vpop.f32.mrf.mxu0
          %v3620 = vadd.f32 %v2659, %v3619
          %v3621 = vpop.f32.mrf.mxu0
          %v3622 = vadd.f32 %v2659, %v3621
          %3623 = vmatmul.bf16.gmra.mxu0 %v2522
          %v3624 = vpop.f32.mrf.mxu0
          %v3625 = vadd.f32 %v2659, %v3624
          %v3626 = vpop.f32.mrf.mxu0
          %v3627 = vadd.f32 %v2659, %v3626
          %3628 = vdwg.mxu0
          %3629 = vmatpush.bf16.msra.mxu0 %v3179
          %3630 = vmatpush.bf16.msra.mxu0 %v3171
          %3631 = vmatpush.bf16.msra.mxu0 %v3163
          %3632 = vmatpush.bf16.msra.mxu0 %v3155
          %3633 = vmatpush.bf16.msra.mxu0 %v3147
          %3634 = vmatpush.bf16.msra.mxu0 %v3139
          %3635 = vmatpush.bf16.msra.mxu0 %v3131
          %3636 = vmatpush.bf16.msra.mxu0 %v3123
          %3637 = vmatmul.bf16.gmra.mxu0 %v2517
          %v3638 = vpop.f32.mrf.mxu0
          %v3639 = vadd.f32 %v3610, %v3638
          %v3640 = vpop.f32.mrf.mxu0
          %v3641 = vadd.f32 %v3612, %v3640
          %3642 = vmatmul.bf16.gmra.mxu0 %v2519
          %v3643 = vpop.f32.mrf.mxu0
          %v3644 = vadd.f32 %v3615, %v3643
          %v3645 = vpop.f32.mrf.mxu0
          %v3646 = vadd.f32 %v3617, %v3645
          %3647 = vmatmul.bf16.gmra.mxu0 %v2521
          %v3648 = vpop.f32.mrf.mxu0
          %v3649 = vadd.f32 %v3620, %v3648
          %v3650 = vpop.f32.mrf.mxu0
          %v3651 = vadd.f32 %v3622, %v3650
          %3652 = vmatmul.bf16.gmra.mxu0 %v2523
          %v3653 = vpop.f32.mrf.mxu0
          %v3654 = vadd.f32 %v3625, %v3653
          %v3655 = vpop.f32.mrf.mxu0
          %v3656 = vadd.f32 %v3627, %v3655
          %3657 = vdwg.mxu0
          %3658 = vmatpush.bf16.msra.mxu0 %v3116
          %3659 = vmatpush.bf16.msra.mxu0 %v3108
          %3660 = vmatpush.bf16.msra.mxu0 %v3100
          %3661 = vmatpush.bf16.msra.mxu0 %v3092
          %3662 = vmatpush.bf16.msra.mxu0 %v3084
          %3663 = vmatpush.bf16.msra.mxu0 %v3076
          %3664 = vmatpush.bf16.msra.mxu0 %v3068
          %3665 = vmatpush.bf16.msra.mxu0 %v3060
          %3666 = vmatmul.bf16.gmra.mxu0 %v2516
          %v3667 = vpop.f32.mrf.mxu0
          %v3668 = vadd.f32 %v2660, %v3667
          %v3669 = vpop.f32.mrf.mxu0
          %v3670 = vadd.f32 %v2660, %v3669
          %3671 = vmatmul.bf16.gmra.mxu0 %v2518
          %v3672 = vpop.f32.mrf.mxu0
          %v3673 = vadd.f32 %v2660, %v3672
          %v3674 = vpop.f32.mrf.mxu0
          %v3675 = vadd.f32 %v2660, %v3674
          %3676 = vmatmul.bf16.gmra.mxu0 %v2520
          %v3677 = vpop.f32.mrf.mxu0
          %v3678 = vadd.f32 %v2660, %v3677
          %v3679 = vpop.f32.mrf.mxu0
          %v3680 = vadd.f32 %v2660, %v3679
          %3681 = vmatmul.bf16.gmra.mxu0 %v2522
          %v3682 = vpop.f32.mrf.mxu0
          %v3683 = vadd.f32 %v2660, %v3682
          %v3684 = vpop.f32.mrf.mxu0
          %v3685 = vadd.f32 %v2660, %v3684
          %3686 = vdwg.mxu0
          %3687 = vmatpush.bf16.msra.mxu0 %v3180
          %3688 = vmatpush.bf16.msra.mxu0 %v3172
          %3689 = vmatpush.bf16.msra.mxu0 %v3164
          %3690 = vmatpush.bf16.msra.mxu0 %v3156
          %3691 = vmatpush.bf16.msra.mxu0 %v3148
          %3692 = vmatpush.bf16.msra.mxu0 %v3140
          %3693 = vmatpush.bf16.msra.mxu0 %v3132
          %3694 = vmatpush.bf16.msra.mxu0 %v3124
          %3695 = vmatmul.bf16.gmra.mxu0 %v2517
          %v3696 = vpop.f32.mrf.mxu0
          %v3697 = vadd.f32 %v3668, %v3696
          %v3698 = vpop.f32.mrf.mxu0
          %v3699 = vadd.f32 %v3670, %v3698
          %3700 = vmatmul.bf16.gmra.mxu0 %v2519
          %v3701 = vpop.f32.mrf.mxu0
          %v3702 = vadd.f32 %v3673, %v3701
          %v3703 = vpop.f32.mrf.mxu0
          %v3704 = vadd.f32 %v3675, %v3703
          %3705 = vmatmul.bf16.gmra.mxu0 %v2521
          %v3706 = vpop.f32.mrf.mxu0
          %v3707 = vadd.f32 %v3678, %v3706
          %v3708 = vpop.f32.mrf.mxu0
          %v3709 = vadd.f32 %v3680, %v3708
          %3710 = vmatmul.bf16.gmra.mxu0 %v2523
          %v3711 = vpop.f32.mrf.mxu0
          %v3712 = vadd.f32 %v3683, %v3711
          %v3713 = vpop.f32.mrf.mxu0
          %v3714 = vadd.f32 %v3685, %v3713
          %3715 = vdwg.mxu0
          %3716 = vmatpush.bf16.msra.mxu0 %v3117
          %3717 = vmatpush.bf16.msra.mxu0 %v3109
          %3718 = vmatpush.bf16.msra.mxu0 %v3101
          %3719 = vmatpush.bf16.msra.mxu0 %v3093
          %3720 = vmatpush.bf16.msra.mxu0 %v3085
          %3721 = vmatpush.bf16.msra.mxu0 %v3077
          %3722 = vmatpush.bf16.msra.mxu0 %v3069
          %3723 = vmatpush.bf16.msra.mxu0 %v3061
          %3724 = vmatmul.bf16.gmra.mxu0 %v2516
          %v3725 = vpop.f32.mrf.mxu0
          %v3726 = vadd.f32 %v2661, %v3725
          %v3727 = vpop.f32.mrf.mxu0
          %v3728 = vadd.f32 %v2661, %v3727
          %3729 = vmatmul.bf16.gmra.mxu0 %v2518
          %v3730 = vpop.f32.mrf.mxu0
          %v3731 = vadd.f32 %v2661, %v3730
          %v3732 = vpop.f32.mrf.mxu0
          %v3733 = vadd.f32 %v2661, %v3732
          %3734 = vmatmul.bf16.gmra.mxu0 %v2520
          %v3735 = vpop.f32.mrf.mxu0
          %v3736 = vadd.f32 %v2661, %v3735
          %v3737 = vpop.f32.mrf.mxu0
          %v3738 = vadd.f32 %v2661, %v3737
          %3739 = vmatmul.bf16.gmra.mxu0 %v2522
          %v3740 = vpop.f32.mrf.mxu0
          %v3741 = vadd.f32 %v2661, %v3740
          %v3742 = vpop.f32.mrf.mxu0
          %v3743 = vadd.f32 %v2661, %v3742
          %3744 = vdwg.mxu0
          %3745 = vmatpush.bf16.msra.mxu0 %v3181
          %3746 = vmatpush.bf16.msra.mxu0 %v3173
          %3747 = vmatpush.bf16.msra.mxu0 %v3165
          %3748 = vmatpush.bf16.msra.mxu0 %v3157
          %3749 = vmatpush.bf16.msra.mxu0 %v3149
          %3750 = vmatpush.bf16.msra.mxu0 %v3141
          %3751 = vmatpush.bf16.msra.mxu0 %v3133
          %3752 = vmatpush.bf16.msra.mxu0 %v3125
          %3753 = vmatmul.bf16.gmra.mxu0 %v2517
          %v3754 = vpop.f32.mrf.mxu0
          %v3755 = vadd.f32 %v3726, %v3754
          %v3756 = vpop.f32.mrf.mxu0
          %v3757 = vadd.f32 %v3728, %v3756
          %3758 = vmatmul.bf16.gmra.mxu0 %v2519
          %v3759 = vpop.f32.mrf.mxu0
          %v3760 = vadd.f32 %v3731, %v3759
          %v3761 = vpop.f32.mrf.mxu0
          %v3762 = vadd.f32 %v3733, %v3761
          %3763 = vmatmul.bf16.gmra.mxu0 %v2521
          %v3764 = vpop.f32.mrf.mxu0
          %v3765 = vadd.f32 %v3736, %v3764
          %v3766 = vpop.f32.mrf.mxu0
          %v3767 = vadd.f32 %v3738, %v3766
          %3768 = vmatmul.bf16.gmra.mxu0 %v2523
          %v3769 = vpop.f32.mrf.mxu0
          %v3770 = vadd.f32 %v3741, %v3769
          %v3771 = vpop.f32.mrf.mxu0
          %v3772 = vadd.f32 %v3743, %v3771
          %3773 = vdwg.mxu0
          %v3774 = vmul.f32 %v3349, 0.5
          %v3775 = vmul.f32 %v3407, 0.5
          %v3776 = vmul.f32 %v3465, 0.5
          %v3777 = vmul.f32 %v3523, 0.5
          %v3778 = vmul.f32 %v3581, 0.5
          %v3779 = vmul.f32 %v3639, 0.5
          %v3780 = vmul.f32 %v3697, 0.5
          %v3781 = vmul.f32 %v3755, 0.5
          %v3782 = vmul.f32 %v3351, 0.5
          %v3783 = vmul.f32 %v3409, 0.5
          %v3784 = vmul.f32 %v3467, 0.5
          %v3785 = vmul.f32 %v3525, 0.5
          %v3786 = vmul.f32 %v3583, 0.5
          %v3787 = vmul.f32 %v3641, 0.5
          %v3788 = vmul.f32 %v3699, 0.5
          %v3789 = vmul.f32 %v3757, 0.5
          %v3790 = vmul.f32 %v3354, 0.5
          %v3791 = vmul.f32 %v3412, 0.5
          %v3792 = vmul.f32 %v3470, 0.5
          %v3793 = vmul.f32 %v3528, 0.5
          %v3794 = vmul.f32 %v3586, 0.5
          %v3795 = vmul.f32 %v3644, 0.5
          %v3796 = vmul.f32 %v3702, 0.5
          %v3797 = vmul.f32 %v3760, 0.5
          %v3798 = vmul.f32 %v3356, 0.5
          %v3799 = vmul.f32 %v3414, 0.5
          %v3800 = vmul.f32 %v3472, 0.5
          %v3801 = vmul.f32 %v3530, 0.5
          %v3802 = vmul.f32 %v3588, 0.5
          %v3803 = vmul.f32 %v3646, 0.5
          %v3804 = vmul.f32 %v3704, 0.5
          %v3805 = vmul.f32 %v3762, 0.5
          %v3806 = vmul.f32 %v3359, 0.5
          %v3807 = vmul.f32 %v3417, 0.5
          %v3808 = vmul.f32 %v3475, 0.5
          %v3809 = vmul.f32 %v3533, 0.5
          %v3810 = vmul.f32 %v3591, 0.5
          %v3811 = vmul.f32 %v3649, 0.5
          %v3812 = vmul.f32 %v3707, 0.5
          %v3813 = vmul.f32 %v3765, 0.5
          %v3814 = vmul.f32 %v3361, 0.5
          %v3815 = vmul.f32 %v3419, 0.5
          %v3816 = vmul.f32 %v3477, 0.5
          %v3817 = vmul.f32 %v3535, 0.5
          %v3818 = vmul.f32 %v3593, 0.5
          %v3819 = vmul.f32 %v3651, 0.5
          %v3820 = vmul.f32 %v3709, 0.5
          %v3821 = vmul.f32 %v3767, 0.5
          %v3822 = vmul.f32 %v3364, 0.5
          %v3823 = vmul.f32 %v3422, 0.5
          %v3824 = vmul.f32 %v3480, 0.5
          %v3825 = vmul.f32 %v3538, 0.5
          %v3826 = vmul.f32 %v3596, 0.5
          %v3827 = vmul.f32 %v3654, 0.5
          %v3828 = vmul.f32 %v3712, 0.5
          %v3829 = vmul.f32 %v3770, 0.5
          %v3830 = vmul.f32 %v3366, 0.5
          %v3831 = vmul.f32 %v3424, 0.5
          %v3832 = vmul.f32 %v3482, 0.5
          %v3833 = vmul.f32 %v3540, 0.5
          %v3834 = vmul.f32 %v3598, 0.5
          %v3835 = vmul.f32 %v3656, 0.5
          %v3836 = vmul.f32 %v3714, 0.5
          %v3837 = vmul.f32 %v3772, 0.5
          %v3838 = vmul.f32 %v3349, 0.044715
          %v3839 = vmul.f32 %v3407, 0.044715
          %v3840 = vmul.f32 %v3465, 0.044715
          %v3841 = vmul.f32 %v3523, 0.044715
          %v3842 = vmul.f32 %v3581, 0.044715
          %v3843 = vmul.f32 %v3639, 0.044715
          %v3844 = vmul.f32 %v3697, 0.044715
          %v3845 = vmul.f32 %v3755, 0.044715
          %v3846 = vmul.f32 %v3351, 0.044715
          %v3847 = vmul.f32 %v3409, 0.044715
          %v3848 = vmul.f32 %v3467, 0.044715
          %v3849 = vmul.f32 %v3525, 0.044715
          %v3850 = vmul.f32 %v3583, 0.044715
          %v3851 = vmul.f32 %v3641, 0.044715
          %v3852 = vmul.f32 %v3699, 0.044715
          %v3853 = vmul.f32 %v3757, 0.044715
          %v3854 = vmul.f32 %v3354, 0.044715
          %v3855 = vmul.f32 %v3412, 0.044715
          %v3856 = vmul.f32 %v3470, 0.044715
          %v3857 = vmul.f32 %v3528, 0.044715
          %v3858 = vmul.f32 %v3586, 0.044715
          %v3859 = vmul.f32 %v3644, 0.044715
          %v3860 = vmul.f32 %v3702, 0.044715
          %v3861 = vmul.f32 %v3760, 0.044715
          %v3862 = vmul.f32 %v3356, 0.044715
          %v3863 = vmul.f32 %v3414, 0.044715
          %v3864 = vmul.f32 %v3472, 0.044715
          %v3865 = vmul.f32 %v3530, 0.044715
          %v3866 = vmul.f32 %v3588, 0.044715
          %v3867 = vmul.f32 %v3646, 0.044715
          %v3868 = vmul.f32 %v3704, 0.044715
          %v3869 = vmul.f32 %v3762, 0.044715
          %v3870 = vmul.f32 %v3359, 0.044715
          %v3871 = vmul.f32 %v3417, 0.044715
          %v3872 = vmul.f32 %v3475, 0.044715
          %v3873 = vmul.f32 %v3533, 0.044715
          %v3874 = vmul.f32 %v3591, 0.044715
          %v3875 = vmul.f32 %v3649, 0.044715
          %v3876 = vmul.f32 %v3707, 0.044715
          %v3877 = vmul.f32 %v3765, 0.044715
          %v3878 = vmul.f32 %v3361, 0.044715
          %v3879 = vmul.f32 %v3419, 0.044715
          %v3880 = vmul.f32 %v3477, 0.044715
          %v3881 = vmul.f32 %v3535, 0.044715
          %v3882 = vmul.f32 %v3593, 0.044715
          %v3883 = vmul.f32 %v3651, 0.044715
          %v3884 = vmul.f32 %v3709, 0.044715
          %v3885 = vmul.f32 %v3767, 0.044715
          %v3886 = vmul.f32 %v3364, 0.044715
          %v3887 = vmul.f32 %v3422, 0.044715
          %v3888 = vmul.f32 %v3480, 0.044715
          %v3889 = vmul.f32 %v3538, 0.044715
          %v3890 = vmul.f32 %v3596, 0.044715
          %v3891 = vmul.f32 %v3654, 0.044715
          %v3892 = vmul.f32 %v3712, 0.044715
          %v3893 = vmul.f32 %v3770, 0.044715
          %v3894 = vmul.f32 %v3366, 0.044715
          %v3895 = vmul.f32 %v3424, 0.044715
          %v3896 = vmul.f32 %v3482, 0.044715
          %v3897 = vmul.f32 %v3540, 0.044715
          %v3898 = vmul.f32 %v3598, 0.044715
          %v3899 = vmul.f32 %v3656, 0.044715
          %v3900 = vmul.f32 %v3714, 0.044715
          %v3901 = vmul.f32 %v3772, 0.044715
          %v3902 = vmul.f32 %v3838, %v3349
          %v3903 = vmul.f32 %v3839, %v3407
          %v3904 = vmul.f32 %v3840, %v3465
          %v3905 = vmul.f32 %v3841, %v3523
          %v3906 = vmul.f32 %v3842, %v3581
          %v3907 = vmul.f32 %v3843, %v3639
          %v3908 = vmul.f32 %v3844, %v3697
          %v3909 = vmul.f32 %v3845, %v3755
          %v3910 = vmul.f32 %v3846, %v3351
          %v3911 = vmul.f32 %v3847, %v3409
          %v3912 = vmul.f32 %v3848, %v3467
          %v3913 = vmul.f32 %v3849, %v3525
          %v3914 = vmul.f32 %v3850, %v3583
          %v3915 = vmul.f32 %v3851, %v3641
          %v3916 = vmul.f32 %v3852, %v3699
          %v3917 = vmul.f32 %v3853, %v3757
          %v3918 = vmul.f32 %v3854, %v3354
          %v3919 = vmul.f32 %v3855, %v3412
          %v3920 = vmul.f32 %v3856, %v3470
          %v3921 = vmul.f32 %v3857, %v3528
          %v3922 = vmul.f32 %v3858, %v3586
          %v3923 = vmul.f32 %v3859, %v3644
          %v3924 = vmul.f32 %v3860, %v3702
          %v3925 = vmul.f32 %v3861, %v3760
          %v3926 = vmul.f32 %v3862, %v3356
          %v3927 = vmul.f32 %v3863, %v3414
          %v3928 = vmul.f32 %v3864, %v3472
          %v3929 = vmul.f32 %v3865, %v3530
          %v3930 = vmul.f32 %v3866, %v3588
          %v3931 = vmul.f32 %v3867, %v3646
          %v3932 = vmul.f32 %v3868, %v3704
          %v3933 = vmul.f32 %v3869, %v3762
          %v3934 = vmul.f32 %v3870, %v3359
          %v3935 = vmul.f32 %v3871, %v3417
          %v3936 = vmul.f32 %v3872, %v3475
          %v3937 = vmul.f32 %v3873, %v3533
          %v3938 = vmul.f32 %v3874, %v3591
          %v3939 = vmul.f32 %v3875, %v3649
          %v3940 = vmul.f32 %v3876, %v3707
          %v3941 = vmul.f32 %v3877, %v3765
          %v3942 = vmul.f32 %v3878, %v3361
          %v3943 = vmul.f32 %v3879, %v3419
          %v3944 = vmul.f32 %v3880, %v3477
          %v3945 = vmul.f32 %v3881, %v3535
          %v3946 = vmul.f32 %v3882, %v3593
          %v3947 = vmul.f32 %v3883, %v3651
          %v3948 = vmul.f32 %v3884, %v3709
          %v3949 = vmul.f32 %v3885, %v3767
          %v3950 = vmul.f32 %v3886, %v3364
          %v3951 = vmul.f32 %v3887, %v3422
          %v3952 = vmul.f32 %v3888, %v3480
          %v3953 = vmul.f32 %v3889, %v3538
          %v3954 = vmul.f32 %v3890, %v3596
          %v3955 = vmul.f32 %v3891, %v3654
          %v3956 = vmul.f32 %v3892, %v3712
          %v3957 = vmul.f32 %v3893, %v3770
          %v3958 = vmul.f32 %v3894, %v3366
          %v3959 = vmul.f32 %v3895, %v3424
          %v3960 = vmul.f32 %v3896, %v3482
          %v3961 = vmul.f32 %v3897, %v3540
          %v3962 = vmul.f32 %v3898, %v3598
          %v3963 = vmul.f32 %v3899, %v3656
          %v3964 = vmul.f32 %v3900, %v3714
          %v3965 = vmul.f32 %v3901, %v3772
          %v3966 = vmul.f32 %v3902, %v3349
          %v3967 = vmul.f32 %v3903, %v3407
          %v3968 = vmul.f32 %v3904, %v3465
          %v3969 = vmul.f32 %v3905, %v3523
          %v3970 = vmul.f32 %v3906, %v3581
          %v3971 = vmul.f32 %v3907, %v3639
          %v3972 = vmul.f32 %v3908, %v3697
          %v3973 = vmul.f32 %v3909, %v3755
          %v3974 = vmul.f32 %v3910, %v3351
          %v3975 = vmul.f32 %v3911, %v3409
          %v3976 = vmul.f32 %v3912, %v3467
          %v3977 = vmul.f32 %v3913, %v3525
          %v3978 = vmul.f32 %v3914, %v3583
          %v3979 = vmul.f32 %v3915, %v3641
          %v3980 = vmul.f32 %v3916, %v3699
          %v3981 = vmul.f32 %v3917, %v3757
          %v3982 = vmul.f32 %v3918, %v3354
          %v3983 = vmul.f32 %v3919, %v3412
          %v3984 = vmul.f32 %v3920, %v3470
          %v3985 = vmul.f32 %v3921, %v3528
          %v3986 = vmul.f32 %v3922, %v3586
          %v3987 = vmul.f32 %v3923, %v3644
          %v3988 = vmul.f32 %v3924, %v3702
          %v3989 = vmul.f32 %v3925, %v3760
          %v3990 = vmul.f32 %v3926, %v3356
          %v3991 = vmul.f32 %v3927, %v3414
          %v3992 = vmul.f32 %v3928, %v3472
          %v3993 = vmul.f32 %v3929, %v3530
          %v3994 = vmul.f32 %v3930, %v3588
          %v3995 = vmul.f32 %v3931, %v3646
          %v3996 = vmul.f32 %v3932, %v3704
          %v3997 = vmul.f32 %v3933, %v3762
          %v3998 = vmul.f32 %v3934, %v3359
          %v3999 = vmul.f32 %v3935, %v3417
          %v4000 = vmul.f32 %v3936, %v3475
          %v4001 = vmul.f32 %v3937, %v3533
          %v4002 = vmul.f32 %v3938, %v3591
          %v4003 = vmul.f32 %v3939, %v3649
          %v4004 = vmul.f32 %v3940, %v3707
          %v4005 = vmul.f32 %v3941, %v3765
          %v4006 = vmul.f32 %v3942, %v3361
          %v4007 = vmul.f32 %v3943, %v3419
          %v4008 = vmul.f32 %v3944, %v3477
          %v4009 = vmul.f32 %v3945, %v3535
          %v4010 = vmul.f32 %v3946, %v3593
          %v4011 = vmul.f32 %v3947, %v3651
          %v4012 = vmul.f32 %v3948, %v3709
          %v4013 = vmul.f32 %v3949, %v3767
          %v4014 = vmul.f32 %v3950, %v3364
          %v4015 = vmul.f32 %v3951, %v3422
          %v4016 = vmul.f32 %v3952, %v3480
          %v4017 = vmul.f32 %v3953, %v3538
          %v4018 = vmul.f32 %v3954, %v3596
          %v4019 = vmul.f32 %v3955, %v3654
          %v4020 = vmul.f32 %v3956, %v3712
          %v4021 = vmul.f32 %v3957, %v3770
          %v4022 = vmul.f32 %v3958, %v3366
          %v4023 = vmul.f32 %v3959, %v3424
          %v4024 = vmul.f32 %v3960, %v3482
          %v4025 = vmul.f32 %v3961, %v3540
          %v4026 = vmul.f32 %v3962, %v3598
          %v4027 = vmul.f32 %v3963, %v3656
          %v4028 = vmul.f32 %v3964, %v3714
          %v4029 = vmul.f32 %v3965, %v3772
          %v4030 = vadd.f32 %v3349, %v3966
          %v4031 = vadd.f32 %v3407, %v3967
          %v4032 = vadd.f32 %v3465, %v3968
          %v4033 = vadd.f32 %v3523, %v3969
          %v4034 = vadd.f32 %v3581, %v3970
          %v4035 = vadd.f32 %v3639, %v3971
          %v4036 = vadd.f32 %v3697, %v3972
          %v4037 = vadd.f32 %v3755, %v3973
          %v4038 = vadd.f32 %v3351, %v3974
          %v4039 = vadd.f32 %v3409, %v3975
          %v4040 = vadd.f32 %v3467, %v3976
          %v4041 = vadd.f32 %v3525, %v3977
          %v4042 = vadd.f32 %v3583, %v3978
          %v4043 = vadd.f32 %v3641, %v3979
          %v4044 = vadd.f32 %v3699, %v3980
          %v4045 = vadd.f32 %v3757, %v3981
          %v4046 = vadd.f32 %v3354, %v3982
          %v4047 = vadd.f32 %v3412, %v3983
          %v4048 = vadd.f32 %v3470, %v3984
          %v4049 = vadd.f32 %v3528, %v3985
          %v4050 = vadd.f32 %v3586, %v3986
          %v4051 = vadd.f32 %v3644, %v3987
          %v4052 = vadd.f32 %v3702, %v3988
          %v4053 = vadd.f32 %v3760, %v3989
          %v4054 = vadd.f32 %v3356, %v3990
          %v4055 = vadd.f32 %v3414, %v3991
          %v4056 = vadd.f32 %v3472, %v3992
          %v4057 = vadd.f32 %v3530, %v3993
          %v4058 = vadd.f32 %v3588, %v3994
          %v4059 = vadd.f32 %v3646, %v3995
          %v4060 = vadd.f32 %v3704, %v3996
          %v4061 = vadd.f32 %v3762, %v3997
          %v4062 = vadd.f32 %v3359, %v3998
          %v4063 = vadd.f32 %v3417, %v3999
          %v4064 = vadd.f32 %v3475, %v4000
          %v4065 = vadd.f32 %v3533, %v4001
          %v4066 = vadd.f32 %v3591, %v4002
          %v4067 = vadd.f32 %v3649, %v4003
          %v4068 = vadd.f32 %v3707, %v4004
          %v4069 = vadd.f32 %v3765, %v4005
          %v4070 = vadd.f32 %v3361, %v4006
          %v4071 = vadd.f32 %v3419, %v4007
          %v4072 = vadd.f32 %v3477, %v4008
          %v4073 = vadd.f32 %v3535, %v4009
          %v4074 = vadd.f32 %v3593, %v4010
          %v4075 = vadd.f32 %v3651, %v4011
          %v4076 = vadd.f32 %v3709, %v4012
          %v4077 = vadd.f32 %v3767, %v4013
          %v4078 = vadd.f32 %v3364, %v4014
          %v4079 = vadd.f32 %v3422, %v4015
          %v4080 = vadd.f32 %v3480, %v4016
          %v4081 = vadd.f32 %v3538, %v4017
          %v4082 = vadd.f32 %v3596, %v4018
          %v4083 = vadd.f32 %v3654, %v4019
          %v4084 = vadd.f32 %v3712, %v4020
          %v4085 = vadd.f32 %v3770, %v4021
          %v4086 = vadd.f32 %v3366, %v4022
          %v4087 = vadd.f32 %v3424, %v4023
          %v4088 = vadd.f32 %v3482, %v4024
          %v4089 = vadd.f32 %v3540, %v4025
          %v4090 = vadd.f32 %v3598, %v4026
          %v4091 = vadd.f32 %v3656, %v4027
          %v4092 = vadd.f32 %v3714, %v4028
          %v4093 = vadd.f32 %v3772, %v4029
          %v4094 = vmul.f32 %v4030, 0.7978846
          %v4095 = vmul.f32 %v4031, 0.7978846
          %v4096 = vmul.f32 %v4032, 0.7978846
          %v4097 = vmul.f32 %v4033, 0.7978846
          %v4098 = vmul.f32 %v4034, 0.7978846
          %v4099 = vmul.f32 %v4035, 0.7978846
          %v4100 = vmul.f32 %v4036, 0.7978846
          %v4101 = vmul.f32 %v4037, 0.7978846
          %v4102 = vmul.f32 %v4038, 0.7978846
          %v4103 = vmul.f32 %v4039, 0.7978846
          %v4104 = vmul.f32 %v4040, 0.7978846
          %v4105 = vmul.f32 %v4041, 0.7978846
          %v4106 = vmul.f32 %v4042, 0.7978846
          %v4107 = vmul.f32 %v4043, 0.7978846
          %v4108 = vmul.f32 %v4044, 0.7978846
          %v4109 = vmul.f32 %v4045, 0.7978846
          %v4110 = vmul.f32 %v4046, 0.7978846
          %v4111 = vmul.f32 %v4047, 0.7978846
          %v4112 = vmul.f32 %v4048, 0.7978846
          %v4113 = vmul.f32 %v4049, 0.7978846
          %v4114 = vmul.f32 %v4050, 0.7978846
          %v4115 = vmul.f32 %v4051, 0.7978846
          %v4116 = vmul.f32 %v4052, 0.7978846
          %v4117 = vmul.f32 %v4053, 0.7978846
          %v4118 = vmul.f32 %v4054, 0.7978846
          %v4119 = vmul.f32 %v4055, 0.7978846
          %v4120 = vmul.f32 %v4056, 0.7978846
          %v4121 = vmul.f32 %v4057, 0.7978846
          %v4122 = vmul.f32 %v4058, 0.7978846
          %v4123 = vmul.f32 %v4059, 0.7978846
          %v4124 = vmul.f32 %v4060, 0.7978846
          %v4125 = vmul.f32 %v4061, 0.7978846
          %v4126 = vmul.f32 %v4062, 0.7978846
          %v4127 = vmul.f32 %v4063, 0.7978846
          %v4128 = vmul.f32 %v4064, 0.7978846
          %v4129 = vmul.f32 %v4065, 0.7978846
          %v4130 = vmul.f32 %v4066, 0.7978846
          %v4131 = vmul.f32 %v4067, 0.7978846
          %v4132 = vmul.f32 %v4068, 0.7978846
          %v4133 = vmul.f32 %v4069, 0.7978846
          %v4134 = vmul.f32 %v4070, 0.7978846
          %v4135 = vmul.f32 %v4071, 0.7978846
          %v4136 = vmul.f32 %v4072, 0.7978846
          %v4137 = vmul.f32 %v4073, 0.7978846
          %v4138 = vmul.f32 %v4074, 0.7978846
          %v4139 = vmul.f32 %v4075, 0.7978846
          %v4140 = vmul.f32 %v4076, 0.7978846
          %v4141 = vmul.f32 %v4077, 0.7978846
          %v4142 = vmul.f32 %v4078, 0.7978846
          %v4143 = vmul.f32 %v4079, 0.7978846
          %v4144 = vmul.f32 %v4080, 0.7978846
          %v4145 = vmul.f32 %v4081, 0.7978846
          %v4146 = vmul.f32 %v4082, 0.7978846
          %v4147 = vmul.f32 %v4083, 0.7978846
          %v4148 = vmul.f32 %v4084, 0.7978846
          %v4149 = vmul.f32 %v4085, 0.7978846
          %v4150 = vmul.f32 %v4086, 0.7978846
          %v4151 = vmul.f32 %v4087, 0.7978846
          %v4152 = vmul.f32 %v4088, 0.7978846
          %v4153 = vmul.f32 %v4089, 0.7978846
          %v4154 = vmul.f32 %v4090, 0.7978846
          %v4155 = vmul.f32 %v4091, 0.7978846
          %v4156 = vmul.f32 %v4092, 0.7978846
          %v4157 = vmul.f32 %v4093, 0.7978846
          %v4158 = vtanh.pop %v4094
          %v4159 = vtanh.pop %v4095
          %v4160 = vtanh.pop %v4096
          %v4161 = vtanh.pop %v4097
          %v4162 = vtanh.pop %v4098
          %v4163 = vtanh.pop %v4099
          %v4164 = vtanh.pop %v4100
          %v4165 = vtanh.pop %v4101
          %v4166 = vtanh.pop %v4102
          %v4167 = vtanh.pop %v4103
          %v4168 = vtanh.pop %v4104
          %v4169 = vtanh.pop %v4105
          %v4170 = vtanh.pop %v4106
          %v4171 = vtanh.pop %v4107
          %v4172 = vtanh.pop %v4108
          %v4173 = vtanh.pop %v4109
          %v4174 = vtanh.pop %v4110
          %v4175 = vtanh.pop %v4111
          %v4176 = vtanh.pop %v4112
          %v4177 = vtanh.pop %v4113
          %v4178 = vtanh.pop %v4114
          %v4179 = vtanh.pop %v4115
          %v4180 = vtanh.pop %v4116
          %v4181 = vtanh.pop %v4117
          %v4182 = vtanh.pop %v4118
          %v4183 = vtanh.pop %v4119
          %v4184 = vtanh.pop %v4120
          %v4185 = vtanh.pop %v4121
          %v4186 = vtanh.pop %v4122
          %v4187 = vtanh.pop %v4123
          %v4188 = vtanh.pop %v4124
          %v4189 = vtanh.pop %v4125
          %v4190 = vtanh.pop %v4126
          %v4191 = vtanh.pop %v4127
          %v4192 = vtanh.pop %v4128
          %v4193 = vtanh.pop %v4129
          %v4194 = vtanh.pop %v4130
          %v4195 = vtanh.pop %v4131
          %v4196 = vtanh.pop %v4132
          %v4197 = vtanh.pop %v4133
          %v4198 = vtanh.pop %v4134
          %v4199 = vtanh.pop %v4135
          %v4200 = vtanh.pop %v4136
          %v4201 = vtanh.pop %v4137
          %v4202 = vtanh.pop %v4138
          %v4203 = vtanh.pop %v4139
          %v4204 = vtanh.pop %v4140
          %v4205 = vtanh.pop %v4141
          %v4206 = vtanh.pop %v4142
          %v4207 = vtanh.pop %v4143
          %v4208 = vtanh.pop %v4144
          %v4209 = vtanh.pop %v4145
          %v4210 = vtanh.pop %v4146
          %v4211 = vtanh.pop %v4147
          %v4212 = vtanh.pop %v4148
          %v4213 = vtanh.pop %v4149
          %v4214 = vtanh.pop %v4150
          %v4215 = vtanh.pop %v4151
          %v4216 = vtanh.pop %v4152
          %v4217 = vtanh.pop %v4153
          %v4218 = vtanh.pop %v4154
          %v4219 = vtanh.pop %v4155
          %v4220 = vtanh.pop %v4156
          %v4221 = vtanh.pop %v4157
          %v4222 = vadd.f32 %v4158, 1.0
          %v4223 = vadd.f32 %v4159, 1.0
          %v4224 = vadd.f32 %v4160, 1.0
          %v4225 = vadd.f32 %v4161, 1.0
          %v4226 = vadd.f32 %v4162, 1.0
          %v4227 = vadd.f32 %v4163, 1.0
          %v4228 = vadd.f32 %v4164, 1.0
          %v4229 = vadd.f32 %v4165, 1.0
          %v4230 = vadd.f32 %v4166, 1.0
          %v4231 = vadd.f32 %v4167, 1.0
          %v4232 = vadd.f32 %v4168, 1.0
          %v4233 = vadd.f32 %v4169, 1.0
          %v4234 = vadd.f32 %v4170, 1.0
          %v4235 = vadd.f32 %v4171, 1.0
          %v4236 = vadd.f32 %v4172, 1.0
          %v4237 = vadd.f32 %v4173, 1.0
          %v4238 = vadd.f32 %v4174, 1.0
          %v4239 = vadd.f32 %v4175, 1.0
          %v4240 = vadd.f32 %v4176, 1.0
          %v4241 = vadd.f32 %v4177, 1.0
          %v4242 = vadd.f32 %v4178, 1.0
          %v4243 = vadd.f32 %v4179, 1.0
          %v4244 = vadd.f32 %v4180, 1.0
          %v4245 = vadd.f32 %v4181, 1.0
          %v4246 = vadd.f32 %v4182, 1.0
          %v4247 = vadd.f32 %v4183, 1.0
          %v4248 = vadd.f32 %v4184, 1.0
          %v4249 = vadd.f32 %v4185, 1.0
          %v4250 = vadd.f32 %v4186, 1.0
          %v4251 = vadd.f32 %v4187, 1.0
          %v4252 = vadd.f32 %v4188, 1.0
          %v4253 = vadd.f32 %v4189, 1.0
          %v4254 = vadd.f32 %v4190, 1.0
          %v4255 = vadd.f32 %v4191, 1.0
          %v4256 = vadd.f32 %v4192, 1.0
          %v4257 = vadd.f32 %v4193, 1.0
          %v4258 = vadd.f32 %v4194, 1.0
          %v4259 = vadd.f32 %v4195, 1.0
          %v4260 = vadd.f32 %v4196, 1.0
          %v4261 = vadd.f32 %v4197, 1.0
          %v4262 = vadd.f32 %v4198, 1.0
          %v4263 = vadd.f32 %v4199, 1.0
          %v4264 = vadd.f32 %v4200, 1.0
          %v4265 = vadd.f32 %v4201, 1.0
          %v4266 = vadd.f32 %v4202, 1.0
          %v4267 = vadd.f32 %v4203, 1.0
          %v4268 = vadd.f32 %v4204, 1.0
          %v4269 = vadd.f32 %v4205, 1.0
          %v4270 = vadd.f32 %v4206, 1.0
          %v4271 = vadd.f32 %v4207, 1.0
          %v4272 = vadd.f32 %v4208, 1.0
          %v4273 = vadd.f32 %v4209, 1.0
          %v4274 = vadd.f32 %v4210, 1.0
          %v4275 = vadd.f32 %v4211, 1.0
          %v4276 = vadd.f32 %v4212, 1.0
          %v4277 = vadd.f32 %v4213, 1.0
          %v4278 = vadd.f32 %v4214, 1.0
          %v4279 = vadd.f32 %v4215, 1.0
          %v4280 = vadd.f32 %v4216, 1.0
          %v4281 = vadd.f32 %v4217, 1.0
          %v4282 = vadd.f32 %v4218, 1.0
          %v4283 = vadd.f32 %v4219, 1.0
          %v4284 = vadd.f32 %v4220, 1.0
          %v4285 = vadd.f32 %v4221, 1.0
          %v4286 = vmul.f32 %v3774, %v4222
          %v4287 = vmul.f32 %v3775, %v4223
          %v4288 = vmul.f32 %v3776, %v4224
          %v4289 = vmul.f32 %v3777, %v4225
          %v4290 = vmul.f32 %v3778, %v4226
          %v4291 = vmul.f32 %v3779, %v4227
          %v4292 = vmul.f32 %v3780, %v4228
          %v4293 = vmul.f32 %v3781, %v4229
          %v4294 = vmul.f32 %v3782, %v4230
          %v4295 = vmul.f32 %v3783, %v4231
          %v4296 = vmul.f32 %v3784, %v4232
          %v4297 = vmul.f32 %v3785, %v4233
          %v4298 = vmul.f32 %v3786, %v4234
          %v4299 = vmul.f32 %v3787, %v4235
          %v4300 = vmul.f32 %v3788, %v4236
          %v4301 = vmul.f32 %v3789, %v4237
          %v4302 = vmul.f32 %v3790, %v4238
          %v4303 = vmul.f32 %v3791, %v4239
          %v4304 = vmul.f32 %v3792, %v4240
          %v4305 = vmul.f32 %v3793, %v4241
          %v4306 = vmul.f32 %v3794, %v4242
          %v4307 = vmul.f32 %v3795, %v4243
          %v4308 = vmul.f32 %v3796, %v4244
          %v4309 = vmul.f32 %v3797, %v4245
          %v4310 = vmul.f32 %v3798, %v4246
          %v4311 = vmul.f32 %v3799, %v4247
          %v4312 = vmul.f32 %v3800, %v4248
          %v4313 = vmul.f32 %v3801, %v4249
          %v4314 = vmul.f32 %v3802, %v4250
          %v4315 = vmul.f32 %v3803, %v4251
          %v4316 = vmul.f32 %v3804, %v4252
          %v4317 = vmul.f32 %v3805, %v4253
          %v4318 = vmul.f32 %v3806, %v4254
          %v4319 = vmul.f32 %v3807, %v4255
          %v4320 = vmul.f32 %v3808, %v4256
          %v4321 = vmul.f32 %v3809, %v4257
          %v4322 = vmul.f32 %v3810, %v4258
          %v4323 = vmul.f32 %v3811, %v4259
          %v4324 = vmul.f32 %v3812, %v4260
          %v4325 = vmul.f32 %v3813, %v4261
          %v4326 = vmul.f32 %v3814, %v4262
          %v4327 = vmul.f32 %v3815, %v4263
          %v4328 = vmul.f32 %v3816, %v4264
          %v4329 = vmul.f32 %v3817, %v4265
          %v4330 = vmul.f32 %v3818, %v4266
          %v4331 = vmul.f32 %v3819, %v4267
          %v4332 = vmul.f32 %v3820, %v4268
          %v4333 = vmul.f32 %v3821, %v4269
          %v4334 = vmul.f32 %v3822, %v4270
          %v4335 = vmul.f32 %v3823, %v4271
          %v4336 = vmul.f32 %v3824, %v4272
          %v4337 = vmul.f32 %v3825, %v4273
          %v4338 = vmul.f32 %v3826, %v4274
          %v4339 = vmul.f32 %v3827, %v4275
          %v4340 = vmul.f32 %v3828, %v4276
          %v4341 = vmul.f32 %v3829, %v4277
          %v4342 = vmul.f32 %v3830, %v4278
          %v4343 = vmul.f32 %v3831, %v4279
          %v4344 = vmul.f32 %v3832, %v4280
          %v4345 = vmul.f32 %v3833, %v4281
          %v4346 = vmul.f32 %v3834, %v4282
          %v4347 = vmul.f32 %v3835, %v4283
          %v4348 = vmul.f32 %v3836, %v4284
          %v4349 = vmul.f32 %v3837, %v4285
          %v4350 = vpack.c.bf16 %v4294, %v4286
          %v4351 = vpack.c.bf16 %v4295, %v4287
          %v4352 = vpack.c.bf16 %v4296, %v4288
          %v4353 = vpack.c.bf16 %v4297, %v4289
          %v4354 = vpack.c.bf16 %v4298, %v4290
          %v4355 = vpack.c.bf16 %v4299, %v4291
          %v4356 = vpack.c.bf16 %v4300, %v4292
          %v4357 = vpack.c.bf16 %v4301, %v4293
          %v4358 = vpack.c.bf16 %v4310, %v4302
          %v4359 = vpack.c.bf16 %v4311, %v4303
          %v4360 = vpack.c.bf16 %v4312, %v4304
          %v4361 = vpack.c.bf16 %v4313, %v4305
          %v4362 = vpack.c.bf16 %v4314, %v4306
          %v4363 = vpack.c.bf16 %v4315, %v4307
          %v4364 = vpack.c.bf16 %v4316, %v4308
          %v4365 = vpack.c.bf16 %v4317, %v4309
          %v4366 = vpack.c.bf16 %v4326, %v4318
          %v4367 = vpack.c.bf16 %v4327, %v4319
          %v4368 = vpack.c.bf16 %v4328, %v4320
          %v4369 = vpack.c.bf16 %v4329, %v4321
          %v4370 = vpack.c.bf16 %v4330, %v4322
          %v4371 = vpack.c.bf16 %v4331, %v4323
          %v4372 = vpack.c.bf16 %v4332, %v4324
          %v4373 = vpack.c.bf16 %v4333, %v4325
          %v4374 = vpack.c.bf16 %v4342, %v4334
          %v4375 = vpack.c.bf16 %v4343, %v4335
          %v4376 = vpack.c.bf16 %v4344, %v4336
          %v4377 = vpack.c.bf16 %v4345, %v4337
          %v4378 = vpack.c.bf16 %v4346, %v4338
          %v4379 = vpack.c.bf16 %v4347, %v4339
          %v4380 = vpack.c.bf16 %v4348, %v4340
          %v4381 = vpack.c.bf16 %v4349, %v4341
          %v4382 = vld [vmem:[#allocation21] sm:$0xff]
          %v4383 = vld [vmem:[#allocation21 + $0x8] sm:$0xff]
          %v4384 = vld [vmem:[#allocation21 + $0x10] sm:$0xff]
          %v4385 = vld [vmem:[#allocation21 + $0x18] sm:$0xff]
          %v4386 = vld [vmem:[#allocation21 + $0x20] sm:$0xff]
          %v4387 = vld [vmem:[#allocation21 + $0x28] sm:$0xff]
          %v4388 = vld [vmem:[#allocation21 + $0x30] sm:$0xff]
          %v4389 = vld [vmem:[#allocation21 + $0x38] sm:$0xff]
          %v4390 = vld [vmem:[#allocation21 + $0x40] sm:$0xff]
          %v4391 = vld [vmem:[#allocation21 + $0x48] sm:$0xff]
          %v4392 = vld [vmem:[#allocation21 + $0x50] sm:$0xff]
          %v4393 = vld [vmem:[#allocation21 + $0x58] sm:$0xff]
          %v4394 = vld [vmem:[#allocation21 + $0x60] sm:$0xff]
          %v4395 = vld [vmem:[#allocation21 + $0x68] sm:$0xff]
          %v4396 = vld [vmem:[#allocation21 + $0x70] sm:$0xff]
          %v4397 = vld [vmem:[#allocation21 + $0x78] sm:$0xff]
          %v4398 = vld [vmem:[#allocation21 + $0x80] sm:$0xff]
          %v4399 = vld [vmem:[#allocation21 + $0x88] sm:$0xff]
          %v4400 = vld [vmem:[#allocation21 + $0x90] sm:$0xff]
          %v4401 = vld [vmem:[#allocation21 + $0x98] sm:$0xff]
          %v4402 = vld [vmem:[#allocation21 + $0xa0] sm:$0xff]
          %v4403 = vld [vmem:[#allocation21 + $0xa8] sm:$0xff]
          %v4404 = vld [vmem:[#allocation21 + $0xb0] sm:$0xff]
          %v4405 = vld [vmem:[#allocation21 + $0xb8] sm:$0xff]
          %v4406 = vld [vmem:[#allocation21 + $0xc0] sm:$0xff]
          %v4407 = vld [vmem:[#allocation21 + $0xc8] sm:$0xff]
          %v4408 = vld [vmem:[#allocation21 + $0xd0] sm:$0xff]
          %v4409 = vld [vmem:[#allocation21 + $0xd8] sm:$0xff]
          %v4410 = vld [vmem:[#allocation21 + $0xe0] sm:$0xff]
          %v4411 = vld [vmem:[#allocation21 + $0xe8] sm:$0xff]
          %v4412 = vld [vmem:[#allocation21 + $0xf0] sm:$0xff]
          %v4413 = vld [vmem:[#allocation21 + $0xf8] sm:$0xff]
          %v4414 = vld [vmem:[#allocation21 + $0x100] sm:$0xff]
          %v4415 = vld [vmem:[#allocation21 + $0x108] sm:$0xff]
          %v4416 = vld [vmem:[#allocation21 + $0x110] sm:$0xff]
          %v4417 = vld [vmem:[#allocation21 + $0x118] sm:$0xff]
          %v4418 = vld [vmem:[#allocation21 + $0x120] sm:$0xff]
          %v4419 = vld [vmem:[#allocation21 + $0x128] sm:$0xff]
          %v4420 = vld [vmem:[#allocation21 + $0x130] sm:$0xff]
          %v4421 = vld [vmem:[#allocation21 + $0x138] sm:$0xff]
          %v4422 = vld [vmem:[#allocation21 + $0x140] sm:$0xff]
          %v4423 = vld [vmem:[#allocation21 + $0x148] sm:$0xff]
          %v4424 = vld [vmem:[#allocation21 + $0x150] sm:$0xff]
          %v4425 = vld [vmem:[#allocation21 + $0x158] sm:$0xff]
          %v4426 = vld [vmem:[#allocation21 + $0x160] sm:$0xff]
          %v4427 = vld [vmem:[#allocation21 + $0x168] sm:$0xff]
          %v4428 = vld [vmem:[#allocation21 + $0x170] sm:$0xff]
          %v4429 = vld [vmem:[#allocation21 + $0x178] sm:$0xff]
          %v4430 = vld [vmem:[#allocation21 + $0x180] sm:$0xff]
          %v4431 = vld [vmem:[#allocation21 + $0x188] sm:$0xff]
          %v4432 = vld [vmem:[#allocation21 + $0x190] sm:$0xff]
          %v4433 = vld [vmem:[#allocation21 + $0x198] sm:$0xff]
          %v4434 = vld [vmem:[#allocation21 + $0x1a0] sm:$0xff]
          %v4435 = vld [vmem:[#allocation21 + $0x1a8] sm:$0xff]
          %v4436 = vld [vmem:[#allocation21 + $0x1b0] sm:$0xff]
          %v4437 = vld [vmem:[#allocation21 + $0x1b8] sm:$0xff]
          %v4438 = vld [vmem:[#allocation21 + $0x1c0] sm:$0xff]
          %v4439 = vld [vmem:[#allocation21 + $0x1c8] sm:$0xff]
          %v4440 = vld [vmem:[#allocation21 + $0x1d0] sm:$0xff]
          %v4441 = vld [vmem:[#allocation21 + $0x1d8] sm:$0xff]
          %v4442 = vld [vmem:[#allocation21 + $0x1e0] sm:$0xff]
          %v4443 = vld [vmem:[#allocation21 + $0x1e8] sm:$0xff]
          %v4444 = vld [vmem:[#allocation21 + $0x1f0] sm:$0xff]
          %v4445 = vld [vmem:[#allocation21 + $0x1f8] sm:$0xff]
          %v4446 = vld [vmem:[#allocation21 + $0x200] sm:$0xff]
          %v4447 = vld [vmem:[#allocation21 + $0x208] sm:$0xff]
          %v4448 = vld [vmem:[#allocation21 + $0x210] sm:$0xff]
          %v4449 = vld [vmem:[#allocation21 + $0x218] sm:$0xff]
          %v4450 = vld [vmem:[#allocation21 + $0x220] sm:$0xff]
          %v4451 = vld [vmem:[#allocation21 + $0x228] sm:$0xff]
          %v4452 = vld [vmem:[#allocation21 + $0x230] sm:$0xff]
          %v4453 = vld [vmem:[#allocation21 + $0x238] sm:$0xff]
          %v4454 = vld [vmem:[#allocation21 + $0x240] sm:$0xff]
          %v4455 = vld [vmem:[#allocation21 + $0x248] sm:$0xff]
          %v4456 = vld [vmem:[#allocation21 + $0x250] sm:$0xff]
          %v4457 = vld [vmem:[#allocation21 + $0x258] sm:$0xff]
          %v4458 = vld [vmem:[#allocation21 + $0x260] sm:$0xff]
          %v4459 = vld [vmem:[#allocation21 + $0x268] sm:$0xff]
          %v4460 = vld [vmem:[#allocation21 + $0x270] sm:$0xff]
          %v4461 = vld [vmem:[#allocation21 + $0x278] sm:$0xff]
          %v4462 = vld [vmem:[#allocation21 + $0x280] sm:$0xff]
          %v4463 = vld [vmem:[#allocation21 + $0x288] sm:$0xff]
          %v4464 = vld [vmem:[#allocation21 + $0x290] sm:$0xff]
          %v4465 = vld [vmem:[#allocation21 + $0x298] sm:$0xff]
          %v4466 = vld [vmem:[#allocation21 + $0x2a0] sm:$0xff]
          %v4467 = vld [vmem:[#allocation21 + $0x2a8] sm:$0xff]
          %v4468 = vld [vmem:[#allocation21 + $0x2b0] sm:$0xff]
          %v4469 = vld [vmem:[#allocation21 + $0x2b8] sm:$0xff]
          %v4470 = vld [vmem:[#allocation21 + $0x2c0] sm:$0xff]
          %v4471 = vld [vmem:[#allocation21 + $0x2c8] sm:$0xff]
          %v4472 = vld [vmem:[#allocation21 + $0x2d0] sm:$0xff]
          %v4473 = vld [vmem:[#allocation21 + $0x2d8] sm:$0xff]
          %v4474 = vld [vmem:[#allocation21 + $0x2e0] sm:$0xff]
          %v4475 = vld [vmem:[#allocation21 + $0x2e8] sm:$0xff]
          %v4476 = vld [vmem:[#allocation21 + $0x2f0] sm:$0xff]
          %v4477 = vld [vmem:[#allocation21 + $0x2f8] sm:$0xff]
          %v4478 = vld [vmem:[#allocation21 + $0x300] sm:$0xff]
          %v4479 = vld [vmem:[#allocation21 + $0x308] sm:$0xff]
          %v4480 = vld [vmem:[#allocation21 + $0x310] sm:$0xff]
          %v4481 = vld [vmem:[#allocation21 + $0x318] sm:$0xff]
          %v4482 = vld [vmem:[#allocation21 + $0x320] sm:$0xff]
          %v4483 = vld [vmem:[#allocation21 + $0x328] sm:$0xff]
          %v4484 = vld [vmem:[#allocation21 + $0x330] sm:$0xff]
          %v4485 = vld [vmem:[#allocation21 + $0x338] sm:$0xff]
          %v4486 = vld [vmem:[#allocation21 + $0x340] sm:$0xff]
          %v4487 = vld [vmem:[#allocation21 + $0x348] sm:$0xff]
          %v4488 = vld [vmem:[#allocation21 + $0x350] sm:$0xff]
          %v4489 = vld [vmem:[#allocation21 + $0x358] sm:$0xff]
          %v4490 = vld [vmem:[#allocation21 + $0x360] sm:$0xff]
          %v4491 = vld [vmem:[#allocation21 + $0x368] sm:$0xff]
          %v4492 = vld [vmem:[#allocation21 + $0x370] sm:$0xff]
          %v4493 = vld [vmem:[#allocation21 + $0x378] sm:$0xff]
          %v4494 = vld [vmem:[#allocation21 + $0x380] sm:$0xff]
          %v4495 = vld [vmem:[#allocation21 + $0x388] sm:$0xff]
          %v4496 = vld [vmem:[#allocation21 + $0x390] sm:$0xff]
          %v4497 = vld [vmem:[#allocation21 + $0x398] sm:$0xff]
          %v4498 = vld [vmem:[#allocation21 + $0x3a0] sm:$0xff]
          %v4499 = vld [vmem:[#allocation21 + $0x3a8] sm:$0xff]
          %v4500 = vld [vmem:[#allocation21 + $0x3b0] sm:$0xff]
          %v4501 = vld [vmem:[#allocation21 + $0x3b8] sm:$0xff]
          %v4502 = vld [vmem:[#allocation21 + $0x3c0] sm:$0xff]
          %v4503 = vld [vmem:[#allocation21 + $0x3c8] sm:$0xff]
          %v4504 = vld [vmem:[#allocation21 + $0x3d0] sm:$0xff]
          %v4505 = vld [vmem:[#allocation21 + $0x3d8] sm:$0xff]
          %v4506 = vld [vmem:[#allocation21 + $0x3e0] sm:$0xff]
          %v4507 = vld [vmem:[#allocation21 + $0x3e8] sm:$0xff]
          %v4508 = vld [vmem:[#allocation21 + $0x3f0] sm:$0xff]
          %v4509 = vld [vmem:[#allocation21 + $0x3f8] sm:$0xff]
          %v4510 = vld [vmem:[%s12] sm:$0x3]
          %v4512 = vperm.slane %v4510, 0
          %v4513 = vperm.slane %v4510, 1
          %v4644 = vunpack.c.l.b16 %v4382
          %v4645 = vunpack.c.h.b16 %v4382
          %v4646 = vunpack.c.l.b16 %v4383
          %v4647 = vunpack.c.h.b16 %v4383
          %v4648 = vunpack.c.l.b16 %v4384
          %v4649 = vunpack.c.h.b16 %v4384
          %v4650 = vunpack.c.l.b16 %v4385
          %v4651 = vunpack.c.h.b16 %v4385
          %v4652 = vunpack.c.l.b16 %v4386
          %v4653 = vunpack.c.h.b16 %v4386
          %v4654 = vunpack.c.l.b16 %v4387
          %v4655 = vunpack.c.h.b16 %v4387
          %v4656 = vunpack.c.l.b16 %v4388
          %v4657 = vunpack.c.h.b16 %v4388
          %v4658 = vunpack.c.l.b16 %v4389
          %v4659 = vunpack.c.h.b16 %v4389
          %v4660 = vunpack.c.l.b16 %v4390
          %v4661 = vunpack.c.h.b16 %v4390
          %v4662 = vunpack.c.l.b16 %v4391
          %v4663 = vunpack.c.h.b16 %v4391
          %v4664 = vunpack.c.l.b16 %v4392
          %v4665 = vunpack.c.h.b16 %v4392
          %v4666 = vunpack.c.l.b16 %v4393
          %v4667 = vunpack.c.h.b16 %v4393
          %v4668 = vunpack.c.l.b16 %v4394
          %v4669 = vunpack.c.h.b16 %v4394
          %v4670 = vunpack.c.l.b16 %v4395
          %v4671 = vunpack.c.h.b16 %v4395
          %v4672 = vunpack.c.l.b16 %v4396
          %v4673 = vunpack.c.h.b16 %v4396
          %v4674 = vunpack.c.l.b16 %v4397
          %v4675 = vunpack.c.h.b16 %v4397
          %v4676 = vunpack.c.l.b16 %v4398
          %v4677 = vunpack.c.h.b16 %v4398
          %v4678 = vunpack.c.l.b16 %v4399
          %v4679 = vunpack.c.h.b16 %v4399
          %v4680 = vunpack.c.l.b16 %v4400
          %v4681 = vunpack.c.h.b16 %v4400
          %v4682 = vunpack.c.l.b16 %v4401
          %v4683 = vunpack.c.h.b16 %v4401
          %v4684 = vunpack.c.l.b16 %v4402
          %v4685 = vunpack.c.h.b16 %v4402
          %v4686 = vunpack.c.l.b16 %v4403
          %v4687 = vunpack.c.h.b16 %v4403
          %v4688 = vunpack.c.l.b16 %v4404
          %v4689 = vunpack.c.h.b16 %v4404
          %v4690 = vunpack.c.l.b16 %v4405
          %v4691 = vunpack.c.h.b16 %v4405
          %v4692 = vunpack.c.l.b16 %v4406
          %v4693 = vunpack.c.h.b16 %v4406
          %v4694 = vunpack.c.l.b16 %v4407
          %v4695 = vunpack.c.h.b16 %v4407
          %v4696 = vunpack.c.l.b16 %v4408
          %v4697 = vunpack.c.h.b16 %v4408
          %v4698 = vunpack.c.l.b16 %v4409
          %v4699 = vunpack.c.h.b16 %v4409
          %v4700 = vunpack.c.l.b16 %v4410
          %v4701 = vunpack.c.h.b16 %v4410
          %v4702 = vunpack.c.l.b16 %v4411
          %v4703 = vunpack.c.h.b16 %v4411
          %v4704 = vunpack.c.l.b16 %v4412
          %v4705 = vunpack.c.h.b16 %v4412
          %v4706 = vunpack.c.l.b16 %v4413
          %v4707 = vunpack.c.h.b16 %v4413
          %v4708 = vunpack.c.l.b16 %v4414
          %v4709 = vunpack.c.h.b16 %v4414
          %v4710 = vunpack.c.l.b16 %v4415
          %v4711 = vunpack.c.h.b16 %v4415
          %v4712 = vunpack.c.l.b16 %v4416
          %v4713 = vunpack.c.h.b16 %v4416
          %v4714 = vunpack.c.l.b16 %v4417
          %v4715 = vunpack.c.h.b16 %v4417
          %v4716 = vunpack.c.l.b16 %v4418
          %v4717 = vunpack.c.h.b16 %v4418
          %v4718 = vunpack.c.l.b16 %v4419
          %v4719 = vunpack.c.h.b16 %v4419
          %v4720 = vunpack.c.l.b16 %v4420
          %v4721 = vunpack.c.h.b16 %v4420
          %v4722 = vunpack.c.l.b16 %v4421
          %v4723 = vunpack.c.h.b16 %v4421
          %v4724 = vunpack.c.l.b16 %v4422
          %v4725 = vunpack.c.h.b16 %v4422
          %v4726 = vunpack.c.l.b16 %v4423
          %v4727 = vunpack.c.h.b16 %v4423
          %v4728 = vunpack.c.l.b16 %v4424
          %v4729 = vunpack.c.h.b16 %v4424
          %v4730 = vunpack.c.l.b16 %v4425
          %v4731 = vunpack.c.h.b16 %v4425
          %v4732 = vunpack.c.l.b16 %v4426
          %v4733 = vunpack.c.h.b16 %v4426
          %v4734 = vunpack.c.l.b16 %v4427
          %v4735 = vunpack.c.h.b16 %v4427
          %v4736 = vunpack.c.l.b16 %v4428
          %v4737 = vunpack.c.h.b16 %v4428
          %v4738 = vunpack.c.l.b16 %v4429
          %v4739 = vunpack.c.h.b16 %v4429
          %v4740 = vunpack.c.l.b16 %v4430
          %v4741 = vunpack.c.h.b16 %v4430
          %v4742 = vunpack.c.l.b16 %v4431
          %v4743 = vunpack.c.h.b16 %v4431
          %v4744 = vunpack.c.l.b16 %v4432
          %v4745 = vunpack.c.h.b16 %v4432
          %v4746 = vunpack.c.l.b16 %v4433
          %v4747 = vunpack.c.h.b16 %v4433
          %v4748 = vunpack.c.l.b16 %v4434
          %v4749 = vunpack.c.h.b16 %v4434
          %v4750 = vunpack.c.l.b16 %v4435
          %v4751 = vunpack.c.h.b16 %v4435
          %v4752 = vunpack.c.l.b16 %v4436
          %v4753 = vunpack.c.h.b16 %v4436
          %v4754 = vunpack.c.l.b16 %v4437
          %v4755 = vunpack.c.h.b16 %v4437
          %v4756 = vunpack.c.l.b16 %v4438
          %v4757 = vunpack.c.h.b16 %v4438
          %v4758 = vunpack.c.l.b16 %v4439
          %v4759 = vunpack.c.h.b16 %v4439
          %v4760 = vunpack.c.l.b16 %v4440
          %v4761 = vunpack.c.h.b16 %v4440
          %v4762 = vunpack.c.l.b16 %v4441
          %v4763 = vunpack.c.h.b16 %v4441
          %v4764 = vunpack.c.l.b16 %v4442
          %v4765 = vunpack.c.h.b16 %v4442
          %v4766 = vunpack.c.l.b16 %v4443
          %v4767 = vunpack.c.h.b16 %v4443
          %v4768 = vunpack.c.l.b16 %v4444
          %v4769 = vunpack.c.h.b16 %v4444
          %v4770 = vunpack.c.l.b16 %v4445
          %v4771 = vunpack.c.h.b16 %v4445
          %v4772 = vunpack.c.l.b16 %v4446
          %v4773 = vunpack.c.h.b16 %v4446
          %v4774 = vunpack.c.l.b16 %v4447
          %v4775 = vunpack.c.h.b16 %v4447
          %v4776 = vunpack.c.l.b16 %v4448
          %v4777 = vunpack.c.h.b16 %v4448
          %v4778 = vunpack.c.l.b16 %v4449
          %v4779 = vunpack.c.h.b16 %v4449
          %v4780 = vunpack.c.l.b16 %v4450
          %v4781 = vunpack.c.h.b16 %v4450
          %v4782 = vunpack.c.l.b16 %v4451
          %v4783 = vunpack.c.h.b16 %v4451
          %v4784 = vunpack.c.l.b16 %v4452
          %v4785 = vunpack.c.h.b16 %v4452
          %v4786 = vunpack.c.l.b16 %v4453
          %v4787 = vunpack.c.h.b16 %v4453
          %v4788 = vunpack.c.l.b16 %v4454
          %v4789 = vunpack.c.h.b16 %v4454
          %v4790 = vunpack.c.l.b16 %v4455
          %v4791 = vunpack.c.h.b16 %v4455
          %v4792 = vunpack.c.l.b16 %v4456
          %v4793 = vunpack.c.h.b16 %v4456
          %v4794 = vunpack.c.l.b16 %v4457
          %v4795 = vunpack.c.h.b16 %v4457
          %v4796 = vunpack.c.l.b16 %v4458
          %v4797 = vunpack.c.h.b16 %v4458
          %v4798 = vunpack.c.l.b16 %v4459
          %v4799 = vunpack.c.h.b16 %v4459
          %v4800 = vunpack.c.l.b16 %v4460
          %v4801 = vunpack.c.h.b16 %v4460
          %v4802 = vunpack.c.l.b16 %v4461
          %v4803 = vunpack.c.h.b16 %v4461
          %v4804 = vunpack.c.l.b16 %v4462
          %v4805 = vunpack.c.h.b16 %v4462
          %v4806 = vunpack.c.l.b16 %v4463
          %v4807 = vunpack.c.h.b16 %v4463
          %v4808 = vunpack.c.l.b16 %v4464
          %v4809 = vunpack.c.h.b16 %v4464
          %v4810 = vunpack.c.l.b16 %v4465
          %v4811 = vunpack.c.h.b16 %v4465
          %v4812 = vunpack.c.l.b16 %v4466
          %v4813 = vunpack.c.h.b16 %v4466
          %v4814 = vunpack.c.l.b16 %v4467
          %v4815 = vunpack.c.h.b16 %v4467
          %v4816 = vunpack.c.l.b16 %v4468
          %v4817 = vunpack.c.h.b16 %v4468
          %v4818 = vunpack.c.l.b16 %v4469
          %v4819 = vunpack.c.h.b16 %v4469
          %v4820 = vunpack.c.l.b16 %v4470
          %v4821 = vunpack.c.h.b16 %v4470
          %v4822 = vunpack.c.l.b16 %v4471
          %v4823 = vunpack.c.h.b16 %v4471
          %v4824 = vunpack.c.l.b16 %v4472
          %v4825 = vunpack.c.h.b16 %v4472
          %v4826 = vunpack.c.l.b16 %v4473
          %v4827 = vunpack.c.h.b16 %v4473
          %v4828 = vunpack.c.l.b16 %v4474
          %v4829 = vunpack.c.h.b16 %v4474
          %v4830 = vunpack.c.l.b16 %v4475
          %v4831 = vunpack.c.h.b16 %v4475
          %v4832 = vunpack.c.l.b16 %v4476
          %v4833 = vunpack.c.h.b16 %v4476
          %v4834 = vunpack.c.l.b16 %v4477
          %v4835 = vunpack.c.h.b16 %v4477
          %v4836 = vunpack.c.l.b16 %v4478
          %v4837 = vunpack.c.h.b16 %v4478
          %v4838 = vunpack.c.l.b16 %v4479
          %v4839 = vunpack.c.h.b16 %v4479
          %v4840 = vunpack.c.l.b16 %v4480
          %v4841 = vunpack.c.h.b16 %v4480
          %v4842 = vunpack.c.l.b16 %v4481
          %v4843 = vunpack.c.h.b16 %v4481
          %v4844 = vunpack.c.l.b16 %v4482
          %v4845 = vunpack.c.h.b16 %v4482
          %v4846 = vunpack.c.l.b16 %v4483
          %v4847 = vunpack.c.h.b16 %v4483
          %v4848 = vunpack.c.l.b16 %v4484
          %v4849 = vunpack.c.h.b16 %v4484
          %v4850 = vunpack.c.l.b16 %v4485
          %v4851 = vunpack.c.h.b16 %v4485
          %v4852 = vunpack.c.l.b16 %v4486
          %v4853 = vunpack.c.h.b16 %v4486
          %v4854 = vunpack.c.l.b16 %v4487
          %v4855 = vunpack.c.h.b16 %v4487
          %v4856 = vunpack.c.l.b16 %v4488
          %v4857 = vunpack.c.h.b16 %v4488
          %v4858 = vunpack.c.l.b16 %v4489
          %v4859 = vunpack.c.h.b16 %v4489
          %v4860 = vunpack.c.l.b16 %v4490
          %v4861 = vunpack.c.h.b16 %v4490
          %v4862 = vunpack.c.l.b16 %v4491
          %v4863 = vunpack.c.h.b16 %v4491
          %v4864 = vunpack.c.l.b16 %v4492
          %v4865 = vunpack.c.h.b16 %v4492
          %v4866 = vunpack.c.l.b16 %v4493
          %v4867 = vunpack.c.h.b16 %v4493
          %v4868 = vunpack.c.l.b16 %v4494
          %v4869 = vunpack.c.h.b16 %v4494
          %v4870 = vunpack.c.l.b16 %v4495
          %v4871 = vunpack.c.h.b16 %v4495
          %v4872 = vunpack.c.l.b16 %v4496
          %v4873 = vunpack.c.h.b16 %v4496
          %v4874 = vunpack.c.l.b16 %v4497
          %v4875 = vunpack.c.h.b16 %v4497
          %v4876 = vunpack.c.l.b16 %v4498
          %v4877 = vunpack.c.h.b16 %v4498
          %v4878 = vunpack.c.l.b16 %v4499
          %v4879 = vunpack.c.h.b16 %v4499
          %v4880 = vunpack.c.l.b16 %v4500
          %v4881 = vunpack.c.h.b16 %v4500
          %v4882 = vunpack.c.l.b16 %v4501
          %v4883 = vunpack.c.h.b16 %v4501
          %v4884 = vunpack.c.l.b16 %v4502
          %v4885 = vunpack.c.h.b16 %v4502
          %v4886 = vunpack.c.l.b16 %v4503
          %v4887 = vunpack.c.h.b16 %v4503
          %v4888 = vunpack.c.l.b16 %v4504
          %v4889 = vunpack.c.h.b16 %v4504
          %v4890 = vunpack.c.l.b16 %v4505
          %v4891 = vunpack.c.h.b16 %v4505
          %v4892 = vunpack.c.l.b16 %v4506
          %v4893 = vunpack.c.h.b16 %v4506
          %v4894 = vunpack.c.l.b16 %v4507
          %v4895 = vunpack.c.h.b16 %v4507
          %v4896 = vunpack.c.l.b16 %v4508
          %v4897 = vunpack.c.h.b16 %v4508
          %v4898 = vunpack.c.l.b16 %v4509
          %v4899 = vunpack.c.h.b16 %v4509
          %v4900 = vpack.c.b16 %v4646, %v4644
          %v4901 = vpack.c.b16 %v4647, %v4645
          %v4902 = vpack.c.b16 %v4650, %v4648
          %v4903 = vpack.c.b16 %v4651, %v4649
          %v4904 = vpack.c.b16 %v4654, %v4652
          %v4905 = vpack.c.b16 %v4655, %v4653
          %v4906 = vpack.c.b16 %v4658, %v4656
          %v4907 = vpack.c.b16 %v4659, %v4657
          %v4908 = vpack.c.b16 %v4662, %v4660
          %v4909 = vpack.c.b16 %v4663, %v4661
          %v4910 = vpack.c.b16 %v4666, %v4664
          %v4911 = vpack.c.b16 %v4667, %v4665
          %v4912 = vpack.c.b16 %v4670, %v4668
          %v4913 = vpack.c.b16 %v4671, %v4669
          %v4914 = vpack.c.b16 %v4674, %v4672
          %v4915 = vpack.c.b16 %v4675, %v4673
          %v4916 = vpack.c.b16 %v4678, %v4676
          %v4917 = vpack.c.b16 %v4679, %v4677
          %v4918 = vpack.c.b16 %v4682, %v4680
          %v4919 = vpack.c.b16 %v4683, %v4681
          %v4920 = vpack.c.b16 %v4686, %v4684
          %v4921 = vpack.c.b16 %v4687, %v4685
          %v4922 = vpack.c.b16 %v4690, %v4688
          %v4923 = vpack.c.b16 %v4691, %v4689
          %v4924 = vpack.c.b16 %v4694, %v4692
          %v4925 = vpack.c.b16 %v4695, %v4693
          %v4926 = vpack.c.b16 %v4698, %v4696
          %v4927 = vpack.c.b16 %v4699, %v4697
          %v4928 = vpack.c.b16 %v4702, %v4700
          %v4929 = vpack.c.b16 %v4703, %v4701
          %v4930 = vpack.c.b16 %v4706, %v4704
          %v4931 = vpack.c.b16 %v4707, %v4705
          %v4932 = vpack.c.b16 %v4710, %v4708
          %v4933 = vpack.c.b16 %v4711, %v4709
          %v4934 = vpack.c.b16 %v4714, %v4712
          %v4935 = vpack.c.b16 %v4715, %v4713
          %v4936 = vpack.c.b16 %v4718, %v4716
          %v4937 = vpack.c.b16 %v4719, %v4717
          %v4938 = vpack.c.b16 %v4722, %v4720
          %v4939 = vpack.c.b16 %v4723, %v4721
          %v4940 = vpack.c.b16 %v4726, %v4724
          %v4941 = vpack.c.b16 %v4727, %v4725
          %v4942 = vpack.c.b16 %v4730, %v4728
          %v4943 = vpack.c.b16 %v4731, %v4729
          %v4944 = vpack.c.b16 %v4734, %v4732
          %v4945 = vpack.c.b16 %v4735, %v4733
          %v4946 = vpack.c.b16 %v4738, %v4736
          %v4947 = vpack.c.b16 %v4739, %v4737
          %v4948 = vpack.c.b16 %v4742, %v4740
          %v4949 = vpack.c.b16 %v4743, %v4741
          %v4950 = vpack.c.b16 %v4746, %v4744
          %v4951 = vpack.c.b16 %v4747, %v4745
          %v4952 = vpack.c.b16 %v4750, %v4748
          %v4953 = vpack.c.b16 %v4751, %v4749
          %v4954 = vpack.c.b16 %v4754, %v4752
          %v4955 = vpack.c.b16 %v4755, %v4753
          %v4956 = vpack.c.b16 %v4758, %v4756
          %v4957 = vpack.c.b16 %v4759, %v4757
          %v4958 = vpack.c.b16 %v4762, %v4760
          %v4959 = vpack.c.b16 %v4763, %v4761
          %v4960 = vpack.c.b16 %v4766, %v4764
          %v4961 = vpack.c.b16 %v4767, %v4765
          %v4962 = vpack.c.b16 %v4770, %v4768
          %v4963 = vpack.c.b16 %v4771, %v4769
          %v4964 = vpack.c.b16 %v4774, %v4772
          %v4965 = vpack.c.b16 %v4775, %v4773
          %v4966 = vpack.c.b16 %v4778, %v4776
          %v4967 = vpack.c.b16 %v4779, %v4777
          %v4968 = vpack.c.b16 %v4782, %v4780
          %v4969 = vpack.c.b16 %v4783, %v4781
          %v4970 = vpack.c.b16 %v4786, %v4784
          %v4971 = vpack.c.b16 %v4787, %v4785
          %v4972 = vpack.c.b16 %v4790, %v4788
          %v4973 = vpack.c.b16 %v4791, %v4789
          %v4974 = vpack.c.b16 %v4794, %v4792
          %v4975 = vpack.c.b16 %v4795, %v4793
          %v4976 = vpack.c.b16 %v4798, %v4796
          %v4977 = vpack.c.b16 %v4799, %v4797
          %v4978 = vpack.c.b16 %v4802, %v4800
          %v4979 = vpack.c.b16 %v4803, %v4801
          %v4980 = vpack.c.b16 %v4806, %v4804
          %v4981 = vpack.c.b16 %v4807, %v4805
          %v4982 = vpack.c.b16 %v4810, %v4808
          %v4983 = vpack.c.b16 %v4811, %v4809
          %v4984 = vpack.c.b16 %v4814, %v4812
          %v4985 = vpack.c.b16 %v4815, %v4813
          %v4986 = vpack.c.b16 %v4818, %v4816
          %v4987 = vpack.c.b16 %v4819, %v4817
          %v4988 = vpack.c.b16 %v4822, %v4820
          %v4989 = vpack.c.b16 %v4823, %v4821
          %v4990 = vpack.c.b16 %v4826, %v4824
          %v4991 = vpack.c.b16 %v4827, %v4825
          %v4992 = vpack.c.b16 %v4830, %v4828
          %v4993 = vpack.c.b16 %v4831, %v4829
          %v4994 = vpack.c.b16 %v4834, %v4832
          %v4995 = vpack.c.b16 %v4835, %v4833
          %v4996 = vpack.c.b16 %v4838, %v4836
          %v4997 = vpack.c.b16 %v4839, %v4837
          %v4998 = vpack.c.b16 %v4842, %v4840
          %v4999 = vpack.c.b16 %v4843, %v4841
          %v5000 = vpack.c.b16 %v4846, %v4844
          %v5001 = vpack.c.b16 %v4847, %v4845
          %v5002 = vpack.c.b16 %v4850, %v4848
          %v5003 = vpack.c.b16 %v4851, %v4849
          %v5004 = vpack.c.b16 %v4854, %v4852
          %v5005 = vpack.c.b16 %v4855, %v4853
          %v5006 = vpack.c.b16 %v4858, %v4856
          %v5007 = vpack.c.b16 %v4859, %v4857
          %v5008 = vpack.c.b16 %v4862, %v4860
          %v5009 = vpack.c.b16 %v4863, %v4861
          %v5010 = vpack.c.b16 %v4866, %v4864
          %v5011 = vpack.c.b16 %v4867, %v4865
          %v5012 = vpack.c.b16 %v4870, %v4868
          %v5013 = vpack.c.b16 %v4871, %v4869
          %v5014 = vpack.c.b16 %v4874, %v4872
          %v5015 = vpack.c.b16 %v4875, %v4873
          %v5016 = vpack.c.b16 %v4878, %v4876
          %v5017 = vpack.c.b16 %v4879, %v4877
          %v5018 = vpack.c.b16 %v4882, %v4880
          %v5019 = vpack.c.b16 %v4883, %v4881
          %v5020 = vpack.c.b16 %v4886, %v4884
          %v5021 = vpack.c.b16 %v4887, %v4885
          %v5022 = vpack.c.b16 %v4890, %v4888
          %v5023 = vpack.c.b16 %v4891, %v4889
          %v5024 = vpack.c.b16 %v4894, %v4892
          %v5025 = vpack.c.b16 %v4895, %v4893
          %v5026 = vpack.c.b16 %v4898, %v4896
          %v5027 = vpack.c.b16 %v4899, %v4897
          %5156 = vmatpush.bf16.msra.mxu0 %v4914
          %5157 = vmatpush.bf16.msra.mxu0 %v4912
          %5158 = vmatpush.bf16.msra.mxu0 %v4910
          %5159 = vmatpush.bf16.msra.mxu0 %v4908
          %5160 = vmatpush.bf16.msra.mxu0 %v4906
          %5161 = vmatpush.bf16.msra.mxu0 %v4904
          %5162 = vmatpush.bf16.msra.mxu0 %v4902
          %5163 = vmatpush.bf16.msra.mxu0 %v4900
          %5164 = vmatmul.bf16.gmra.mxu0 %v4350
          %v5165 = vpop.f32.mrf.mxu0
          %v5166 = vadd.f32 %v4512, %v5165
          %v5167 = vpop.f32.mrf.mxu0
          %v5168 = vadd.f32 %v4512, %v5167
          %5169 = vmatmul.bf16.gmra.mxu0 %v4358
          %v5170 = vpop.f32.mrf.mxu0
          %v5171 = vadd.f32 %v4512, %v5170
          %v5172 = vpop.f32.mrf.mxu0
          %v5173 = vadd.f32 %v4512, %v5172
          %5174 = vmatmul.bf16.gmra.mxu0 %v4366
          %v5175 = vpop.f32.mrf.mxu0
          %v5176 = vadd.f32 %v4512, %v5175
          %v5177 = vpop.f32.mrf.mxu0
          %v5178 = vadd.f32 %v4512, %v5177
          %5179 = vmatmul.bf16.gmra.mxu0 %v4374
          %v5180 = vpop.f32.mrf.mxu0
          %v5181 = vadd.f32 %v4512, %v5180
          %v5182 = vpop.f32.mrf.mxu0
          %v5183 = vadd.f32 %v4512, %v5182
          %5184 = vdwg.mxu0
          %5185 = vmatpush.bf16.msra.mxu0 %v4930
          %5186 = vmatpush.bf16.msra.mxu0 %v4928
          %5187 = vmatpush.bf16.msra.mxu0 %v4926
          %5188 = vmatpush.bf16.msra.mxu0 %v4924
          %5189 = vmatpush.bf16.msra.mxu0 %v4922
          %5190 = vmatpush.bf16.msra.mxu0 %v4920
          %5191 = vmatpush.bf16.msra.mxu0 %v4918
          %5192 = vmatpush.bf16.msra.mxu0 %v4916
          %5193 = vmatmul.bf16.gmra.mxu0 %v4351
          %v5194 = vpop.f32.mrf.mxu0
          %v5195 = vadd.f32 %v5166, %v5194
          %v5196 = vpop.f32.mrf.mxu0
          %v5197 = vadd.f32 %v5168, %v5196
          %5198 = vmatmul.bf16.gmra.mxu0 %v4359
          %v5199 = vpop.f32.mrf.mxu0
          %v5200 = vadd.f32 %v5171, %v5199
          %v5201 = vpop.f32.mrf.mxu0
          %v5202 = vadd.f32 %v5173, %v5201
          %5203 = vmatmul.bf16.gmra.mxu0 %v4367
          %v5204 = vpop.f32.mrf.mxu0
          %v5205 = vadd.f32 %v5176, %v5204
          %v5206 = vpop.f32.mrf.mxu0
          %v5207 = vadd.f32 %v5178, %v5206
          %5208 = vmatmul.bf16.gmra.mxu0 %v4375
          %v5209 = vpop.f32.mrf.mxu0
          %v5210 = vadd.f32 %v5181, %v5209
          %v5211 = vpop.f32.mrf.mxu0
          %v5212 = vadd.f32 %v5183, %v5211
          %5213 = vdwg.mxu0
          %5214 = vmatpush.bf16.msra.mxu0 %v4946
          %5215 = vmatpush.bf16.msra.mxu0 %v4944
          %5216 = vmatpush.bf16.msra.mxu0 %v4942
          %5217 = vmatpush.bf16.msra.mxu0 %v4940
          %5218 = vmatpush.bf16.msra.mxu0 %v4938
          %5219 = vmatpush.bf16.msra.mxu0 %v4936
          %5220 = vmatpush.bf16.msra.mxu0 %v4934
          %5221 = vmatpush.bf16.msra.mxu0 %v4932
          %5222 = vmatmul.bf16.gmra.mxu0 %v4352
          %v5223 = vpop.f32.mrf.mxu0
          %v5224 = vadd.f32 %v5195, %v5223
          %v5225 = vpop.f32.mrf.mxu0
          %v5226 = vadd.f32 %v5197, %v5225
          %5227 = vmatmul.bf16.gmra.mxu0 %v4360
          %v5228 = vpop.f32.mrf.mxu0
          %v5229 = vadd.f32 %v5200, %v5228
          %v5230 = vpop.f32.mrf.mxu0
          %v5231 = vadd.f32 %v5202, %v5230
          %5232 = vmatmul.bf16.gmra.mxu0 %v4368
          %v5233 = vpop.f32.mrf.mxu0
          %v5234 = vadd.f32 %v5205, %v5233
          %v5235 = vpop.f32.mrf.mxu0
          %v5236 = vadd.f32 %v5207, %v5235
          %5237 = vmatmul.bf16.gmra.mxu0 %v4376
          %v5238 = vpop.f32.mrf.mxu0
          %v5239 = vadd.f32 %v5210, %v5238
          %v5240 = vpop.f32.mrf.mxu0
          %v5241 = vadd.f32 %v5212, %v5240
          %5242 = vdwg.mxu0
          %5243 = vmatpush.bf16.msra.mxu0 %v4962
          %5244 = vmatpush.bf16.msra.mxu0 %v4960
          %5245 = vmatpush.bf16.msra.mxu0 %v4958
          %5246 = vmatpush.bf16.msra.mxu0 %v4956
          %5247 = vmatpush.bf16.msra.mxu0 %v4954
          %5248 = vmatpush.bf16.msra.mxu0 %v4952
          %5249 = vmatpush.bf16.msra.mxu0 %v4950
          %5250 = vmatpush.bf16.msra.mxu0 %v4948
          %5251 = vmatmul.bf16.gmra.mxu0 %v4353
          %v5252 = vpop.f32.mrf.mxu0
          %v5253 = vadd.f32 %v5224, %v5252
          %v5254 = vpop.f32.mrf.mxu0
          %v5255 = vadd.f32 %v5226, %v5254
          %5256 = vmatmul.bf16.gmra.mxu0 %v4361
          %v5257 = vpop.f32.mrf.mxu0
          %v5258 = vadd.f32 %v5229, %v5257
          %v5259 = vpop.f32.mrf.mxu0
          %v5260 = vadd.f32 %v5231, %v5259
          %5261 = vmatmul.bf16.gmra.mxu0 %v4369
          %v5262 = vpop.f32.mrf.mxu0
          %v5263 = vadd.f32 %v5234, %v5262
          %v5264 = vpop.f32.mrf.mxu0
          %v5265 = vadd.f32 %v5236, %v5264
          %5266 = vmatmul.bf16.gmra.mxu0 %v4377
          %v5267 = vpop.f32.mrf.mxu0
          %v5268 = vadd.f32 %v5239, %v5267
          %v5269 = vpop.f32.mrf.mxu0
          %v5270 = vadd.f32 %v5241, %v5269
          %5271 = vdwg.mxu0
          %5272 = vmatpush.bf16.msra.mxu0 %v4978
          %5273 = vmatpush.bf16.msra.mxu0 %v4976
          %5274 = vmatpush.bf16.msra.mxu0 %v4974
          %5275 = vmatpush.bf16.msra.mxu0 %v4972
          %5276 = vmatpush.bf16.msra.mxu0 %v4970
          %5277 = vmatpush.bf16.msra.mxu0 %v4968
          %5278 = vmatpush.bf16.msra.mxu0 %v4966
          %5279 = vmatpush.bf16.msra.mxu0 %v4964
          %5280 = vmatmul.bf16.gmra.mxu0 %v4354
          %v5281 = vpop.f32.mrf.mxu0
          %v5282 = vadd.f32 %v5253, %v5281
          %v5283 = vpop.f32.mrf.mxu0
          %v5284 = vadd.f32 %v5255, %v5283
          %5285 = vmatmul.bf16.gmra.mxu0 %v4362
          %v5286 = vpop.f32.mrf.mxu0
          %v5287 = vadd.f32 %v5258, %v5286
          %v5288 = vpop.f32.mrf.mxu0
          %v5289 = vadd.f32 %v5260, %v5288
          %5290 = vmatmul.bf16.gmra.mxu0 %v4370
          %v5291 = vpop.f32.mrf.mxu0
          %v5292 = vadd.f32 %v5263, %v5291
          %v5293 = vpop.f32.mrf.mxu0
          %v5294 = vadd.f32 %v5265, %v5293
          %5295 = vmatmul.bf16.gmra.mxu0 %v4378
          %v5296 = vpop.f32.mrf.mxu0
          %v5297 = vadd.f32 %v5268, %v5296
          %v5298 = vpop.f32.mrf.mxu0
          %v5299 = vadd.f32 %v5270, %v5298
          %5300 = vdwg.mxu0
          %5301 = vmatpush.bf16.msra.mxu0 %v4994
          %5302 = vmatpush.bf16.msra.mxu0 %v4992
          %5303 = vmatpush.bf16.msra.mxu0 %v4990
          %5304 = vmatpush.bf16.msra.mxu0 %v4988
          %5305 = vmatpush.bf16.msra.mxu0 %v4986
          %5306 = vmatpush.bf16.msra.mxu0 %v4984
          %5307 = vmatpush.bf16.msra.mxu0 %v4982
          %5308 = vmatpush.bf16.msra.mxu0 %v4980
          %5309 = vmatmul.bf16.gmra.mxu0 %v4355
          %v5310 = vpop.f32.mrf.mxu0
          %v5311 = vadd.f32 %v5282, %v5310
          %v5312 = vpop.f32.mrf.mxu0
          %v5313 = vadd.f32 %v5284, %v5312
          %5314 = vmatmul.bf16.gmra.mxu0 %v4363
          %v5315 = vpop.f32.mrf.mxu0
          %v5316 = vadd.f32 %v5287, %v5315
          %v5317 = vpop.f32.mrf.mxu0
          %v5318 = vadd.f32 %v5289, %v5317
          %5319 = vmatmul.bf16.gmra.mxu0 %v4371
          %v5320 = vpop.f32.mrf.mxu0
          %v5321 = vadd.f32 %v5292, %v5320
          %v5322 = vpop.f32.mrf.mxu0
          %v5323 = vadd.f32 %v5294, %v5322
          %5324 = vmatmul.bf16.gmra.mxu0 %v4379
          %v5325 = vpop.f32.mrf.mxu0
          %v5326 = vadd.f32 %v5297, %v5325
          %v5327 = vpop.f32.mrf.mxu0
          %v5328 = vadd.f32 %v5299, %v5327
          %5329 = vdwg.mxu0
          %5330 = vmatpush.bf16.msra.mxu0 %v5010
          %5331 = vmatpush.bf16.msra.mxu0 %v5008
          %5332 = vmatpush.bf16.msra.mxu0 %v5006
          %5333 = vmatpush.bf16.msra.mxu0 %v5004
          %5334 = vmatpush.bf16.msra.mxu0 %v5002
          %5335 = vmatpush.bf16.msra.mxu0 %v5000
          %5336 = vmatpush.bf16.msra.mxu0 %v4998
          %5337 = vmatpush.bf16.msra.mxu0 %v4996
          %5338 = vmatmul.bf16.gmra.mxu0 %v4356
          %v5339 = vpop.f32.mrf.mxu0
          %v5340 = vadd.f32 %v5311, %v5339
          %v5341 = vpop.f32.mrf.mxu0
          %v5342 = vadd.f32 %v5313, %v5341
          %5343 = vmatmul.bf16.gmra.mxu0 %v4364
          %v5344 = vpop.f32.mrf.mxu0
          %v5345 = vadd.f32 %v5316, %v5344
          %v5346 = vpop.f32.mrf.mxu0
          %v5347 = vadd.f32 %v5318, %v5346
          %5348 = vmatmul.bf16.gmra.mxu0 %v4372
          %v5349 = vpop.f32.mrf.mxu0
          %v5350 = vadd.f32 %v5321, %v5349
          %v5351 = vpop.f32.mrf.mxu0
          %v5352 = vadd.f32 %v5323, %v5351
          %5353 = vmatmul.bf16.gmra.mxu0 %v4380
          %v5354 = vpop.f32.mrf.mxu0
          %v5355 = vadd.f32 %v5326, %v5354
          %v5356 = vpop.f32.mrf.mxu0
          %v5357 = vadd.f32 %v5328, %v5356
          %5358 = vdwg.mxu0
          %5359 = vmatpush.bf16.msra.mxu0 %v5026
          %5360 = vmatpush.bf16.msra.mxu0 %v5024
          %5361 = vmatpush.bf16.msra.mxu0 %v5022
          %5362 = vmatpush.bf16.msra.mxu0 %v5020
          %5363 = vmatpush.bf16.msra.mxu0 %v5018
          %5364 = vmatpush.bf16.msra.mxu0 %v5016
          %5365 = vmatpush.bf16.msra.mxu0 %v5014
          %5366 = vmatpush.bf16.msra.mxu0 %v5012
          %5367 = vmatmul.bf16.gmra.mxu0 %v4357
          %v5368 = vpop.f32.mrf.mxu0
          %v5369 = vadd.f32 %v5340, %v5368
          %v5370 = vpop.f32.mrf.mxu0
          %v5371 = vadd.f32 %v5342, %v5370
          %5372 = vmatmul.bf16.gmra.mxu0 %v4365
          %v5373 = vpop.f32.mrf.mxu0
          %v5374 = vadd.f32 %v5345, %v5373
          %v5375 = vpop.f32.mrf.mxu0
          %v5376 = vadd.f32 %v5347, %v5375
          %5377 = vmatmul.bf16.gmra.mxu0 %v4373
          %v5378 = vpop.f32.mrf.mxu0
          %v5379 = vadd.f32 %v5350, %v5378
          %v5380 = vpop.f32.mrf.mxu0
          %v5381 = vadd.f32 %v5352, %v5380
          %5382 = vmatmul.bf16.gmra.mxu0 %v4381
          %v5383 = vpop.f32.mrf.mxu0
          %v5384 = vadd.f32 %v5355, %v5383
          %v5385 = vpop.f32.mrf.mxu0
          %v5386 = vadd.f32 %v5357, %v5385
          %5387 = vdwg.mxu0
          %5388 = vmatpush.bf16.msra.mxu0 %v4915
          %5389 = vmatpush.bf16.msra.mxu0 %v4913
          %5390 = vmatpush.bf16.msra.mxu0 %v4911
          %5391 = vmatpush.bf16.msra.mxu0 %v4909
          %5392 = vmatpush.bf16.msra.mxu0 %v4907
          %5393 = vmatpush.bf16.msra.mxu0 %v4905
          %5394 = vmatpush.bf16.msra.mxu0 %v4903
          %5395 = vmatpush.bf16.msra.mxu0 %v4901
          %5396 = vmatmul.bf16.gmra.mxu0 %v4350
          %v5397 = vpop.f32.mrf.mxu0
          %v5398 = vadd.f32 %v4513, %v5397
          %v5399 = vpop.f32.mrf.mxu0
          %v5400 = vadd.f32 %v4513, %v5399
          %5401 = vmatmul.bf16.gmra.mxu0 %v4358
          %v5402 = vpop.f32.mrf.mxu0
          %v5403 = vadd.f32 %v4513, %v5402
          %v5404 = vpop.f32.mrf.mxu0
          %v5405 = vadd.f32 %v4513, %v5404
          %5406 = vmatmul.bf16.gmra.mxu0 %v4366
          %v5407 = vpop.f32.mrf.mxu0
          %v5408 = vadd.f32 %v4513, %v5407
          %v5409 = vpop.f32.mrf.mxu0
          %v5410 = vadd.f32 %v4513, %v5409
          %5411 = vmatmul.bf16.gmra.mxu0 %v4374
          %v5412 = vpop.f32.mrf.mxu0
          %v5413 = vadd.f32 %v4513, %v5412
          %v5414 = vpop.f32.mrf.mxu0
          %v5415 = vadd.f32 %v4513, %v5414
          %5416 = vdwg.mxu0
          %5417 = vmatpush.bf16.msra.mxu0 %v4931
          %5418 = vmatpush.bf16.msra.mxu0 %v4929
          %5419 = vmatpush.bf16.msra.mxu0 %v4927
          %5420 = vmatpush.bf16.msra.mxu0 %v4925
          %5421 = vmatpush.bf16.msra.mxu0 %v4923
          %5422 = vmatpush.bf16.msra.mxu0 %v4921
          %5423 = vmatpush.bf16.msra.mxu0 %v4919
          %5424 = vmatpush.bf16.msra.mxu0 %v4917
          %5425 = vmatmul.bf16.gmra.mxu0 %v4351
          %v5426 = vpop.f32.mrf.mxu0
          %v5427 = vadd.f32 %v5398, %v5426
          %v5428 = vpop.f32.mrf.mxu0
          %v5429 = vadd.f32 %v5400, %v5428
          %5430 = vmatmul.bf16.gmra.mxu0 %v4359
          %v5431 = vpop.f32.mrf.mxu0
          %v5432 = vadd.f32 %v5403, %v5431
          %v5433 = vpop.f32.mrf.mxu0
          %v5434 = vadd.f32 %v5405, %v5433
          %5435 = vmatmul.bf16.gmra.mxu0 %v4367
          %v5436 = vpop.f32.mrf.mxu0
          %v5437 = vadd.f32 %v5408, %v5436
          %v5438 = vpop.f32.mrf.mxu0
          %v5439 = vadd.f32 %v5410, %v5438
          %5440 = vmatmul.bf16.gmra.mxu0 %v4375
          %v5441 = vpop.f32.mrf.mxu0
          %v5442 = vadd.f32 %v5413, %v5441
          %v5443 = vpop.f32.mrf.mxu0
          %v5444 = vadd.f32 %v5415, %v5443
          %5445 = vdwg.mxu0
          %5446 = vmatpush.bf16.msra.mxu0 %v4947
          %5447 = vmatpush.bf16.msra.mxu0 %v4945
          %5448 = vmatpush.bf16.msra.mxu0 %v4943
          %5449 = vmatpush.bf16.msra.mxu0 %v4941
          %5450 = vmatpush.bf16.msra.mxu0 %v4939
          %5451 = vmatpush.bf16.msra.mxu0 %v4937
          %5452 = vmatpush.bf16.msra.mxu0 %v4935
          %5453 = vmatpush.bf16.msra.mxu0 %v4933
          %5454 = vmatmul.bf16.gmra.mxu0 %v4352
          %v5455 = vpop.f32.mrf.mxu0
          %v5456 = vadd.f32 %v5427, %v5455
          %v5457 = vpop.f32.mrf.mxu0
          %v5458 = vadd.f32 %v5429, %v5457
          %5459 = vmatmul.bf16.gmra.mxu0 %v4360
          %v5460 = vpop.f32.mrf.mxu0
          %v5461 = vadd.f32 %v5432, %v5460
          %v5462 = vpop.f32.mrf.mxu0
          %v5463 = vadd.f32 %v5434, %v5462
          %5464 = vmatmul.bf16.gmra.mxu0 %v4368
          %v5465 = vpop.f32.mrf.mxu0
          %v5466 = vadd.f32 %v5437, %v5465
          %v5467 = vpop.f32.mrf.mxu0
          %v5468 = vadd.f32 %v5439, %v5467
          %5469 = vmatmul.bf16.gmra.mxu0 %v4376
          %v5470 = vpop.f32.mrf.mxu0
          %v5471 = vadd.f32 %v5442, %v5470
          %v5472 = vpop.f32.mrf.mxu0
          %v5473 = vadd.f32 %v5444, %v5472
          %5474 = vdwg.mxu0
          %5475 = vmatpush.bf16.msra.mxu0 %v4963
          %5476 = vmatpush.bf16.msra.mxu0 %v4961
          %5477 = vmatpush.bf16.msra.mxu0 %v4959
          %5478 = vmatpush.bf16.msra.mxu0 %v4957
          %5479 = vmatpush.bf16.msra.mxu0 %v4955
          %5480 = vmatpush.bf16.msra.mxu0 %v4953
          %5481 = vmatpush.bf16.msra.mxu0 %v4951
          %5482 = vmatpush.bf16.msra.mxu0 %v4949
          %5483 = vmatmul.bf16.gmra.mxu0 %v4353
          %v5484 = vpop.f32.mrf.mxu0
          %v5485 = vadd.f32 %v5456, %v5484
          %v5486 = vpop.f32.mrf.mxu0
          %v5487 = vadd.f32 %v5458, %v5486
          %5488 = vmatmul.bf16.gmra.mxu0 %v4361
          %v5489 = vpop.f32.mrf.mxu0
          %v5490 = vadd.f32 %v5461, %v5489
          %v5491 = vpop.f32.mrf.mxu0
          %v5492 = vadd.f32 %v5463, %v5491
          %5493 = vmatmul.bf16.gmra.mxu0 %v4369
          %v5494 = vpop.f32.mrf.mxu0
          %v5495 = vadd.f32 %v5466, %v5494
          %v5496 = vpop.f32.mrf.mxu0
          %v5497 = vadd.f32 %v5468, %v5496
          %5498 = vmatmul.bf16.gmra.mxu0 %v4377
          %v5499 = vpop.f32.mrf.mxu0
          %v5500 = vadd.f32 %v5471, %v5499
          %v5501 = vpop.f32.mrf.mxu0
          %v5502 = vadd.f32 %v5473, %v5501
          %5503 = vdwg.mxu0
          %5504 = vmatpush.bf16.msra.mxu0 %v4979
          %5505 = vmatpush.bf16.msra.mxu0 %v4977
          %5506 = vmatpush.bf16.msra.mxu0 %v4975
          %5507 = vmatpush.bf16.msra.mxu0 %v4973
          %5508 = vmatpush.bf16.msra.mxu0 %v4971
          %5509 = vmatpush.bf16.msra.mxu0 %v4969
          %5510 = vmatpush.bf16.msra.mxu0 %v4967
          %5511 = vmatpush.bf16.msra.mxu0 %v4965
          %5512 = vmatmul.bf16.gmra.mxu0 %v4354
          %v5513 = vpop.f32.mrf.mxu0
          %v5514 = vadd.f32 %v5485, %v5513
          %v5515 = vpop.f32.mrf.mxu0
          %v5516 = vadd.f32 %v5487, %v5515
          %5517 = vmatmul.bf16.gmra.mxu0 %v4362
          %v5518 = vpop.f32.mrf.mxu0
          %v5519 = vadd.f32 %v5490, %v5518
          %v5520 = vpop.f32.mrf.mxu0
          %v5521 = vadd.f32 %v5492, %v5520
          %5522 = vmatmul.bf16.gmra.mxu0 %v4370
          %v5523 = vpop.f32.mrf.mxu0
          %v5524 = vadd.f32 %v5495, %v5523
          %v5525 = vpop.f32.mrf.mxu0
          %v5526 = vadd.f32 %v5497, %v5525
          %5527 = vmatmul.bf16.gmra.mxu0 %v4378
          %v5528 = vpop.f32.mrf.mxu0
          %v5529 = vadd.f32 %v5500, %v5528
          %v5530 = vpop.f32.mrf.mxu0
          %v5531 = vadd.f32 %v5502, %v5530
          %5532 = vdwg.mxu0
          %5533 = vmatpush.bf16.msra.mxu0 %v4995
          %5534 = vmatpush.bf16.msra.mxu0 %v4993
          %5535 = vmatpush.bf16.msra.mxu0 %v4991
          %5536 = vmatpush.bf16.msra.mxu0 %v4989
          %5537 = vmatpush.bf16.msra.mxu0 %v4987
          %5538 = vmatpush.bf16.msra.mxu0 %v4985
          %5539 = vmatpush.bf16.msra.mxu0 %v4983
          %5540 = vmatpush.bf16.msra.mxu0 %v4981
          %5541 = vmatmul.bf16.gmra.mxu0 %v4355
          %v5542 = vpop.f32.mrf.mxu0
          %v5543 = vadd.f32 %v5514, %v5542
          %v5544 = vpop.f32.mrf.mxu0
          %v5545 = vadd.f32 %v5516, %v5544
          %5546 = vmatmul.bf16.gmra.mxu0 %v4363
          %v5547 = vpop.f32.mrf.mxu0
          %v5548 = vadd.f32 %v5519, %v5547
          %v5549 = vpop.f32.mrf.mxu0
          %v5550 = vadd.f32 %v5521, %v5549
          %5551 = vmatmul.bf16.gmra.mxu0 %v4371
          %v5552 = vpop.f32.mrf.mxu0
          %v5553 = vadd.f32 %v5524, %v5552
          %v5554 = vpop.f32.mrf.mxu0
          %v5555 = vadd.f32 %v5526, %v5554
          %5556 = vmatmul.bf16.gmra.mxu0 %v4379
          %v5557 = vpop.f32.mrf.mxu0
          %v5558 = vadd.f32 %v5529, %v5557
          %v5559 = vpop.f32.mrf.mxu0
          %v5560 = vadd.f32 %v5531, %v5559
          %5561 = vdwg.mxu0
          %5562 = vmatpush.bf16.msra.mxu0 %v5011
          %5563 = vmatpush.bf16.msra.mxu0 %v5009
          %5564 = vmatpush.bf16.msra.mxu0 %v5007
          %5565 = vmatpush.bf16.msra.mxu0 %v5005
          %5566 = vmatpush.bf16.msra.mxu0 %v5003
          %5567 = vmatpush.bf16.msra.mxu0 %v5001
          %5568 = vmatpush.bf16.msra.mxu0 %v4999
          %5569 = vmatpush.bf16.msra.mxu0 %v4997
          %5570 = vmatmul.bf16.gmra.mxu0 %v4356
          %v5571 = vpop.f32.mrf.mxu0
          %v5572 = vadd.f32 %v5543, %v5571
          %v5573 = vpop.f32.mrf.mxu0
          %v5574 = vadd.f32 %v5545, %v5573
          %5575 = vmatmul.bf16.gmra.mxu0 %v4364
          %v5576 = vpop.f32.mrf.mxu0
          %v5577 = vadd.f32 %v5548, %v5576
          %v5578 = vpop.f32.mrf.mxu0
          %v5579 = vadd.f32 %v5550, %v5578
          %5580 = vmatmul.bf16.gmra.mxu0 %v4372
          %v5581 = vpop.f32.mrf.mxu0
          %v5582 = vadd.f32 %v5553, %v5581
          %v5583 = vpop.f32.mrf.mxu0
          %v5584 = vadd.f32 %v5555, %v5583
          %5585 = vmatmul.bf16.gmra.mxu0 %v4380
          %v5586 = vpop.f32.mrf.mxu0
          %v5587 = vadd.f32 %v5558, %v5586
          %v5588 = vpop.f32.mrf.mxu0
          %v5589 = vadd.f32 %v5560, %v5588
          %5590 = vdwg.mxu0
          %5591 = vmatpush.bf16.msra.mxu0 %v5027
          %5592 = vmatpush.bf16.msra.mxu0 %v5025
          %5593 = vmatpush.bf16.msra.mxu0 %v5023
          %5594 = vmatpush.bf16.msra.mxu0 %v5021
          %5595 = vmatpush.bf16.msra.mxu0 %v5019
          %5596 = vmatpush.bf16.msra.mxu0 %v5017
          %5597 = vmatpush.bf16.msra.mxu0 %v5015
          %5598 = vmatpush.bf16.msra.mxu0 %v5013
          %5599 = vmatmul.bf16.gmra.mxu0 %v4357
          %v5600 = vpop.f32.mrf.mxu0
          %v5601 = vadd.f32 %v5572, %v5600
          %v5602 = vpop.f32.mrf.mxu0
          %v5603 = vadd.f32 %v5574, %v5602
          %5604 = vmatmul.bf16.gmra.mxu0 %v4365
          %v5605 = vpop.f32.mrf.mxu0
          %v5606 = vadd.f32 %v5577, %v5605
          %v5607 = vpop.f32.mrf.mxu0
          %v5608 = vadd.f32 %v5579, %v5607
          %5609 = vmatmul.bf16.gmra.mxu0 %v4373
          %v5610 = vpop.f32.mrf.mxu0
          %v5611 = vadd.f32 %v5582, %v5610
          %v5612 = vpop.f32.mrf.mxu0
          %v5613 = vadd.f32 %v5584, %v5612
          %5614 = vmatmul.bf16.gmra.mxu0 %v4381
          %v5615 = vpop.f32.mrf.mxu0
          %v5616 = vadd.f32 %v5587, %v5615
          %v5617 = vpop.f32.mrf.mxu0
          %v5618 = vadd.f32 %v5589, %v5617
          %5619 = vdwg.mxu0
          %v5620 = vadd.f32 %v2249, %v5369
          %v5621 = vadd.f32 %v2250, %v5601
          %v5622 = vadd.f32 %v2251, %v5371
          %v5623 = vadd.f32 %v2252, %v5603
          %v5624 = vadd.f32 %v2253, %v5374
          %v5625 = vadd.f32 %v2254, %v5606
          %v5626 = vadd.f32 %v2255, %v5376
          %v5627 = vadd.f32 %v2256, %v5608
          %v5628 = vadd.f32 %v2257, %v5379
          %v5629 = vadd.f32 %v2258, %v5611
          %v5630 = vadd.f32 %v2259, %v5381
          %v5631 = vadd.f32 %v2260, %v5613
          %v5632 = vadd.f32 %v2261, %v5384
          %v5633 = vadd.f32 %v2262, %v5616
          %v5634 = vadd.f32 %v2263, %v5386
          %v5635 = vadd.f32 %v2264, %v5618
          %5636 = vst [vmem:[%s697] sm:$0xff] %v5620
          %5637 = vst [vmem:[%s697 + $0x8] sm:$0xff] %v5621
          %5638 = vst [vmem:[%s697 + $0x10] sm:$0xff] %v5622
          %5639 = vst [vmem:[%s697 + $0x18] sm:$0xff] %v5623
          %5640 = vst [vmem:[%s697 + $0x20] sm:$0xff] %v5624
          %5641 = vst [vmem:[%s697 + $0x28] sm:$0xff] %v5625
          %5642 = vst [vmem:[%s697 + $0x30] sm:$0xff] %v5626
          %5643 = vst [vmem:[%s697 + $0x38] sm:$0xff] %v5627
          %5644 = vst [vmem:[%s697 + $0x40] sm:$0xff] %v5628
          %5645 = vst [vmem:[%s697 + $0x48] sm:$0xff] %v5629
          %5646 = vst [vmem:[%s697 + $0x50] sm:$0xff] %v5630
          %5647 = vst [vmem:[%s697 + $0x58] sm:$0xff] %v5631
          %5648 = vst [vmem:[%s697 + $0x60] sm:$0xff] %v5632
          %5649 = vst [vmem:[%s697 + $0x68] sm:$0xff] %v5633
          %5650 = vst [vmem:[%s697 + $0x70] sm:$0xff] %v5634
          %5651 = vst [vmem:[%s697 + $0x78] sm:$0xff] %v5635
        $region124: #{tpu_custom_call.1} parent=71 // pred_fallthru
          _
        %s5652 = sand.u32 %s352, 1
        %s5653 = scalar_lea.sflag [#allocation6], %s5652
        %s5654 = sand.u32 %s352, 1
        %s5655 = smul.addr %s5654, 128
        %s5656 = scalar_lea.vmem [#allocation22], %s5655
        // Predicated region
        $region125: #{tpu_custom_call.1} parent=71 // pred_check
          %p5657 = pneg %p362
        $region126: #{tpu_custom_call.1} parent=71 // pred_check_branch
          %5659 = sbr.rel (%p5657) target = $region128
        $region127: #{tpu_custom_call.1} parent=71 // pred_region
          %5661 = vsyncadd %s5653, 0
          %s5662 = smul.addr %s43, 16
          %s5663 = smul.addr %s5662, 8
          %s5664 = scalar_lea.hbm %s13, %s5663
          %s5665 = sshll.u32 %s5656, 4
          %s5666 = int_to_ptr.vmem [resolvable:$true] %s5665
          %s5667 = sshll.u32 %s5664, 4
          %s5668 = int_to_ptr.hbm [resolvable:$true] %s5667
          %5673 = dma.vmem_to_hbm [thread:$0]  %s5666, 2048, %s5668, %s5653, 256, 256, 16
        $region128: #{tpu_custom_call.1} parent=71 // pred_fallthru
          _
      $region72: #{tpu_custom_call.1} parent=5 // pred_fallthru
        _
      %p5674 = scmp.le.s32.totalorder 2, %s34
      // Predicated region
      $region129: #{tpu_custom_call.1} parent=5 // pred_check
        %p5675 = pneg %p5674
      $region130: #{tpu_custom_call.1} parent=5 // pred_check_branch
        %5677 = sbr.rel (%p5675) target = $region132
      $region131: #{tpu_custom_call.1} parent=5 // pred_region
        %s5678 = ssub.s32 %s34, 2
        // Predicated region
        $region133: #{tpu_custom_call.1} parent=131 // pred_check
          %p5679 = pneg %p368
        $region134: #{tpu_custom_call.1} parent=131 // pred_check_branch
          %5681 = sbr.rel (%p5679) target = $region136
        $region135: #{tpu_custom_call.1} parent=131 // pred_region
          %s5682 = sand.u32 %s353, 1
          %s5683 = scalar_lea.sflag [#allocation6], %s5682
          %s5684 = sand.u32 %s353, 1
          %s5685 = smul.addr %s5684, 128
          %s5686 = scalar_lea.vmem [#allocation22], %s5685
          %5688 = dma.done %s5683, 2048
        $region136: #{tpu_custom_call.1} parent=131 // pred_fallthru
          _
      $region132: #{tpu_custom_call.1} parent=5 // pred_fallthru
        _
    $region6: #{tpu_custom_call.1} parent=1 // loop_footer
      %s38 = sadd.s32 1, %s34
    $region7: #{tpu_custom_call.1} parent=1 // loop_footer_branch
      %33 = sbr.rel target = $region3
    $region8: #{tpu_custom_call.1} parent=1 // loop_exit
      _
    %5689 = vsyncpa [#allocation5], 1
    %s5690 = scalar_lea.sflag [#allocation5], 1
    %5691 = vsyncpa %s5690, 1
    %5692 = vsyncpa [#allocation8], 1
    %5693 = vsyncpa [#allocation11], 1
    %s5694 = scalar_lea.sflag [#allocation11], 1
    %5695 = vsyncpa %s5694, 1
    %5696 = vsyncpa [#allocation14], 1
    %s5697 = scalar_lea.sflag [#allocation14], 1
    %5698 = vsyncpa %s5697, 1
    %5699 = vsyncpa [#allocation17], 1
    %5700 = vsyncpa [#allocation20], 1
    %5701 = vsyncpa [#allocation6], 1
    %s5702 = scalar_lea.sflag [#allocation6], 1
    %5703 = vsyncpa %s5702, 1

</llo_original>
